<compile_context>
chip_gen: v6e
topology: v6e:2x2x1
jax: 0.10.0
libtpu: 0.0.40
codegen_flags: <defaults>
</compile_context>

<pallas_src>
import jax
import jax.numpy as jnp
from jax.experimental import pallas as pl
from jax.experimental.pallas import tpu as pltpu

K_IN = 28 * 28          # 784
K_PAD = 896             # 7 * 128 (lane-aligned contraction dim for layer 1)
H = 512
N_CLASSES = 10
NC_PAD = 128            # lane-dense padded class dim


def _round_up(x, m):
    return ((x + m - 1) // m) * m


def fcnet_kernel(x_ref, w1_ref, b1_ref, w2_ref, b2_ref, w3_ref, b3_ref, o_ref):
    # x_ref: (tile_b, 896) bf16; weights bf16; biases f32 (1, out); o_ref: (tile_b, 128) f32.
    h1 = jnp.dot(x_ref[...], w1_ref[...],
                 preferred_element_type=jnp.float32) + b1_ref[...]
    h1 = jnp.maximum(h1, 0.0).astype(jnp.bfloat16)      # ReLU in f32, bf16 into next MXU

    h2 = jnp.dot(h1, w2_ref[...],
                 preferred_element_type=jnp.float32) + b2_ref[...]
    h2 = jnp.maximum(h2, 0.0).astype(jnp.bfloat16)

    h3 = jnp.dot(h2, w3_ref[...],
                 preferred_element_type=jnp.float32) + b3_ref[...]
    h3 = jnp.maximum(h3, 0.0)                            # module applies ReLU to the logits

    # Mask the padded class columns (>= 10) so they cannot affect the softmax normalizer.
    col = jax.lax.broadcasted_iota(jnp.int32, h3.shape, dimension=1)
    h3 = jnp.where(col < N_CLASSES, h3, -1e30)

    # log_softmax over the class axis (dim=1 in the PyTorch module).
    m = jnp.max(h3, axis=-1, keepdims=True)
    s = h3 - m
    lse = jnp.log(jnp.sum(jnp.exp(s), axis=-1, keepdims=True))
    o_ref[...] = (s - lse).astype(o_ref.dtype)


def _build_call(tile_b, Bp, single_buffer_weights):
    """Construct the pallas_call for a given padded batch / tile size."""
    if single_buffer_weights:
        def const_spec(shape):
            # Constant block index -> one buffer is enough; frees ~1.5 MiB of VMEM.
            return pl.BlockSpec(shape, lambda i: (0, 0), pipeline_mode=pl.Buffered(1))
    else:
        def const_spec(shape):
            return pl.BlockSpec(shape, lambda i: (0, 0))

    flops = 2 * Bp * (K_PAD * H + H * H + H * NC_PAD)
    bytes_accessed = (
        Bp * K_PAD * 2                               # x tile stream (bf16)
        + (K_PAD * H + H * H + H * NC_PAD) * 2       # weights (bf16)
        + (H + H + NC_PAD) * 4                       # biases (f32)
        + Bp * NC_PAD * 4                            # output (f32)
    )

    return pl.pallas_call(
        fcnet_kernel,
        out_shape=jax.ShapeDtypeStruct((Bp, NC_PAD), jnp.float32),
        grid_spec=pltpu.PrefetchScalarGridSpec(
            num_scalar_prefetch=0,
            grid=(Bp // tile_b,),
            in_specs=[
                # x: streamed per batch tile.
                # TODO(synk): bump to pipeline_mode=pl.Buffered(3) if v7x profiling shows
                # the x-tile DMA exposed (HBM shared by 2 TCs).
                pl.BlockSpec((tile_b, K_PAD), lambda i: (i, 0)),
                const_spec((K_PAD, H)),          # w1: VMEM-resident across grid steps
                const_spec((1, H)),              # b1
                const_spec((H, H)),              # w2
                const_spec((1, H)),              # b2
                const_spec((H, NC_PAD)),         # w3 (class dim padded to 128)
                const_spec((1, NC_PAD)),         # b3
            ],
            out_specs=pl.BlockSpec((tile_b, NC_PAD), lambda i: (i, 0)),
        ),
        compiler_params=pltpu.CompilerParams(
            dimension_semantics=("parallel",),       # shard batch tiles across TCs (v7x)
            vmem_limit_bytes=32 * 1024 * 1024,       # raises v5e's 16 MiB default; safe on v7x
        ),
        cost_estimate=pl.CostEstimate(
            flops=flops,
            transcendentals=Bp * NC_PAD,
            bytes_accessed=bytes_accessed,
        ),
    )


def fcnet_forward(x, params, tile_b=512):
    """x: any shape whose trailing dims flatten to 784 (e.g. (B, 1, 28, 28))."""
    w1, b1, w2, b2, w3, b3 = params

    # Flatten and cast to bf16 *before* padding (halves pre-kernel HBM traffic).
    x2d = x.reshape(-1, K_IN).astype(jnp.bfloat16)
    B = x2d.shape[0]

    # Batch tiling: round to 16 rows (bf16 sublane packing).  Use big tiles to amortize
    # per-step pipeline overhead, but keep >= 2 grid steps once the batch allows so both
    # v7x TensorCores are used (no effect on v5e/v6e).
    B16 = _round_up(max(B, 16), 16)
    n_steps = max(2, pl.cdiv(B16, tile_b)) if B16 >= 32 else 1
    tile_b = _round_up(pl.cdiv(B16, n_steps), 16)
    Bp = n_steps * tile_b

    x_bf = jnp.pad(x2d, ((0, Bp - B), (0, K_PAD - K_IN)))

    # Weights: zero-pad w1's K dim (784 -> 896) and w3/b3's class dim (10 -> 128).
    # Weights in bf16 for the MXU; biases stay f32.
    w1p = jnp.pad(w1.astype(jnp.bfloat16), ((0, K_PAD - K_IN), (0, 0)))
    w2b = w2.astype(jnp.bfloat16)
    w3p = jnp.pad(w3.astype(jnp.bfloat16), ((0, 0), (0, NC_PAD - N_CLASSES)))
    b1f = b1.astype(jnp.float32).reshape(1, H)
    b2f = b2.astype(jnp.float32).reshape(1, H)
    b3f = jnp.pad(b3.astype(jnp.float32).reshape(1, N_CLASSES),
                  ((0, 0), (0, NC_PAD - N_CLASSES)))

    args = (x_bf, w1p, b1f, w2b, b2f, w3p, b3f)
    try:
        out = _build_call(tile_b, Bp, single_buffer_weights=True)(*args)
    except Exception:
        # Some Pallas versions reject pl.Buffered(1); fall back to default double buffering
        # (VMEM budget is ample either way).
        out = _build_call(tile_b, Bp, single_buffer_weights=False)(*args)

    return out[:B, :N_CLASSES]


def init_params(key):
    """PyTorch Linear-style init (uniform +-1/sqrt(fan_in)); weights stored (in, out)."""
    def linear(k, fan_in, fan_out):
        kw, kb = jax.random.split(k)
        bound = 1.0 / jnp.sqrt(fan_in)
        w = jax.random.uniform(kw, (fan_in, fan_out), jnp.float32, -bound, bound)
        b = jax.random.uniform(kb, (1, fan_out), jnp.float32, -bound, bound)
        return w, b

    k1, k2, k3 = jax.random.split(key, 3)
    w1, b1 = linear(k1, K_IN, H)
    w2, b2 = linear(k2, H, H)
    w3, b3 = linear(k3, H, N_CLASSES)
    return (w1, b1, w2, b2, w3, b3)


def fcnet_ref(x, params):
    """Reference emulating the kernel's numerics (bf16 MXU inputs, f32 accumulation)."""
    w1, b1, w2, b2, w3, b3 = params
    x2d = x.reshape(-1, K_IN).astype(jnp.float32)

    def bf(a):
        return a.astype(jnp.bfloat16)

    h = jnp.dot(bf(x2d), bf(w1), preferred_element_type=jnp.float32) + b1
    h = jnp.maximum(h, 0.0)
    h = jnp.dot(bf(h), bf(w2), preferred_element_type=jnp.float32) + b2
    h = jnp.maximum(h, 0.0)
    h = jnp.dot(bf(h), bf(w3), preferred_element_type=jnp.float32) + b3
    h = jnp.maximum(h, 0.0)
    return jax.nn.log_softmax(h, axis=1)


def fcnet_ref_f32(x, params):
    """Pure-f32 reference matching the PyTorch module exactly (semantics check)."""
    w1, b1, w2, b2, w3, b3 = params
    h = x.reshape(-1, K_IN).astype(jnp.float32)
    h = jnp.maximum(h @ w1 + b1, 0.0)
    h = jnp.maximum(h @ w2 + b2, 0.0)
    h = jnp.maximum(h @ w3 + b3, 0.0)
    return jax.nn.log_softmax(h, axis=1)


if __name__ == "__main__":
    key = jax.random.PRNGKey(0)
    kx, kp = jax.random.split(key)

    # MNIST-like input: NCHW (B, 1, 28, 28); flattened to (B, 784) inside the wrapper.
    B = 8
    x = jax.random.normal(kx, (B, 1, 28, 28), dtype=jnp.float32)
    params = init_params(kp)

    out = fcnet_forward(x, params)
    out = jax.block_until_ready(out)
    assert out.shape == (B, N_CLASSES)

    # Match the kernel's bf16-MXU numerics tightly, and the f32 module semantics loosely.
    ref_bf16 = fcnet_ref(x, params)
    ref_f32 = fcnet_ref_f32(x, params)
    assert jnp.allclose(out, ref_bf16, atol=1e-3, rtol=1e-3), "mismatch vs bf16-emulating ref"
    assert jnp.allclose(out, ref_f32, atol=5e-2, rtol=5e-2), "mismatch vs f32 reference"

    print("KERNEL_OK")
</pallas_src>

<mosaic_0001>
module attributes {stable_mosaic.version = 11 : i64} {
  func.func @fcnet_kernel(%arg0: i32, %arg1: memref<16x896xbf16, #tpu.memory_space<vmem>>, %arg2: memref<896x512xbf16, #tpu.memory_space<vmem>>, %arg3: memref<1x512xf32, #tpu.memory_space<vmem>>, %arg4: memref<512x512xbf16, #tpu.memory_space<vmem>>, %arg5: memref<1x512xf32, #tpu.memory_space<vmem>>, %arg6: memref<512x128xbf16, #tpu.memory_space<vmem>>, %arg7: memref<1x128xf32, #tpu.memory_space<vmem>>, %arg8: memref<16x128xf32, #tpu.memory_space<vmem>>) attributes {dimension_semantics = [#tpu.dimension_semantics<parallel>], iteration_bounds = array<i64: 1>, scalar_prefetch = 0 : i64, scratch_operands = 0 : i64, tpu.core_type = #tpu.core_type<tc>, window_params = [{transform_indices = @transform_0, window_bounds = array<i64: 16, 896>}, {pipeline_mode = #tpu.pipeline_mode<synchronous>, transform_indices = @transform_1, window_bounds = array<i64: 896, 512>}, {pipeline_mode = #tpu.pipeline_mode<synchronous>, transform_indices = @transform_2, window_bounds = array<i64: 1, 512>}, {pipeline_mode = #tpu.pipeline_mode<synchronous>, transform_indices = @transform_3, window_bounds = array<i64: 512, 512>}, {pipeline_mode = #tpu.pipeline_mode<synchronous>, transform_indices = @transform_4, window_bounds = array<i64: 1, 512>}, {pipeline_mode = #tpu.pipeline_mode<synchronous>, transform_indices = @transform_5, window_bounds = array<i64: 512, 128>}, {pipeline_mode = #tpu.pipeline_mode<synchronous>, transform_indices = @transform_6, window_bounds = array<i64: 1, 128>}, {transform_indices = @transform_7, window_bounds = array<i64: 16, 128>}]} {
    %c0 = arith.constant 0 : index
    %c0_0 = arith.constant 0 : index
    %0 = vector.load %arg1[%c0, %c0_0] : memref<16x896xbf16, #tpu.memory_space<vmem>>, vector<16x896xbf16>
    %c0_1 = arith.constant 0 : index
    %c0_2 = arith.constant 0 : index
    %1 = vector.load %arg2[%c0_1, %c0_2] : memref<896x512xbf16, #tpu.memory_space<vmem>>, vector<896x512xbf16>
    %cst = arith.constant dense<0.000000e+00> : vector<16x512xf32>
    %2 = tpu.matmul %0, %1, %cst {dimension_numbers = #tpu.dot_dimension_numbers<[1], [0], [0], [1], [0, 0, 1, 1], [], []>} : vector<16x896xbf16>, vector<896x512xbf16>, vector<16x512xf32> -> vector<16x512xf32>
    %c0_3 = arith.constant 0 : index
    %c0_4 = arith.constant 0 : index
    %3 = vector.load %arg3[%c0_3, %c0_4] : memref<1x512xf32, #tpu.memory_space<vmem>>, vector<1x512xf32>
    %4 = vector.broadcast %3 : vector<1x512xf32> to vector<16x512xf32>
    %5 = arith.addf %2, %4 : vector<16x512xf32>
    %cst_5 = arith.constant 0.000000e+00 : f32
    %6 = vector.broadcast %cst_5 : f32 to vector<16x512xf32>
    %7 = arith.maximumf %5, %6 : vector<16x512xf32>
    %8 = arith.truncf %7 : vector<16x512xf32> to vector<16x512xbf16>
    %c0_6 = arith.constant 0 : index
    %c0_7 = arith.constant 0 : index
    %9 = vector.load %arg4[%c0_6, %c0_7] : memref<512x512xbf16, #tpu.memory_space<vmem>>, vector<512x512xbf16>
    %cst_8 = arith.constant dense<0.000000e+00> : vector<16x512xf32>
    %10 = tpu.matmul %8, %9, %cst_8 {dimension_numbers = #tpu.dot_dimension_numbers<[1], [0], [0], [1], [0, 0, 1, 1], [], []>} : vector<16x512xbf16>, vector<512x512xbf16>, vector<16x512xf32> -> vector<16x512xf32>
    %c0_9 = arith.constant 0 : index
    %c0_10 = arith.constant 0 : index
    %11 = vector.load %arg5[%c0_9, %c0_10] : memref<1x512xf32, #tpu.memory_space<vmem>>, vector<1x512xf32>
    %12 = vector.broadcast %11 : vector<1x512xf32> to vector<16x512xf32>
    %13 = arith.addf %10, %12 : vector<16x512xf32>
    %cst_11 = arith.constant 0.000000e+00 : f32
    %14 = vector.broadcast %cst_11 : f32 to vector<16x512xf32>
    %15 = arith.maximumf %13, %14 : vector<16x512xf32>
    %16 = arith.truncf %15 : vector<16x512xf32> to vector<16x512xbf16>
    %c0_12 = arith.constant 0 : index
    %c0_13 = arith.constant 0 : index
    %17 = vector.load %arg6[%c0_12, %c0_13] : memref<512x128xbf16, #tpu.memory_space<vmem>>, vector<512x128xbf16>
    %cst_14 = arith.constant dense<0.000000e+00> : vector<16x128xf32>
    %18 = tpu.matmul %16, %17, %cst_14 {dimension_numbers = #tpu.dot_dimension_numbers<[1], [0], [0], [1], [0, 0, 1, 1], [], []>} : vector<16x512xbf16>, vector<512x128xbf16>, vector<16x128xf32> -> vector<16x128xf32>
    %c0_15 = arith.constant 0 : index
    %c0_16 = arith.constant 0 : index
    %19 = vector.load %arg7[%c0_15, %c0_16] : memref<1x128xf32, #tpu.memory_space<vmem>>, vector<1x128xf32>
    %20 = vector.broadcast %19 : vector<1x128xf32> to vector<16x128xf32>
    %21 = arith.addf %18, %20 : vector<16x128xf32>
    %cst_17 = arith.constant 0.000000e+00 : f32
    %22 = vector.broadcast %cst_17 : f32 to vector<16x128xf32>
    %23 = arith.maximumf %21, %22 : vector<16x128xf32>
    %24 = tpu.iota {dimensions = array<i32: 1>} : vector<16x128xi32>
    %c10_i32 = arith.constant 10 : i32
    %25 = vector.broadcast %c10_i32 : i32 to vector<16x128xi32>
    %26 = arith.cmpi slt, %24, %25 : vector<16x128xi32>
    %cst_18 = arith.constant -1.000000e+30 : f32
    %27 = vector.broadcast %cst_18 : f32 to vector<16x128xf32>
    %28 = arith.select %26, %23, %27 : vector<16x128xi1>, vector<16x128xf32>
    %cst_19 = arith.constant dense<0xFF800000> : vector<16xf32>
    %29 = vector.multi_reduction <maximumf>, %28, %cst_19 [1] : vector<16x128xf32> to vector<16xf32>
    %30 = vector.shape_cast %29 : vector<16xf32> to vector<16x1xf32>
    %31 = vector.broadcast %30 : vector<16x1xf32> to vector<16x128xf32>
    %32 = arith.subf %28, %31 : vector<16x128xf32>
    %33 = math.exp %32 : vector<16x128xf32>
    %cst_20 = arith.constant dense<0.000000e+00> : vector<16xf32>
    %34 = vector.multi_reduction <add>, %33, %cst_20 [1] : vector<16x128xf32> to vector<16xf32>
    %35 = vector.shape_cast %34 : vector<16xf32> to vector<16x1xf32>
    %36 = math.log %35 : vector<16x1xf32>
    %37 = vector.broadcast %36 : vector<16x1xf32> to vector<16x128xf32>
    %38 = arith.subf %32, %37 : vector<16x128xf32>
    %c0_21 = arith.constant 0 : index
    %c0_22 = arith.constant 0 : index
    %39 = vector.load %arg8[%c0_21, %c0_22] : memref<16x128xf32, #tpu.memory_space<vmem>>, vector<16x128xf32>
    tpu.vector_store %arg8[%c0_21, %c0_22], %38 {strides = array<i32>} : memref<16x128xf32, #tpu.memory_space<vmem>>, vector<16x128xf32>,
    return
  }
  func.func @transform_0(%arg0: i32) -> (i32, i32) {
    %c0_i32 = arith.constant 0 : i32
    %c0_i32_0 = arith.constant 0 : i32
    return %arg0, %c0_i32 : i32, i32
  }
  func.func @transform_1(%arg0: i32) -> (i32, i32) {
    %c0_i32 = arith.constant 0 : i32
    %c0_i32_0 = arith.constant 0 : i32
    %c0_i32_1 = arith.constant 0 : i32
    return %c0_i32, %c0_i32_0 : i32, i32
  }
  func.func @transform_2(%arg0: i32) -> (i32, i32) {
    %c0_i32 = arith.constant 0 : i32
    %c0_i32_0 = arith.constant 0 : i32
    %c0_i32_1 = arith.constant 0 : i32
    return %c0_i32, %c0_i32_0 : i32, i32
  }
  func.func @transform_3(%arg0: i32) -> (i32, i32) {
    %c0_i32 = arith.constant 0 : i32
    %c0_i32_0 = arith.constant 0 : i32
    %c0_i32_1 = arith.constant 0 : i32
    return %c0_i32, %c0_i32_0 : i32, i32
  }
  func.func @transform_4(%arg0: i32) -> (i32, i32) {
    %c0_i32 = arith.constant 0 : i32
    %c0_i32_0 = arith.constant 0 : i32
    %c0_i32_1 = arith.constant 0 : i32
    return %c0_i32, %c0_i32_0 : i32, i32
  }
  func.func @transform_5(%arg0: i32) -> (i32, i32) {
    %c0_i32 = arith.constant 0 : i32
    %c0_i32_0 = arith.constant 0 : i32
    %c0_i32_1 = arith.constant 0 : i32
    return %c0_i32, %c0_i32_0 : i32, i32
  }
  func.func @transform_6(%arg0: i32) -> (i32, i32) {
    %c0_i32 = arith.constant 0 : i32
    %c0_i32_0 = arith.constant 0 : i32
    %c0_i32_1 = arith.constant 0 : i32
    return %c0_i32, %c0_i32_0 : i32, i32
  }
  func.func @transform_7(%arg0: i32) -> (i32, i32) {
    %c0_i32 = arith.constant 0 : i32
    %c0_i32_0 = arith.constant 0 : i32
    return %arg0, %c0_i32 : i32, i32
  }
}

module attributes {stable_mosaic.version = 11 : i64} {
  func.func @fcnet_kernel(%arg0: i32, %arg1: memref<16x896xbf16, #tpu.memory_space<vmem>>, %arg2: memref<896x512xbf16, #tpu.memory_space<vmem>>, %arg3: memref<1x512xf32, #tpu.memory_space<vmem>>, %arg4: memref<512x512xbf16, #tpu.memory_space<vmem>>, %arg5: memref<1x512xf32, #tpu.memory_space<vmem>>, %arg6: memref<512x128xbf16, #tpu.memory_space<vmem>>, %arg7: memref<1x128xf32, #tpu.memory_space<vmem>>, %arg8: memref<16x128xf32, #tpu.memory_space<vmem>>) attributes {dimension_semantics = [#tpu.dimension_semantics<parallel>], iteration_bounds = array<i64: 1>, scalar_prefetch = 0 : i64, scratch_operands = 0 : i64, tpu.core_type = #tpu.core_type<tc>, window_params = [{transform_indices = @transform_0, window_bounds = array<i64: 16, 896>}, {pipeline_mode = #tpu.pipeline_mode<synchronous>, transform_indices = @transform_1, window_bounds = array<i64: 896, 512>}, {pipeline_mode = #tpu.pipeline_mode<synchronous>, transform_indices = @transform_2, window_bounds = array<i64: 1, 512>}, {pipeline_mode = #tpu.pipeline_mode<synchronous>, transform_indices = @transform_3, window_bounds = array<i64: 512, 512>}, {pipeline_mode = #tpu.pipeline_mode<synchronous>, transform_indices = @transform_4, window_bounds = array<i64: 1, 512>}, {pipeline_mode = #tpu.pipeline_mode<synchronous>, transform_indices = @transform_5, window_bounds = array<i64: 512, 128>}, {pipeline_mode = #tpu.pipeline_mode<synchronous>, transform_indices = @transform_6, window_bounds = array<i64: 1, 128>}, {transform_indices = @transform_7, window_bounds = array<i64: 16, 128>}]} {
    %c0 = arith.constant 0 : index
    %c0_0 = arith.constant 0 : index
    %0 = vector.load %arg1[%c0, %c0_0] : memref<16x896xbf16, #tpu.memory_space<vmem>>, vector<16x896xbf16>
    %c0_1 = arith.constant 0 : index
    %c0_2 = arith.constant 0 : index
    %1 = vector.load %arg2[%c0_1, %c0_2] : memref<896x512xbf16, #tpu.memory_space<vmem>>, vector<896x512xbf16>
    %cst = arith.constant dense<0.000000e+00> : vector<16x512xf32>
    %2 = tpu.matmul %0, %1, %cst {dimension_numbers = #tpu.dot_dimension_numbers<[1], [0], [0], [1], [0, 0, 1, 1], [], []>} : vector<16x896xbf16>, vector<896x512xbf16>, vector<16x512xf32> -> vector<16x512xf32>
    %c0_3 = arith.constant 0 : index
    %c0_4 = arith.constant 0 : index
    %3 = vector.load %arg3[%c0_3, %c0_4] : memref<1x512xf32, #tpu.memory_space<vmem>>, vector<1x512xf32>
    %4 = vector.broadcast %3 : vector<1x512xf32> to vector<16x512xf32>
    %5 = arith.addf %2, %4 : vector<16x512xf32>
    %cst_5 = arith.constant 0.000000e+00 : f32
    %6 = vector.broadcast %cst_5 : f32 to vector<16x512xf32>
    %7 = arith.maximumf %5, %6 : vector<16x512xf32>
    %8 = arith.truncf %7 : vector<16x512xf32> to vector<16x512xbf16>
    %c0_6 = arith.constant 0 : index
    %c0_7 = arith.constant 0 : index
    %9 = vector.load %arg4[%c0_6, %c0_7] : memref<512x512xbf16, #tpu.memory_space<vmem>>, vector<512x512xbf16>
    %cst_8 = arith.constant dense<0.000000e+00> : vector<16x512xf32>
    %10 = tpu.matmul %8, %9, %cst_8 {dimension_numbers = #tpu.dot_dimension_numbers<[1], [0], [0], [1], [0, 0, 1, 1], [], []>} : vector<16x512xbf16>, vector<512x512xbf16>, vector<16x512xf32> -> vector<16x512xf32>
    %c0_9 = arith.constant 0 : index
    %c0_10 = arith.constant 0 : index
    %11 = vector.load %arg5[%c0_9, %c0_10] : memref<1x512xf32, #tpu.memory_space<vmem>>, vector<1x512xf32>
    %12 = vector.broadcast %11 : vector<1x512xf32> to vector<16x512xf32>
    %13 = arith.addf %10, %12 : vector<16x512xf32>
    %cst_11 = arith.constant 0.000000e+00 : f32
    %14 = vector.broadcast %cst_11 : f32 to vector<16x512xf32>
    %15 = arith.maximumf %13, %14 : vector<16x512xf32>
    %16 = arith.truncf %15 : vector<16x512xf32> to vector<16x512xbf16>
    %c0_12 = arith.constant 0 : index
    %c0_13 = arith.constant 0 : index
    %17 = vector.load %arg6[%c0_12, %c0_13] : memref<512x128xbf16, #tpu.memory_space<vmem>>, vector<512x128xbf16>
    %cst_14 = arith.constant dense<0.000000e+00> : vector<16x128xf32>
    %18 = tpu.matmul %16, %17, %cst_14 {dimension_numbers = #tpu.dot_dimension_numbers<[1], [0], [0], [1], [0, 0, 1, 1], [], []>} : vector<16x512xbf16>, vector<512x128xbf16>, vector<16x128xf32> -> vector<16x128xf32>
    %c0_15 = arith.constant 0 : index
    %c0_16 = arith.constant 0 : index
    %19 = vector.load %arg7[%c0_15, %c0_16] : memref<1x128xf32, #tpu.memory_space<vmem>>, vector<1x128xf32>
    %20 = vector.broadcast %19 : vector<1x128xf32> to vector<16x128xf32>
    %21 = arith.addf %18, %20 : vector<16x128xf32>
    %cst_17 = arith.constant 0.000000e+00 : f32
    %22 = vector.broadcast %cst_17 : f32 to vector<16x128xf32>
    %23 = arith.maximumf %21, %22 : vector<16x128xf32>
    %24 = tpu.iota {dimensions = array<i32: 1>} : vector<16x128xi32>
    %c10_i32 = arith.constant 10 : i32
    %25 = vector.broadcast %c10_i32 : i32 to vector<16x128xi32>
    %26 = arith.cmpi slt, %24, %25 : vector<16x128xi32>
    %cst_18 = arith.constant -1.000000e+30 : f32
    %27 = vector.broadcast %cst_18 : f32 to vector<16x128xf32>
    %28 = arith.select %26, %23, %27 : vector<16x128xi1>, vector<16x128xf32>
    %cst_19 = arith.constant dense<0xFF800000> : vector<16xf32>
    %29 = vector.multi_reduction <maximumf>, %28, %cst_19 [1] : vector<16x128xf32> to vector<16xf32>
    %30 = vector.shape_cast %29 : vector<16xf32> to vector<16x1xf32>
    %31 = vector.broadcast %30 : vector<16x1xf32> to vector<16x128xf32>
    %32 = arith.subf %28, %31 : vector<16x128xf32>
    %33 = math.exp %32 : vector<16x128xf32>
    %cst_20 = arith.constant dense<0.000000e+00> : vector<16xf32>
    %34 = vector.multi_reduction <add>, %33, %cst_20 [1] : vector<16x128xf32> to vector<16xf32>
    %35 = vector.shape_cast %34 : vector<16xf32> to vector<16x1xf32>
    %36 = math.log %35 : vector<16x1xf32>
    %37 = vector.broadcast %36 : vector<16x1xf32> to vector<16x128xf32>
    %38 = arith.subf %32, %37 : vector<16x128xf32>
    %c0_21 = arith.constant 0 : index
    %c0_22 = arith.constant 0 : index
    %39 = vector.load %arg8[%c0_21, %c0_22] : memref<16x128xf32, #tpu.memory_space<vmem>>, vector<16x128xf32>
    tpu.vector_store %arg8[%c0_21, %c0_22], %38 {strides = array<i32>} : memref<16x128xf32, #tpu.memory_space<vmem>>, vector<16x128xf32>,
    return
  }
  func.func @transform_0(%arg0: i32) -> (i32, i32) {
    %c0_i32 = arith.constant 0 : i32
    %c0_i32_0 = arith.constant 0 : i32
    return %arg0, %c0_i32 : i32, i32
  }
  func.func @transform_1(%arg0: i32) -> (i32, i32) {
    %c0_i32 = arith.constant 0 : i32
    %c0_i32_0 = arith.constant 0 : i32
    %c0_i32_1 = arith.constant 0 : i32
    return %c0_i32, %c0_i32_0 : i32, i32
  }
  func.func @transform_2(%arg0: i32) -> (i32, i32) {
    %c0_i32 = arith.constant 0 : i32
    %c0_i32_0 = arith.constant 0 : i32
    %c0_i32_1 = arith.constant 0 : i32
    return %c0_i32, %c0_i32_0 : i32, i32
  }
  func.func @transform_3(%arg0: i32) -> (i32, i32) {
    %c0_i32 = arith.constant 0 : i32
    %c0_i32_0 = arith.constant 0 : i32
    %c0_i32_1 = arith.constant 0 : i32
    return %c0_i32, %c0_i32_0 : i32, i32
  }
  func.func @transform_4(%arg0: i32) -> (i32, i32) {
    %c0_i32 = arith.constant 0 : i32
    %c0_i32_0 = arith.constant 0 : i32
    %c0_i32_1 = arith.constant 0 : i32
    return %c0_i32, %c0_i32_0 : i32, i32
  }
  func.func @transform_5(%arg0: i32) -> (i32, i32) {
    %c0_i32 = arith.constant 0 : i32
    %c0_i32_0 = arith.constant 0 : i32
    %c0_i32_1 = arith.constant 0 : i32
    return %c0_i32, %c0_i32_0 : i32, i32
  }
  func.func @transform_6(%arg0: i32) -> (i32, i32) {
    %c0_i32 = arith.constant 0 : i32
    %c0_i32_0 = arith.constant 0 : i32
    %c0_i32_1 = arith.constant 0 : i32
    return %c0_i32, %c0_i32_0 : i32, i32
  }
  func.func @transform_7(%arg0: i32) -> (i32, i32) {
    %c0_i32 = arith.constant 0 : i32
    %c0_i32_0 = arith.constant 0 : i32
    return %arg0, %c0_i32 : i32, i32
  }
}

</mosaic_0001>

<llo_original>
// kernel: tpu_custom_call.1
$region0: #{tpu_custom_call.1}
  #allocation0 [shape = 'u32[]', space=smem, size = 0x4, offset = 0x4, fixed_abs, tag = 'smem constant byte address 0x4 - core index']
  #allocation1 [shape = 'u32[144,128]{1,0:T(1,128)}', space=vmem, size = 0x12000, scoped, tag = 'internal scratch']
  %s0 = inlined_call_operand.hbm [shape: bf16[16,896], index: 0, kind: input, shape index: {}]
  %s1 = inlined_call_operand.hbm [shape: bf16[896,512], index: 1, kind: input, shape index: {}]
  %s2 = inlined_call_operand.hbm [shape: f32[1,512], index: 2, kind: input, shape index: {}]
  %s3 = inlined_call_operand.hbm [shape: bf16[512,512], index: 3, kind: input, shape index: {}]
  %s4 = inlined_call_operand.vmem [shape: f32[1,512], index: 4, kind: input, shape index: {}]
  %s5 = inlined_call_operand.hbm [shape: bf16[512,128], index: 5, kind: input, shape index: {}]
  %s6 = inlined_call_operand.vmem [shape: f32[1,128], index: 6, kind: input, shape index: {}]
  %s7 = inlined_call_operand.hbm [shape: f32[16,128], index: 7, kind: output, shape index: {}]
  %s8 = sld [smem:[#allocation0]]
  $region58: #{tpu_custom_call.1} parent=0
    _
  %s10 = ssub.s32 1, %s8
  %s11 = scalar_select 0, %s10, %s8
  $region1: #{tpu_custom_call.1} parent=0
    #allocation2 [shape = 'u8[28672]{0}', space=vmem, size = 0x7000, scoped, tag = 'input window, operand 0, single buffered']
    #allocation3 [shape = 's32[1]{0}', space=sflag, size = 0x4, scoped, tag = 'scoped memory for tpu_custom_call.1']
    #allocation4 [shape = 's32[1]{0}', space=sflag, size = 0x4, scoped, tag = 'scoped memory for tpu_custom_call.1']
    #allocation5 [shape = 'u8[917504]{0}', space=vmem, size = 0xe0000, scoped, tag = 'input window, operand 1, single buffered']
    #allocation6 [shape = 's32[1]{0}', space=sflag, size = 0x4, scoped, tag = 'scoped memory for tpu_custom_call.1']
    #allocation7 [shape = 'u8[2048]{0}', space=vmem, size = 0x800, scoped, tag = 'input window, operand 2, single buffered']
    #allocation8 [shape = 'u8[524288]{0}', space=vmem, size = 0x80000, scoped, tag = 'input window, operand 3, single buffered']
    #allocation9 [shape = 's32[1]{0}', space=sflag, size = 0x4, scoped, tag = 'scoped memory for tpu_custom_call.1']
    #allocation10 [shape = 'u8[131072]{0}', space=vmem, size = 0x20000, scoped, tag = 'input window, operand 5, single buffered']
    #allocation11 [shape = 'u8[8192]{0}', space=vmem, size = 0x2000, scoped, tag = 'output window, operand 0, single buffered']
    %12 = vsyncpa [#allocation3], 0
    %13 = vsyncpa [#allocation6], 0
    %14 = vsyncpa [#allocation9], 0
    %15 = vsyncpa [#allocation4], 0
    // Predicated region
    $region2: #{tpu_custom_call.1} parent=1 // pred_check
      _
    $region3: #{tpu_custom_call.1} parent=1 // pred_check_branch
      %17 = sbr.rel (0) target = $region5
    $region4: #{tpu_custom_call.1} parent=1 // pred_region
      %s19 = ssub.s32 896, 896
      %20 = vsyncadd [#allocation3], %s19
      %s21 = sshll.u32 [#allocation2], 4
      %s22 = int_to_ptr.vmem [resolvable:$true] %s21
      %27 = dma.hbm_to_vmem [thread:$0]  %s0, 896, %s22, [#allocation3], 448, 448, 28
    $region5: #{tpu_custom_call.1} parent=1 // pred_fallthru
      _
    // Predicated region
    $region6: #{tpu_custom_call.1} parent=1 // pred_check
      _
    $region7: #{tpu_custom_call.1} parent=1 // pred_check_branch
      %29 = sbr.rel (0) target = $region9
    $region8: #{tpu_custom_call.1} parent=1 // pred_region
      %s31 = ssub.s32 28672, 28672
      %32 = vsyncadd [#allocation6], %s31
      %s33 = sshll.u32 [#allocation5], 4
      %s34 = int_to_ptr.vmem [resolvable:$true] %s33
      %39 = dma.hbm_to_vmem [thread:$0]  %s1, 28672, %s34, [#allocation6], 256, 256, 16
    $region9: #{tpu_custom_call.1} parent=1 // pred_fallthru
      _
    // Predicated region
    $region10: #{tpu_custom_call.1} parent=1 // pred_check
      _
    $region11: #{tpu_custom_call.1} parent=1 // pred_check_branch
      %41 = sbr.rel (0) target = $region13
    $region12: #{tpu_custom_call.1} parent=1 // pred_region
      %s43 = ssub.s32 64, 64
      %44 = vsyncadd [#allocation6], %s43
      %s46 = sshll.u32 [#allocation7], 4
      %s47 = int_to_ptr.vmem [resolvable:$true] %s46
      %49 = dma.hbm_to_vmem [thread:$0]  %s2, 64, %s47, [#allocation6]
    $region13: #{tpu_custom_call.1} parent=1 // pred_fallthru
      _
    // Predicated region
    $region14: #{tpu_custom_call.1} parent=1 // pred_check
      _
    $region15: #{tpu_custom_call.1} parent=1 // pred_check_branch
      %51 = sbr.rel (0) target = $region17
    $region16: #{tpu_custom_call.1} parent=1 // pred_region
      %s53 = ssub.s32 16384, 16384
      %54 = vsyncadd [#allocation9], %s53
      %s55 = sshll.u32 [#allocation8], 4
      %s56 = int_to_ptr.vmem [resolvable:$true] %s55
      %61 = dma.hbm_to_vmem [thread:$0]  %s3, 16384, %s56, [#allocation9], 256, 256, 16
    $region17: #{tpu_custom_call.1} parent=1 // pred_fallthru
      _
    // Predicated region
    $region18: #{tpu_custom_call.1} parent=1 // pred_check
      _
    $region19: #{tpu_custom_call.1} parent=1 // pred_check_branch
      %63 = sbr.rel (0) target = $region21
    $region20: #{tpu_custom_call.1} parent=1 // pred_region
      _
    $region21: #{tpu_custom_call.1} parent=1 // pred_fallthru
      _
    // Predicated region
    $region22: #{tpu_custom_call.1} parent=1 // pred_check
      _
    $region23: #{tpu_custom_call.1} parent=1 // pred_check_branch
      %65 = sbr.rel (0) target = $region25
    $region24: #{tpu_custom_call.1} parent=1 // pred_region
      %s67 = ssub.s32 4096, 4096
      %68 = vsyncadd [#allocation9], %s67
      %s69 = sshll.u32 [#allocation10], 4
      %s70 = int_to_ptr.vmem [resolvable:$true] %s69
      %75 = dma.hbm_to_vmem [thread:$0]  %s5, 4096, %s70, [#allocation9], 64, 64, 4
    $region25: #{tpu_custom_call.1} parent=1 // pred_fallthru
      _
    // Predicated region
    $region26: #{tpu_custom_call.1} parent=1 // pred_check
      _
    $region27: #{tpu_custom_call.1} parent=1 // pred_check_branch
      %77 = sbr.rel (0) target = $region29
    $region28: #{tpu_custom_call.1} parent=1 // pred_region
      _
    $region29: #{tpu_custom_call.1} parent=1 // pred_fallthru
      _
    // Predicated region
    $region30: #{tpu_custom_call.1} parent=1 // pred_check
      _
    $region31: #{tpu_custom_call.1} parent=1 // pred_check_branch
      %79 = sbr.rel (0) target = $region33
    $region32: #{tpu_custom_call.1} parent=1 // pred_region
      %80 = dma.done [#allocation3], 896
    $region33: #{tpu_custom_call.1} parent=1 // pred_fallthru
      _
    // Predicated region
    $region34: #{tpu_custom_call.1} parent=1 // pred_check
      _
    $region35: #{tpu_custom_call.1} parent=1 // pred_check_branch
      %82 = sbr.rel (0) target = $region37
    $region36: #{tpu_custom_call.1} parent=1 // pred_region
      %83 = dma.done [#allocation6], 28672
    $region37: #{tpu_custom_call.1} parent=1 // pred_fallthru
      _
    // Predicated region
    $region38: #{tpu_custom_call.1} parent=1 // pred_check
      _
    $region39: #{tpu_custom_call.1} parent=1 // pred_check_branch
      %85 = sbr.rel (0) target = $region41
    $region40: #{tpu_custom_call.1} parent=1 // pred_region
      %86 = dma.done [#allocation6], 64
    $region41: #{tpu_custom_call.1} parent=1 // pred_fallthru
      _
    // Predicated region
    $region42: #{tpu_custom_call.1} parent=1 // pred_check
      _
    $region43: #{tpu_custom_call.1} parent=1 // pred_check_branch
      %88 = sbr.rel (0) target = $region45
    $region44: #{tpu_custom_call.1} parent=1 // pred_region
      %89 = dma.done [#allocation9], 16384
    $region45: #{tpu_custom_call.1} parent=1 // pred_fallthru
      _
    // Predicated region
    $region46: #{tpu_custom_call.1} parent=1 // pred_check
      _
    $region47: #{tpu_custom_call.1} parent=1 // pred_check_branch
      %91 = sbr.rel (0) target = $region49
    $region48: #{tpu_custom_call.1} parent=1 // pred_region
      %92 = dma.done [#allocation9], 4096
    $region49: #{tpu_custom_call.1} parent=1 // pred_fallthru
      _
    %v94 = vld [vmem:[#allocation2] sm:$0xff]
    %v95 = vld [vmem:[#allocation2 + $0x8] sm:$0xff]
    %v96 = vld [vmem:[#allocation2 + $0x10] sm:$0xff]
    %v97 = vld [vmem:[#allocation2 + $0x18] sm:$0xf]
    %v98 = vld [vmem:[#allocation2 + $0x1c] sm:$0xff]
    %v99 = vld [vmem:[#allocation2 + $0x24] sm:$0xff]
    %v100 = vld [vmem:[#allocation2 + $0x2c] sm:$0xff]
    %v101 = vld [vmem:[#allocation2 + $0x34] sm:$0xf]
    %v102 = vld [vmem:[#allocation5] sm:$0xff]
    %v103 = vld [vmem:[#allocation5 + $0x8] sm:$0xff]
    %v104 = vld [vmem:[#allocation5 + $0x10] sm:$0xff]
    %v105 = vld [vmem:[#allocation5 + $0x18] sm:$0xff]
    %v106 = vld [vmem:[#allocation5 + $0x20] sm:$0xff]
    %v107 = vld [vmem:[#allocation5 + $0x28] sm:$0xff]
    %v108 = vld [vmem:[#allocation5 + $0x30] sm:$0xff]
    %v109 = vld [vmem:[#allocation5 + $0x38] sm:$0xff]
    %v110 = vld [vmem:[#allocation5 + $0x40] sm:$0xff]
    %v111 = vld [vmem:[#allocation5 + $0x48] sm:$0xff]
    %v112 = vld [vmem:[#allocation5 + $0x50] sm:$0xff]
    %v113 = vld [vmem:[#allocation5 + $0x58] sm:$0xff]
    %v114 = vld [vmem:[#allocation5 + $0x60] sm:$0xff]
    %v115 = vld [vmem:[#allocation5 + $0x68] sm:$0xff]
    %v116 = vld [vmem:[#allocation5 + $0x70] sm:$0xff]
    %v117 = vld [vmem:[#allocation5 + $0x78] sm:$0xff]
    %v118 = vld [vmem:[#allocation5 + $0x80] sm:$0xff]
    %v119 = vld [vmem:[#allocation5 + $0x88] sm:$0xff]
    %v120 = vld [vmem:[#allocation5 + $0x90] sm:$0xff]
    %v121 = vld [vmem:[#allocation5 + $0x98] sm:$0xff]
    %v122 = vld [vmem:[#allocation5 + $0xa0] sm:$0xff]
    %v123 = vld [vmem:[#allocation5 + $0xa8] sm:$0xff]
    %v124 = vld [vmem:[#allocation5 + $0xb0] sm:$0xff]
    %v125 = vld [vmem:[#allocation5 + $0xb8] sm:$0xff]
    %v126 = vld [vmem:[#allocation5 + $0xc0] sm:$0xff]
    %v127 = vld [vmem:[#allocation5 + $0xc8] sm:$0xff]
    %v128 = vld [vmem:[#allocation5 + $0xd0] sm:$0xff]
    %v129 = vld [vmem:[#allocation5 + $0xd8] sm:$0xff]
    %v130 = vld [vmem:[#allocation5 + $0xe0] sm:$0xff]
    %v131 = vld [vmem:[#allocation5 + $0xe8] sm:$0xff]
    %v132 = vld [vmem:[#allocation5 + $0xf0] sm:$0xff]
    %v133 = vld [vmem:[#allocation5 + $0xf8] sm:$0xff]
    %v134 = vld [vmem:[#allocation5 + $0x100] sm:$0xff]
    %v135 = vld [vmem:[#allocation5 + $0x108] sm:$0xff]
    %v136 = vld [vmem:[#allocation5 + $0x110] sm:$0xff]
    %v137 = vld [vmem:[#allocation5 + $0x118] sm:$0xff]
    %v138 = vld [vmem:[#allocation5 + $0x120] sm:$0xff]
    %v139 = vld [vmem:[#allocation5 + $0x128] sm:$0xff]
    %v140 = vld [vmem:[#allocation5 + $0x130] sm:$0xff]
    %v141 = vld [vmem:[#allocation5 + $0x138] sm:$0xff]
    %v142 = vld [vmem:[#allocation5 + $0x140] sm:$0xff]
    %v143 = vld [vmem:[#allocation5 + $0x148] sm:$0xff]
    %v144 = vld [vmem:[#allocation5 + $0x150] sm:$0xff]
    %v145 = vld [vmem:[#allocation5 + $0x158] sm:$0xff]
    %v146 = vld [vmem:[#allocation5 + $0x160] sm:$0xff]
    %v147 = vld [vmem:[#allocation5 + $0x168] sm:$0xff]
    %v148 = vld [vmem:[#allocation5 + $0x170] sm:$0xff]
    %v149 = vld [vmem:[#allocation5 + $0x178] sm:$0xff]
    %v150 = vld [vmem:[#allocation5 + $0x180] sm:$0xff]
    %v151 = vld [vmem:[#allocation5 + $0x188] sm:$0xff]
    %v152 = vld [vmem:[#allocation5 + $0x190] sm:$0xff]
    %v153 = vld [vmem:[#allocation5 + $0x198] sm:$0xff]
    %v154 = vld [vmem:[#allocation5 + $0x1a0] sm:$0xff]
    %v155 = vld [vmem:[#allocation5 + $0x1a8] sm:$0xff]
    %v156 = vld [vmem:[#allocation5 + $0x1b0] sm:$0xff]
    %v157 = vld [vmem:[#allocation5 + $0x1b8] sm:$0xff]
    %v158 = vld [vmem:[#allocation5 + $0x1c0] sm:$0xff]
    %v159 = vld [vmem:[#allocation5 + $0x1c8] sm:$0xff]
    %v160 = vld [vmem:[#allocation5 + $0x1d0] sm:$0xff]
    %v161 = vld [vmem:[#allocation5 + $0x1d8] sm:$0xff]
    %v162 = vld [vmem:[#allocation5 + $0x1e0] sm:$0xff]
    %v163 = vld [vmem:[#allocation5 + $0x1e8] sm:$0xff]
    %v164 = vld [vmem:[#allocation5 + $0x1f0] sm:$0xff]
    %v165 = vld [vmem:[#allocation5 + $0x1f8] sm:$0xff]
    %v166 = vld [vmem:[#allocation5 + $0x200] sm:$0xff]
    %v167 = vld [vmem:[#allocation5 + $0x208] sm:$0xff]
    %v168 = vld [vmem:[#allocation5 + $0x210] sm:$0xff]
    %v169 = vld [vmem:[#allocation5 + $0x218] sm:$0xff]
    %v170 = vld [vmem:[#allocation5 + $0x220] sm:$0xff]
    %v171 = vld [vmem:[#allocation5 + $0x228] sm:$0xff]
    %v172 = vld [vmem:[#allocation5 + $0x230] sm:$0xff]
    %v173 = vld [vmem:[#allocation5 + $0x238] sm:$0xff]
    %v174 = vld [vmem:[#allocation5 + $0x240] sm:$0xff]
    %v175 = vld [vmem:[#allocation5 + $0x248] sm:$0xff]
    %v176 = vld [vmem:[#allocation5 + $0x250] sm:$0xff]
    %v177 = vld [vmem:[#allocation5 + $0x258] sm:$0xff]
    %v178 = vld [vmem:[#allocation5 + $0x260] sm:$0xff]
    %v179 = vld [vmem:[#allocation5 + $0x268] sm:$0xff]
    %v180 = vld [vmem:[#allocation5 + $0x270] sm:$0xff]
    %v181 = vld [vmem:[#allocation5 + $0x278] sm:$0xff]
    %v182 = vld [vmem:[#allocation5 + $0x280] sm:$0xff]
    %v183 = vld [vmem:[#allocation5 + $0x288] sm:$0xff]
    %v184 = vld [vmem:[#allocation5 + $0x290] sm:$0xff]
    %v185 = vld [vmem:[#allocation5 + $0x298] sm:$0xff]
    %v186 = vld [vmem:[#allocation5 + $0x2a0] sm:$0xff]
    %v187 = vld [vmem:[#allocation5 + $0x2a8] sm:$0xff]
    %v188 = vld [vmem:[#allocation5 + $0x2b0] sm:$0xff]
    %v189 = vld [vmem:[#allocation5 + $0x2b8] sm:$0xff]
    %v190 = vld [vmem:[#allocation5 + $0x2c0] sm:$0xff]
    %v191 = vld [vmem:[#allocation5 + $0x2c8] sm:$0xff]
    %v192 = vld [vmem:[#allocation5 + $0x2d0] sm:$0xff]
    %v193 = vld [vmem:[#allocation5 + $0x2d8] sm:$0xff]
    %v194 = vld [vmem:[#allocation5 + $0x2e0] sm:$0xff]
    %v195 = vld [vmem:[#allocation5 + $0x2e8] sm:$0xff]
    %v196 = vld [vmem:[#allocation5 + $0x2f0] sm:$0xff]
    %v197 = vld [vmem:[#allocation5 + $0x2f8] sm:$0xff]
    %v198 = vld [vmem:[#allocation5 + $0x300] sm:$0xff]
    %v199 = vld [vmem:[#allocation5 + $0x308] sm:$0xff]
    %v200 = vld [vmem:[#allocation5 + $0x310] sm:$0xff]
    %v201 = vld [vmem:[#allocation5 + $0x318] sm:$0xff]
    %v202 = vld [vmem:[#allocation5 + $0x320] sm:$0xff]
    %v203 = vld [vmem:[#allocation5 + $0x328] sm:$0xff]
    %v204 = vld [vmem:[#allocation5 + $0x330] sm:$0xff]
    %v205 = vld [vmem:[#allocation5 + $0x338] sm:$0xff]
    %v206 = vld [vmem:[#allocation5 + $0x340] sm:$0xff]
    %v207 = vld [vmem:[#allocation5 + $0x348] sm:$0xff]
    %v208 = vld [vmem:[#allocation5 + $0x350] sm:$0xff]
    %v209 = vld [vmem:[#allocation5 + $0x358] sm:$0xff]
    %v210 = vld [vmem:[#allocation5 + $0x360] sm:$0xff]
    %v211 = vld [vmem:[#allocation5 + $0x368] sm:$0xff]
    %v212 = vld [vmem:[#allocation5 + $0x370] sm:$0xff]
    %v213 = vld [vmem:[#allocation5 + $0x378] sm:$0xff]
    %v214 = vld [vmem:[#allocation5 + $0x380] sm:$0xff]
    %v215 = vld [vmem:[#allocation5 + $0x388] sm:$0xff]
    %v216 = vld [vmem:[#allocation5 + $0x390] sm:$0xff]
    %v217 = vld [vmem:[#allocation5 + $0x398] sm:$0xff]
    %v218 = vld [vmem:[#allocation5 + $0x3a0] sm:$0xff]
    %v219 = vld [vmem:[#allocation5 + $0x3a8] sm:$0xff]
    %v220 = vld [vmem:[#allocation5 + $0x3b0] sm:$0xff]
    %v221 = vld [vmem:[#allocation5 + $0x3b8] sm:$0xff]
    %v222 = vld [vmem:[#allocation5 + $0x3c0] sm:$0xff]
    %v223 = vld [vmem:[#allocation5 + $0x3c8] sm:$0xff]
    %v224 = vld [vmem:[#allocation5 + $0x3d0] sm:$0xff]
    %v225 = vld [vmem:[#allocation5 + $0x3d8] sm:$0xff]
    %v226 = vld [vmem:[#allocation5 + $0x3e0] sm:$0xff]
    %v227 = vld [vmem:[#allocation5 + $0x3e8] sm:$0xff]
    %v228 = vld [vmem:[#allocation5 + $0x3f0] sm:$0xff]
    %v229 = vld [vmem:[#allocation5 + $0x3f8] sm:$0xff]
    %v230 = vld [vmem:[#allocation5 + $0x400] sm:$0xff]
    %v231 = vld [vmem:[#allocation5 + $0x408] sm:$0xff]
    %v232 = vld [vmem:[#allocation5 + $0x410] sm:$0xff]
    %v233 = vld [vmem:[#allocation5 + $0x418] sm:$0xff]
    %v234 = vld [vmem:[#allocation5 + $0x420] sm:$0xff]
    %v235 = vld [vmem:[#allocation5 + $0x428] sm:$0xff]
    %v236 = vld [vmem:[#allocation5 + $0x430] sm:$0xff]
    %v237 = vld [vmem:[#allocation5 + $0x438] sm:$0xff]
    %v238 = vld [vmem:[#allocation5 + $0x440] sm:$0xff]
    %v239 = vld [vmem:[#allocation5 + $0x448] sm:$0xff]
    %v240 = vld [vmem:[#allocation5 + $0x450] sm:$0xff]
    %v241 = vld [vmem:[#allocation5 + $0x458] sm:$0xff]
    %v242 = vld [vmem:[#allocation5 + $0x460] sm:$0xff]
    %v243 = vld [vmem:[#allocation5 + $0x468] sm:$0xff]
    %v244 = vld [vmem:[#allocation5 + $0x470] sm:$0xff]
    %v245 = vld [vmem:[#allocation5 + $0x478] sm:$0xff]
    %v246 = vld [vmem:[#allocation5 + $0x480] sm:$0xff]
    %v247 = vld [vmem:[#allocation5 + $0x488] sm:$0xff]
    %v248 = vld [vmem:[#allocation5 + $0x490] sm:$0xff]
    %v249 = vld [vmem:[#allocation5 + $0x498] sm:$0xff]
    %v250 = vld [vmem:[#allocation5 + $0x4a0] sm:$0xff]
    %v251 = vld [vmem:[#allocation5 + $0x4a8] sm:$0xff]
    %v252 = vld [vmem:[#allocation5 + $0x4b0] sm:$0xff]
    %v253 = vld [vmem:[#allocation5 + $0x4b8] sm:$0xff]
    %v254 = vld [vmem:[#allocation5 + $0x4c0] sm:$0xff]
    %v255 = vld [vmem:[#allocation5 + $0x4c8] sm:$0xff]
    %v256 = vld [vmem:[#allocation5 + $0x4d0] sm:$0xff]
    %v257 = vld [vmem:[#allocation5 + $0x4d8] sm:$0xff]
    %v258 = vld [vmem:[#allocation5 + $0x4e0] sm:$0xff]
    %v259 = vld [vmem:[#allocation5 + $0x4e8] sm:$0xff]
    %v260 = vld [vmem:[#allocation5 + $0x4f0] sm:$0xff]
    %v261 = vld [vmem:[#allocation5 + $0x4f8] sm:$0xff]
    %v262 = vld [vmem:[#allocation5 + $0x500] sm:$0xff]
    %v263 = vld [vmem:[#allocation5 + $0x508] sm:$0xff]
    %v264 = vld [vmem:[#allocation5 + $0x510] sm:$0xff]
    %v265 = vld [vmem:[#allocation5 + $0x518] sm:$0xff]
    %v266 = vld [vmem:[#allocation5 + $0x520] sm:$0xff]
    %v267 = vld [vmem:[#allocation5 + $0x528] sm:$0xff]
    %v268 = vld [vmem:[#allocation5 + $0x530] sm:$0xff]
    %v269 = vld [vmem:[#allocation5 + $0x538] sm:$0xff]
    %v270 = vld [vmem:[#allocation5 + $0x540] sm:$0xff]
    %v271 = vld [vmem:[#allocation5 + $0x548] sm:$0xff]
    %v272 = vld [vmem:[#allocation5 + $0x550] sm:$0xff]
    %v273 = vld [vmem:[#allocation5 + $0x558] sm:$0xff]
    %v274 = vld [vmem:[#allocation5 + $0x560] sm:$0xff]
    %v275 = vld [vmem:[#allocation5 + $0x568] sm:$0xff]
    %v276 = vld [vmem:[#allocation5 + $0x570] sm:$0xff]
    %v277 = vld [vmem:[#allocation5 + $0x578] sm:$0xff]
    %v278 = vld [vmem:[#allocation5 + $0x580] sm:$0xff]
    %v279 = vld [vmem:[#allocation5 + $0x588] sm:$0xff]
    %v280 = vld [vmem:[#allocation5 + $0x590] sm:$0xff]
    %v281 = vld [vmem:[#allocation5 + $0x598] sm:$0xff]
    %v282 = vld [vmem:[#allocation5 + $0x5a0] sm:$0xff]
    %v283 = vld [vmem:[#allocation5 + $0x5a8] sm:$0xff]
    %v284 = vld [vmem:[#allocation5 + $0x5b0] sm:$0xff]
    %v285 = vld [vmem:[#allocation5 + $0x5b8] sm:$0xff]
    %v286 = vld [vmem:[#allocation5 + $0x5c0] sm:$0xff]
    %v287 = vld [vmem:[#allocation5 + $0x5c8] sm:$0xff]
    %v288 = vld [vmem:[#allocation5 + $0x5d0] sm:$0xff]
    %v289 = vld [vmem:[#allocation5 + $0x5d8] sm:$0xff]
    %v290 = vld [vmem:[#allocation5 + $0x5e0] sm:$0xff]
    %v291 = vld [vmem:[#allocation5 + $0x5e8] sm:$0xff]
    %v292 = vld [vmem:[#allocation5 + $0x5f0] sm:$0xff]
    %v293 = vld [vmem:[#allocation5 + $0x5f8] sm:$0xff]
    %v294 = vld [vmem:[#allocation5 + $0x600] sm:$0xff]
    %v295 = vld [vmem:[#allocation5 + $0x608] sm:$0xff]
    %v296 = vld [vmem:[#allocation5 + $0x610] sm:$0xff]
    %v297 = vld [vmem:[#allocation5 + $0x618] sm:$0xff]
    %v298 = vld [vmem:[#allocation5 + $0x620] sm:$0xff]
    %v299 = vld [vmem:[#allocation5 + $0x628] sm:$0xff]
    %v300 = vld [vmem:[#allocation5 + $0x630] sm:$0xff]
    %v301 = vld [vmem:[#allocation5 + $0x638] sm:$0xff]
    %v302 = vld [vmem:[#allocation5 + $0x640] sm:$0xff]
    %v303 = vld [vmem:[#allocation5 + $0x648] sm:$0xff]
    %v304 = vld [vmem:[#allocation5 + $0x650] sm:$0xff]
    %v305 = vld [vmem:[#allocation5 + $0x658] sm:$0xff]
    %v306 = vld [vmem:[#allocation5 + $0x660] sm:$0xff]
    %v307 = vld [vmem:[#allocation5 + $0x668] sm:$0xff]
    %v308 = vld [vmem:[#allocation5 + $0x670] sm:$0xff]
    %v309 = vld [vmem:[#allocation5 + $0x678] sm:$0xff]
    %v310 = vld [vmem:[#allocation5 + $0x680] sm:$0xff]
    %v311 = vld [vmem:[#allocation5 + $0x688] sm:$0xff]
    %v312 = vld [vmem:[#allocation5 + $0x690] sm:$0xff]
    %v313 = vld [vmem:[#allocation5 + $0x698] sm:$0xff]
    %v314 = vld [vmem:[#allocation5 + $0x6a0] sm:$0xff]
    %v315 = vld [vmem:[#allocation5 + $0x6a8] sm:$0xff]
    %v316 = vld [vmem:[#allocation5 + $0x6b0] sm:$0xff]
    %v317 = vld [vmem:[#allocation5 + $0x6b8] sm:$0xff]
    %v318 = vld [vmem:[#allocation5 + $0x6c0] sm:$0xff]
    %v319 = vld [vmem:[#allocation5 + $0x6c8] sm:$0xff]
    %v320 = vld [vmem:[#allocation5 + $0x6d0] sm:$0xff]
    %v321 = vld [vmem:[#allocation5 + $0x6d8] sm:$0xff]
    %v322 = vld [vmem:[#allocation5 + $0x6e0] sm:$0xff]
    %v323 = vld [vmem:[#allocation5 + $0x6e8] sm:$0xff]
    %v324 = vld [vmem:[#allocation5 + $0x6f0] sm:$0xff]
    %v325 = vld [vmem:[#allocation5 + $0x6f8] sm:$0xff]
    %v326 = vld [vmem:[#allocation7] sm:$0xf]
    %v328 = vlaneseq
    %v329 = vshrl.u32 %v328, 7
    %v330 = vsub.s32 0, %v329
    %v331 = vrot.slane %v326, %v330
    %v332 = vlaneseq
    %v333 = vshrl.u32 %v332, 7
    %v334 = vsub.s32 1, %v333
    %v335 = vrot.slane %v326, %v334
    %v336 = vlaneseq
    %v337 = vshrl.u32 %v336, 7
    %v338 = vsub.s32 2, %v337
    %v339 = vrot.slane %v326, %v338
    %v340 = vlaneseq
    %v341 = vshrl.u32 %v340, 7
    %v342 = vsub.s32 3, %v341
    %v343 = vrot.slane %v326, %v342
    %v356 = vunpack.c.l.b16 %v94
    %v357 = vunpack.c.h.b16 %v94
    %v358 = vunpack.c.l.b16 %v95
    %v359 = vunpack.c.h.b16 %v95
    %v360 = vunpack.c.l.b16 %v96
    %v361 = vunpack.c.h.b16 %v96
    %v362 = vunpack.c.l.b16 %v97
    %v363 = vunpack.c.l.b16 %v98
    %v364 = vunpack.c.h.b16 %v98
    %v365 = vunpack.c.l.b16 %v99
    %v366 = vunpack.c.h.b16 %v99
    %v367 = vunpack.c.l.b16 %v100
    %v368 = vunpack.c.h.b16 %v100
    %v369 = vunpack.c.l.b16 %v101
    %v370 = vpack.c.b16 %v363, %v356
    %v371 = vpack.c.b16 %v364, %v357
    %v372 = vpack.c.b16 %v365, %v358
    %v373 = vpack.c.b16 %v366, %v359
    %v374 = vpack.c.b16 %v367, %v360
    %v375 = vpack.c.b16 %v368, %v361
    %v376 = vpack.c.b16 %v369, %v362
    %v608 = vunpack.c.l.b16 %v102
    %v609 = vunpack.c.h.b16 %v102
    %v610 = vunpack.c.l.b16 %v103
    %v611 = vunpack.c.h.b16 %v103
    %v612 = vunpack.c.l.b16 %v104
    %v613 = vunpack.c.h.b16 %v104
    %v614 = vunpack.c.l.b16 %v105
    %v615 = vunpack.c.h.b16 %v105
    %v616 = vunpack.c.l.b16 %v106
    %v617 = vunpack.c.h.b16 %v106
    %v618 = vunpack.c.l.b16 %v107
    %v619 = vunpack.c.h.b16 %v107
    %v620 = vunpack.c.l.b16 %v108
    %v621 = vunpack.c.h.b16 %v108
    %v622 = vunpack.c.l.b16 %v109
    %v623 = vunpack.c.h.b16 %v109
    %v624 = vunpack.c.l.b16 %v110
    %v625 = vunpack.c.h.b16 %v110
    %v626 = vunpack.c.l.b16 %v111
    %v627 = vunpack.c.h.b16 %v111
    %v628 = vunpack.c.l.b16 %v112
    %v629 = vunpack.c.h.b16 %v112
    %v630 = vunpack.c.l.b16 %v113
    %v631 = vunpack.c.h.b16 %v113
    %v632 = vunpack.c.l.b16 %v114
    %v633 = vunpack.c.h.b16 %v114
    %v634 = vunpack.c.l.b16 %v115
    %v635 = vunpack.c.h.b16 %v115
    %v636 = vunpack.c.l.b16 %v116
    %v637 = vunpack.c.h.b16 %v116
    %v638 = vunpack.c.l.b16 %v117
    %v639 = vunpack.c.h.b16 %v117
    %v640 = vunpack.c.l.b16 %v118
    %v641 = vunpack.c.h.b16 %v118
    %v642 = vunpack.c.l.b16 %v119
    %v643 = vunpack.c.h.b16 %v119
    %v644 = vunpack.c.l.b16 %v120
    %v645 = vunpack.c.h.b16 %v120
    %v646 = vunpack.c.l.b16 %v121
    %v647 = vunpack.c.h.b16 %v121
    %v648 = vunpack.c.l.b16 %v122
    %v649 = vunpack.c.h.b16 %v122
    %v650 = vunpack.c.l.b16 %v123
    %v651 = vunpack.c.h.b16 %v123
    %v652 = vunpack.c.l.b16 %v124
    %v653 = vunpack.c.h.b16 %v124
    %v654 = vunpack.c.l.b16 %v125
    %v655 = vunpack.c.h.b16 %v125
    %v656 = vunpack.c.l.b16 %v126
    %v657 = vunpack.c.h.b16 %v126
    %v658 = vunpack.c.l.b16 %v127
    %v659 = vunpack.c.h.b16 %v127
    %v660 = vunpack.c.l.b16 %v128
    %v661 = vunpack.c.h.b16 %v128
    %v662 = vunpack.c.l.b16 %v129
    %v663 = vunpack.c.h.b16 %v129
    %v664 = vunpack.c.l.b16 %v130
    %v665 = vunpack.c.h.b16 %v130
    %v666 = vunpack.c.l.b16 %v131
    %v667 = vunpack.c.h.b16 %v131
    %v668 = vunpack.c.l.b16 %v132
    %v669 = vunpack.c.h.b16 %v132
    %v670 = vunpack.c.l.b16 %v133
    %v671 = vunpack.c.h.b16 %v133
    %v672 = vunpack.c.l.b16 %v134
    %v673 = vunpack.c.h.b16 %v134
    %v674 = vunpack.c.l.b16 %v135
    %v675 = vunpack.c.h.b16 %v135
    %v676 = vunpack.c.l.b16 %v136
    %v677 = vunpack.c.h.b16 %v136
    %v678 = vunpack.c.l.b16 %v137
    %v679 = vunpack.c.h.b16 %v137
    %v680 = vunpack.c.l.b16 %v138
    %v681 = vunpack.c.h.b16 %v138
    %v682 = vunpack.c.l.b16 %v139
    %v683 = vunpack.c.h.b16 %v139
    %v684 = vunpack.c.l.b16 %v140
    %v685 = vunpack.c.h.b16 %v140
    %v686 = vunpack.c.l.b16 %v141
    %v687 = vunpack.c.h.b16 %v141
    %v688 = vunpack.c.l.b16 %v142
    %v689 = vunpack.c.h.b16 %v142
    %v690 = vunpack.c.l.b16 %v143
    %v691 = vunpack.c.h.b16 %v143
    %v692 = vunpack.c.l.b16 %v144
    %v693 = vunpack.c.h.b16 %v144
    %v694 = vunpack.c.l.b16 %v145
    %v695 = vunpack.c.h.b16 %v145
    %v696 = vunpack.c.l.b16 %v146
    %v697 = vunpack.c.h.b16 %v146
    %v698 = vunpack.c.l.b16 %v147
    %v699 = vunpack.c.h.b16 %v147
    %v700 = vunpack.c.l.b16 %v148
    %v701 = vunpack.c.h.b16 %v148
    %v702 = vunpack.c.l.b16 %v149
    %v703 = vunpack.c.h.b16 %v149
    %v704 = vunpack.c.l.b16 %v150
    %v705 = vunpack.c.h.b16 %v150
    %v706 = vunpack.c.l.b16 %v151
    %v707 = vunpack.c.h.b16 %v151
    %v708 = vunpack.c.l.b16 %v152
    %v709 = vunpack.c.h.b16 %v152
    %v710 = vunpack.c.l.b16 %v153
    %v711 = vunpack.c.h.b16 %v153
    %v712 = vunpack.c.l.b16 %v154
    %v713 = vunpack.c.h.b16 %v154
    %v714 = vunpack.c.l.b16 %v155
    %v715 = vunpack.c.h.b16 %v155
    %v716 = vunpack.c.l.b16 %v156
    %v717 = vunpack.c.h.b16 %v156
    %v718 = vunpack.c.l.b16 %v157
    %v719 = vunpack.c.h.b16 %v157
    %v720 = vunpack.c.l.b16 %v158
    %v721 = vunpack.c.h.b16 %v158
    %v722 = vunpack.c.l.b16 %v159
    %v723 = vunpack.c.h.b16 %v159
    %v724 = vunpack.c.l.b16 %v160
    %v725 = vunpack.c.h.b16 %v160
    %v726 = vunpack.c.l.b16 %v161
    %v727 = vunpack.c.h.b16 %v161
    %v728 = vunpack.c.l.b16 %v162
    %v729 = vunpack.c.h.b16 %v162
    %v730 = vunpack.c.l.b16 %v163
    %v731 = vunpack.c.h.b16 %v163
    %v732 = vunpack.c.l.b16 %v164
    %v733 = vunpack.c.h.b16 %v164
    %v734 = vunpack.c.l.b16 %v165
    %v735 = vunpack.c.h.b16 %v165
    %v736 = vunpack.c.l.b16 %v166
    %v737 = vunpack.c.h.b16 %v166
    %v738 = vunpack.c.l.b16 %v167
    %v739 = vunpack.c.h.b16 %v167
    %v740 = vunpack.c.l.b16 %v168
    %v741 = vunpack.c.h.b16 %v168
    %v742 = vunpack.c.l.b16 %v169
    %v743 = vunpack.c.h.b16 %v169
    %v744 = vunpack.c.l.b16 %v170
    %v745 = vunpack.c.h.b16 %v170
    %v746 = vunpack.c.l.b16 %v171
    %v747 = vunpack.c.h.b16 %v171
    %v748 = vunpack.c.l.b16 %v172
    %v749 = vunpack.c.h.b16 %v172
    %v750 = vunpack.c.l.b16 %v173
    %v751 = vunpack.c.h.b16 %v173
    %v752 = vunpack.c.l.b16 %v174
    %v753 = vunpack.c.h.b16 %v174
    %v754 = vunpack.c.l.b16 %v175
    %v755 = vunpack.c.h.b16 %v175
    %v756 = vunpack.c.l.b16 %v176
    %v757 = vunpack.c.h.b16 %v176
    %v758 = vunpack.c.l.b16 %v177
    %v759 = vunpack.c.h.b16 %v177
    %v760 = vunpack.c.l.b16 %v178
    %v761 = vunpack.c.h.b16 %v178
    %v762 = vunpack.c.l.b16 %v179
    %v763 = vunpack.c.h.b16 %v179
    %v764 = vunpack.c.l.b16 %v180
    %v765 = vunpack.c.h.b16 %v180
    %v766 = vunpack.c.l.b16 %v181
    %v767 = vunpack.c.h.b16 %v181
    %v768 = vunpack.c.l.b16 %v182
    %v769 = vunpack.c.h.b16 %v182
    %v770 = vunpack.c.l.b16 %v183
    %v771 = vunpack.c.h.b16 %v183
    %v772 = vunpack.c.l.b16 %v184
    %v773 = vunpack.c.h.b16 %v184
    %v774 = vunpack.c.l.b16 %v185
    %v775 = vunpack.c.h.b16 %v185
    %v776 = vunpack.c.l.b16 %v186
    %v777 = vunpack.c.h.b16 %v186
    %v778 = vunpack.c.l.b16 %v187
    %v779 = vunpack.c.h.b16 %v187
    %v780 = vunpack.c.l.b16 %v188
    %v781 = vunpack.c.h.b16 %v188
    %v782 = vunpack.c.l.b16 %v189
    %v783 = vunpack.c.h.b16 %v189
    %v784 = vunpack.c.l.b16 %v190
    %v785 = vunpack.c.h.b16 %v190
    %v786 = vunpack.c.l.b16 %v191
    %v787 = vunpack.c.h.b16 %v191
    %v788 = vunpack.c.l.b16 %v192
    %v789 = vunpack.c.h.b16 %v192
    %v790 = vunpack.c.l.b16 %v193
    %v791 = vunpack.c.h.b16 %v193
    %v792 = vunpack.c.l.b16 %v194
    %v793 = vunpack.c.h.b16 %v194
    %v794 = vunpack.c.l.b16 %v195
    %v795 = vunpack.c.h.b16 %v195
    %v796 = vunpack.c.l.b16 %v196
    %v797 = vunpack.c.h.b16 %v196
    %v798 = vunpack.c.l.b16 %v197
    %v799 = vunpack.c.h.b16 %v197
    %v800 = vunpack.c.l.b16 %v198
    %v801 = vunpack.c.h.b16 %v198
    %v802 = vunpack.c.l.b16 %v199
    %v803 = vunpack.c.h.b16 %v199
    %v804 = vunpack.c.l.b16 %v200
    %v805 = vunpack.c.h.b16 %v200
    %v806 = vunpack.c.l.b16 %v201
    %v807 = vunpack.c.h.b16 %v201
    %v808 = vunpack.c.l.b16 %v202
    %v809 = vunpack.c.h.b16 %v202
    %v810 = vunpack.c.l.b16 %v203
    %v811 = vunpack.c.h.b16 %v203
    %v812 = vunpack.c.l.b16 %v204
    %v813 = vunpack.c.h.b16 %v204
    %v814 = vunpack.c.l.b16 %v205
    %v815 = vunpack.c.h.b16 %v205
    %v816 = vunpack.c.l.b16 %v206
    %v817 = vunpack.c.h.b16 %v206
    %v818 = vunpack.c.l.b16 %v207
    %v819 = vunpack.c.h.b16 %v207
    %v820 = vunpack.c.l.b16 %v208
    %v821 = vunpack.c.h.b16 %v208
    %v822 = vunpack.c.l.b16 %v209
    %v823 = vunpack.c.h.b16 %v209
    %v824 = vunpack.c.l.b16 %v210
    %v825 = vunpack.c.h.b16 %v210
    %v826 = vunpack.c.l.b16 %v211
    %v827 = vunpack.c.h.b16 %v211
    %v828 = vunpack.c.l.b16 %v212
    %v829 = vunpack.c.h.b16 %v212
    %v830 = vunpack.c.l.b16 %v213
    %v831 = vunpack.c.h.b16 %v213
    %v832 = vunpack.c.l.b16 %v214
    %v833 = vunpack.c.h.b16 %v214
    %v834 = vunpack.c.l.b16 %v215
    %v835 = vunpack.c.h.b16 %v215
    %v836 = vunpack.c.l.b16 %v216
    %v837 = vunpack.c.h.b16 %v216
    %v838 = vunpack.c.l.b16 %v217
    %v839 = vunpack.c.h.b16 %v217
    %v840 = vunpack.c.l.b16 %v218
    %v841 = vunpack.c.h.b16 %v218
    %v842 = vunpack.c.l.b16 %v219
    %v843 = vunpack.c.h.b16 %v219
    %v844 = vunpack.c.l.b16 %v220
    %v845 = vunpack.c.h.b16 %v220
    %v846 = vunpack.c.l.b16 %v221
    %v847 = vunpack.c.h.b16 %v221
    %v848 = vunpack.c.l.b16 %v222
    %v849 = vunpack.c.h.b16 %v222
    %v850 = vunpack.c.l.b16 %v223
    %v851 = vunpack.c.h.b16 %v223
    %v852 = vunpack.c.l.b16 %v224
    %v853 = vunpack.c.h.b16 %v224
    %v854 = vunpack.c.l.b16 %v225
    %v855 = vunpack.c.h.b16 %v225
    %v856 = vunpack.c.l.b16 %v226
    %v857 = vunpack.c.h.b16 %v226
    %v858 = vunpack.c.l.b16 %v227
    %v859 = vunpack.c.h.b16 %v227
    %v860 = vunpack.c.l.b16 %v228
    %v861 = vunpack.c.h.b16 %v228
    %v862 = vunpack.c.l.b16 %v229
    %v863 = vunpack.c.h.b16 %v229
    %v864 = vunpack.c.l.b16 %v230
    %v865 = vunpack.c.h.b16 %v230
    %v866 = vunpack.c.l.b16 %v231
    %v867 = vunpack.c.h.b16 %v231
    %v868 = vunpack.c.l.b16 %v232
    %v869 = vunpack.c.h.b16 %v232
    %v870 = vunpack.c.l.b16 %v233
    %v871 = vunpack.c.h.b16 %v233
    %v872 = vunpack.c.l.b16 %v234
    %v873 = vunpack.c.h.b16 %v234
    %v874 = vunpack.c.l.b16 %v235
    %v875 = vunpack.c.h.b16 %v235
    %v876 = vunpack.c.l.b16 %v236
    %v877 = vunpack.c.h.b16 %v236
    %v878 = vunpack.c.l.b16 %v237
    %v879 = vunpack.c.h.b16 %v237
    %v880 = vunpack.c.l.b16 %v238
    %v881 = vunpack.c.h.b16 %v238
    %v882 = vunpack.c.l.b16 %v239
    %v883 = vunpack.c.h.b16 %v239
    %v884 = vunpack.c.l.b16 %v240
    %v885 = vunpack.c.h.b16 %v240
    %v886 = vunpack.c.l.b16 %v241
    %v887 = vunpack.c.h.b16 %v241
    %v888 = vunpack.c.l.b16 %v242
    %v889 = vunpack.c.h.b16 %v242
    %v890 = vunpack.c.l.b16 %v243
    %v891 = vunpack.c.h.b16 %v243
    %v892 = vunpack.c.l.b16 %v244
    %v893 = vunpack.c.h.b16 %v244
    %v894 = vunpack.c.l.b16 %v245
    %v895 = vunpack.c.h.b16 %v245
    %v896 = vunpack.c.l.b16 %v246
    %v897 = vunpack.c.h.b16 %v246
    %v898 = vunpack.c.l.b16 %v247
    %v899 = vunpack.c.h.b16 %v247
    %v900 = vunpack.c.l.b16 %v248
    %v901 = vunpack.c.h.b16 %v248
    %v902 = vunpack.c.l.b16 %v249
    %v903 = vunpack.c.h.b16 %v249
    %v904 = vunpack.c.l.b16 %v250
    %v905 = vunpack.c.h.b16 %v250
    %v906 = vunpack.c.l.b16 %v251
    %v907 = vunpack.c.h.b16 %v251
    %v908 = vunpack.c.l.b16 %v252
    %v909 = vunpack.c.h.b16 %v252
    %v910 = vunpack.c.l.b16 %v253
    %v911 = vunpack.c.h.b16 %v253
    %v912 = vunpack.c.l.b16 %v254
    %v913 = vunpack.c.h.b16 %v254
    %v914 = vunpack.c.l.b16 %v255
    %v915 = vunpack.c.h.b16 %v255
    %v916 = vunpack.c.l.b16 %v256
    %v917 = vunpack.c.h.b16 %v256
    %v918 = vunpack.c.l.b16 %v257
    %v919 = vunpack.c.h.b16 %v257
    %v920 = vunpack.c.l.b16 %v258
    %v921 = vunpack.c.h.b16 %v258
    %v922 = vunpack.c.l.b16 %v259
    %v923 = vunpack.c.h.b16 %v259
    %v924 = vunpack.c.l.b16 %v260
    %v925 = vunpack.c.h.b16 %v260
    %v926 = vunpack.c.l.b16 %v261
    %v927 = vunpack.c.h.b16 %v261
    %v928 = vunpack.c.l.b16 %v262
    %v929 = vunpack.c.h.b16 %v262
    %v930 = vunpack.c.l.b16 %v263
    %v931 = vunpack.c.h.b16 %v263
    %v932 = vunpack.c.l.b16 %v264
    %v933 = vunpack.c.h.b16 %v264
    %v934 = vunpack.c.l.b16 %v265
    %v935 = vunpack.c.h.b16 %v265
    %v936 = vunpack.c.l.b16 %v266
    %v937 = vunpack.c.h.b16 %v266
    %v938 = vunpack.c.l.b16 %v267
    %v939 = vunpack.c.h.b16 %v267
    %v940 = vunpack.c.l.b16 %v268
    %v941 = vunpack.c.h.b16 %v268
    %v942 = vunpack.c.l.b16 %v269
    %v943 = vunpack.c.h.b16 %v269
    %v944 = vunpack.c.l.b16 %v270
    %v945 = vunpack.c.h.b16 %v270
    %v946 = vunpack.c.l.b16 %v271
    %v947 = vunpack.c.h.b16 %v271
    %v948 = vunpack.c.l.b16 %v272
    %v949 = vunpack.c.h.b16 %v272
    %v950 = vunpack.c.l.b16 %v273
    %v951 = vunpack.c.h.b16 %v273
    %v952 = vunpack.c.l.b16 %v274
    %v953 = vunpack.c.h.b16 %v274
    %v954 = vunpack.c.l.b16 %v275
    %v955 = vunpack.c.h.b16 %v275
    %v956 = vunpack.c.l.b16 %v276
    %v957 = vunpack.c.h.b16 %v276
    %v958 = vunpack.c.l.b16 %v277
    %v959 = vunpack.c.h.b16 %v277
    %v960 = vunpack.c.l.b16 %v278
    %v961 = vunpack.c.h.b16 %v278
    %v962 = vunpack.c.l.b16 %v279
    %v963 = vunpack.c.h.b16 %v279
    %v964 = vunpack.c.l.b16 %v280
    %v965 = vunpack.c.h.b16 %v280
    %v966 = vunpack.c.l.b16 %v281
    %v967 = vunpack.c.h.b16 %v281
    %v968 = vunpack.c.l.b16 %v282
    %v969 = vunpack.c.h.b16 %v282
    %v970 = vunpack.c.l.b16 %v283
    %v971 = vunpack.c.h.b16 %v283
    %v972 = vunpack.c.l.b16 %v284
    %v973 = vunpack.c.h.b16 %v284
    %v974 = vunpack.c.l.b16 %v285
    %v975 = vunpack.c.h.b16 %v285
    %v976 = vunpack.c.l.b16 %v286
    %v977 = vunpack.c.h.b16 %v286
    %v978 = vunpack.c.l.b16 %v287
    %v979 = vunpack.c.h.b16 %v287
    %v980 = vunpack.c.l.b16 %v288
    %v981 = vunpack.c.h.b16 %v288
    %v982 = vunpack.c.l.b16 %v289
    %v983 = vunpack.c.h.b16 %v289
    %v984 = vunpack.c.l.b16 %v290
    %v985 = vunpack.c.h.b16 %v290
    %v986 = vunpack.c.l.b16 %v291
    %v987 = vunpack.c.h.b16 %v291
    %v988 = vunpack.c.l.b16 %v292
    %v989 = vunpack.c.h.b16 %v292
    %v990 = vunpack.c.l.b16 %v293
    %v991 = vunpack.c.h.b16 %v293
    %v992 = vunpack.c.l.b16 %v294
    %v993 = vunpack.c.h.b16 %v294
    %v994 = vunpack.c.l.b16 %v295
    %v995 = vunpack.c.h.b16 %v295
    %v996 = vunpack.c.l.b16 %v296
    %v997 = vunpack.c.h.b16 %v296
    %v998 = vunpack.c.l.b16 %v297
    %v999 = vunpack.c.h.b16 %v297
    %v1000 = vunpack.c.l.b16 %v298
    %v1001 = vunpack.c.h.b16 %v298
    %v1002 = vunpack.c.l.b16 %v299
    %v1003 = vunpack.c.h.b16 %v299
    %v1004 = vunpack.c.l.b16 %v300
    %v1005 = vunpack.c.h.b16 %v300
    %v1006 = vunpack.c.l.b16 %v301
    %v1007 = vunpack.c.h.b16 %v301
    %v1008 = vunpack.c.l.b16 %v302
    %v1009 = vunpack.c.h.b16 %v302
    %v1010 = vunpack.c.l.b16 %v303
    %v1011 = vunpack.c.h.b16 %v303
    %v1012 = vunpack.c.l.b16 %v304
    %v1013 = vunpack.c.h.b16 %v304
    %v1014 = vunpack.c.l.b16 %v305
    %v1015 = vunpack.c.h.b16 %v305
    %v1016 = vunpack.c.l.b16 %v306
    %v1017 = vunpack.c.h.b16 %v306
    %v1018 = vunpack.c.l.b16 %v307
    %v1019 = vunpack.c.h.b16 %v307
    %v1020 = vunpack.c.l.b16 %v308
    %v1021 = vunpack.c.h.b16 %v308
    %v1022 = vunpack.c.l.b16 %v309
    %v1023 = vunpack.c.h.b16 %v309
    %v1024 = vunpack.c.l.b16 %v310
    %v1025 = vunpack.c.h.b16 %v310
    %v1026 = vunpack.c.l.b16 %v311
    %v1027 = vunpack.c.h.b16 %v311
    %v1028 = vunpack.c.l.b16 %v312
    %v1029 = vunpack.c.h.b16 %v312
    %v1030 = vunpack.c.l.b16 %v313
    %v1031 = vunpack.c.h.b16 %v313
    %v1032 = vunpack.c.l.b16 %v314
    %v1033 = vunpack.c.h.b16 %v314
    %v1034 = vunpack.c.l.b16 %v315
    %v1035 = vunpack.c.h.b16 %v315
    %v1036 = vunpack.c.l.b16 %v316
    %v1037 = vunpack.c.h.b16 %v316
    %v1038 = vunpack.c.l.b16 %v317
    %v1039 = vunpack.c.h.b16 %v317
    %v1040 = vunpack.c.l.b16 %v318
    %v1041 = vunpack.c.h.b16 %v318
    %v1042 = vunpack.c.l.b16 %v319
    %v1043 = vunpack.c.h.b16 %v319
    %v1044 = vunpack.c.l.b16 %v320
    %v1045 = vunpack.c.h.b16 %v320
    %v1046 = vunpack.c.l.b16 %v321
    %v1047 = vunpack.c.h.b16 %v321
    %v1048 = vunpack.c.l.b16 %v322
    %v1049 = vunpack.c.h.b16 %v322
    %v1050 = vunpack.c.l.b16 %v323
    %v1051 = vunpack.c.h.b16 %v323
    %v1052 = vunpack.c.l.b16 %v324
    %v1053 = vunpack.c.h.b16 %v324
    %v1054 = vunpack.c.l.b16 %v325
    %v1055 = vunpack.c.h.b16 %v325
    %v1056 = vpack.c.b16 %v612, %v608
    %v1057 = vpack.c.b16 %v613, %v609
    %v1058 = vpack.c.b16 %v614, %v610
    %v1059 = vpack.c.b16 %v615, %v611
    %v1060 = vpack.c.b16 %v620, %v616
    %v1061 = vpack.c.b16 %v621, %v617
    %v1062 = vpack.c.b16 %v622, %v618
    %v1063 = vpack.c.b16 %v623, %v619
    %v1064 = vpack.c.b16 %v628, %v624
    %v1065 = vpack.c.b16 %v629, %v625
    %v1066 = vpack.c.b16 %v630, %v626
    %v1067 = vpack.c.b16 %v631, %v627
    %v1068 = vpack.c.b16 %v636, %v632
    %v1069 = vpack.c.b16 %v637, %v633
    %v1070 = vpack.c.b16 %v638, %v634
    %v1071 = vpack.c.b16 %v639, %v635
    %v1072 = vpack.c.b16 %v644, %v640
    %v1073 = vpack.c.b16 %v645, %v641
    %v1074 = vpack.c.b16 %v646, %v642
    %v1075 = vpack.c.b16 %v647, %v643
    %v1076 = vpack.c.b16 %v652, %v648
    %v1077 = vpack.c.b16 %v653, %v649
    %v1078 = vpack.c.b16 %v654, %v650
    %v1079 = vpack.c.b16 %v655, %v651
    %v1080 = vpack.c.b16 %v660, %v656
    %v1081 = vpack.c.b16 %v661, %v657
    %v1082 = vpack.c.b16 %v662, %v658
    %v1083 = vpack.c.b16 %v663, %v659
    %v1084 = vpack.c.b16 %v668, %v664
    %v1085 = vpack.c.b16 %v669, %v665
    %v1086 = vpack.c.b16 %v670, %v666
    %v1087 = vpack.c.b16 %v671, %v667
    %v1088 = vpack.c.b16 %v676, %v672
    %v1089 = vpack.c.b16 %v677, %v673
    %v1090 = vpack.c.b16 %v678, %v674
    %v1091 = vpack.c.b16 %v679, %v675
    %v1092 = vpack.c.b16 %v684, %v680
    %v1093 = vpack.c.b16 %v685, %v681
    %v1094 = vpack.c.b16 %v686, %v682
    %v1095 = vpack.c.b16 %v687, %v683
    %v1096 = vpack.c.b16 %v692, %v688
    %v1097 = vpack.c.b16 %v693, %v689
    %v1098 = vpack.c.b16 %v694, %v690
    %v1099 = vpack.c.b16 %v695, %v691
    %v1100 = vpack.c.b16 %v700, %v696
    %v1101 = vpack.c.b16 %v701, %v697
    %v1102 = vpack.c.b16 %v702, %v698
    %v1103 = vpack.c.b16 %v703, %v699
    %v1104 = vpack.c.b16 %v708, %v704
    %v1105 = vpack.c.b16 %v709, %v705
    %v1106 = vpack.c.b16 %v710, %v706
    %v1107 = vpack.c.b16 %v711, %v707
    %v1108 = vpack.c.b16 %v716, %v712
    %v1109 = vpack.c.b16 %v717, %v713
    %v1110 = vpack.c.b16 %v718, %v714
    %v1111 = vpack.c.b16 %v719, %v715
    %v1112 = vpack.c.b16 %v724, %v720
    %v1113 = vpack.c.b16 %v725, %v721
    %v1114 = vpack.c.b16 %v726, %v722
    %v1115 = vpack.c.b16 %v727, %v723
    %v1116 = vpack.c.b16 %v732, %v728
    %v1117 = vpack.c.b16 %v733, %v729
    %v1118 = vpack.c.b16 %v734, %v730
    %v1119 = vpack.c.b16 %v735, %v731
    %v1120 = vpack.c.b16 %v740, %v736
    %v1121 = vpack.c.b16 %v741, %v737
    %v1122 = vpack.c.b16 %v742, %v738
    %v1123 = vpack.c.b16 %v743, %v739
    %v1124 = vpack.c.b16 %v748, %v744
    %v1125 = vpack.c.b16 %v749, %v745
    %v1126 = vpack.c.b16 %v750, %v746
    %v1127 = vpack.c.b16 %v751, %v747
    %v1128 = vpack.c.b16 %v756, %v752
    %v1129 = vpack.c.b16 %v757, %v753
    %v1130 = vpack.c.b16 %v758, %v754
    %v1131 = vpack.c.b16 %v759, %v755
    %v1132 = vpack.c.b16 %v764, %v760
    %v1133 = vpack.c.b16 %v765, %v761
    %v1134 = vpack.c.b16 %v766, %v762
    %v1135 = vpack.c.b16 %v767, %v763
    %v1136 = vpack.c.b16 %v772, %v768
    %v1137 = vpack.c.b16 %v773, %v769
    %v1138 = vpack.c.b16 %v774, %v770
    %v1139 = vpack.c.b16 %v775, %v771
    %v1140 = vpack.c.b16 %v780, %v776
    %v1141 = vpack.c.b16 %v781, %v777
    %v1142 = vpack.c.b16 %v782, %v778
    %v1143 = vpack.c.b16 %v783, %v779
    %v1144 = vpack.c.b16 %v788, %v784
    %v1145 = vpack.c.b16 %v789, %v785
    %v1146 = vpack.c.b16 %v790, %v786
    %v1147 = vpack.c.b16 %v791, %v787
    %v1148 = vpack.c.b16 %v796, %v792
    %v1149 = vpack.c.b16 %v797, %v793
    %v1150 = vpack.c.b16 %v798, %v794
    %v1151 = vpack.c.b16 %v799, %v795
    %v1152 = vpack.c.b16 %v804, %v800
    %v1153 = vpack.c.b16 %v805, %v801
    %v1154 = vpack.c.b16 %v806, %v802
    %v1155 = vpack.c.b16 %v807, %v803
    %v1156 = vpack.c.b16 %v812, %v808
    %v1157 = vpack.c.b16 %v813, %v809
    %v1158 = vpack.c.b16 %v814, %v810
    %v1159 = vpack.c.b16 %v815, %v811
    %v1160 = vpack.c.b16 %v820, %v816
    %v1161 = vpack.c.b16 %v821, %v817
    %v1162 = vpack.c.b16 %v822, %v818
    %v1163 = vpack.c.b16 %v823, %v819
    %v1164 = vpack.c.b16 %v828, %v824
    %v1165 = vpack.c.b16 %v829, %v825
    %v1166 = vpack.c.b16 %v830, %v826
    %v1167 = vpack.c.b16 %v831, %v827
    %v1168 = vpack.c.b16 %v836, %v832
    %v1169 = vpack.c.b16 %v837, %v833
    %v1170 = vpack.c.b16 %v838, %v834
    %v1171 = vpack.c.b16 %v839, %v835
    %v1172 = vpack.c.b16 %v844, %v840
    %v1173 = vpack.c.b16 %v845, %v841
    %v1174 = vpack.c.b16 %v846, %v842
    %v1175 = vpack.c.b16 %v847, %v843
    %v1176 = vpack.c.b16 %v852, %v848
    %v1177 = vpack.c.b16 %v853, %v849
    %v1178 = vpack.c.b16 %v854, %v850
    %v1179 = vpack.c.b16 %v855, %v851
    %v1180 = vpack.c.b16 %v860, %v856
    %v1181 = vpack.c.b16 %v861, %v857
    %v1182 = vpack.c.b16 %v862, %v858
    %v1183 = vpack.c.b16 %v863, %v859
    %v1184 = vpack.c.b16 %v868, %v864
    %v1185 = vpack.c.b16 %v869, %v865
    %v1186 = vpack.c.b16 %v870, %v866
    %v1187 = vpack.c.b16 %v871, %v867
    %v1188 = vpack.c.b16 %v876, %v872
    %v1189 = vpack.c.b16 %v877, %v873
    %v1190 = vpack.c.b16 %v878, %v874
    %v1191 = vpack.c.b16 %v879, %v875
    %v1192 = vpack.c.b16 %v884, %v880
    %v1193 = vpack.c.b16 %v885, %v881
    %v1194 = vpack.c.b16 %v886, %v882
    %v1195 = vpack.c.b16 %v887, %v883
    %v1196 = vpack.c.b16 %v892, %v888
    %v1197 = vpack.c.b16 %v893, %v889
    %v1198 = vpack.c.b16 %v894, %v890
    %v1199 = vpack.c.b16 %v895, %v891
    %v1200 = vpack.c.b16 %v900, %v896
    %v1201 = vpack.c.b16 %v901, %v897
    %v1202 = vpack.c.b16 %v902, %v898
    %v1203 = vpack.c.b16 %v903, %v899
    %v1204 = vpack.c.b16 %v908, %v904
    %v1205 = vpack.c.b16 %v909, %v905
    %v1206 = vpack.c.b16 %v910, %v906
    %v1207 = vpack.c.b16 %v911, %v907
    %v1208 = vpack.c.b16 %v916, %v912
    %v1209 = vpack.c.b16 %v917, %v913
    %v1210 = vpack.c.b16 %v918, %v914
    %v1211 = vpack.c.b16 %v919, %v915
    %v1212 = vpack.c.b16 %v924, %v920
    %v1213 = vpack.c.b16 %v925, %v921
    %v1214 = vpack.c.b16 %v926, %v922
    %v1215 = vpack.c.b16 %v927, %v923
    %v1216 = vpack.c.b16 %v932, %v928
    %v1217 = vpack.c.b16 %v933, %v929
    %v1218 = vpack.c.b16 %v934, %v930
    %v1219 = vpack.c.b16 %v935, %v931
    %v1220 = vpack.c.b16 %v940, %v936
    %v1221 = vpack.c.b16 %v941, %v937
    %v1222 = vpack.c.b16 %v942, %v938
    %v1223 = vpack.c.b16 %v943, %v939
    %v1224 = vpack.c.b16 %v948, %v944
    %v1225 = vpack.c.b16 %v949, %v945
    %v1226 = vpack.c.b16 %v950, %v946
    %v1227 = vpack.c.b16 %v951, %v947
    %v1228 = vpack.c.b16 %v956, %v952
    %v1229 = vpack.c.b16 %v957, %v953
    %v1230 = vpack.c.b16 %v958, %v954
    %v1231 = vpack.c.b16 %v959, %v955
    %v1232 = vpack.c.b16 %v964, %v960
    %v1233 = vpack.c.b16 %v965, %v961
    %v1234 = vpack.c.b16 %v966, %v962
    %v1235 = vpack.c.b16 %v967, %v963
    %v1236 = vpack.c.b16 %v972, %v968
    %v1237 = vpack.c.b16 %v973, %v969
    %v1238 = vpack.c.b16 %v974, %v970
    %v1239 = vpack.c.b16 %v975, %v971
    %v1240 = vpack.c.b16 %v980, %v976
    %v1241 = vpack.c.b16 %v981, %v977
    %v1242 = vpack.c.b16 %v982, %v978
    %v1243 = vpack.c.b16 %v983, %v979
    %v1244 = vpack.c.b16 %v988, %v984
    %v1245 = vpack.c.b16 %v989, %v985
    %v1246 = vpack.c.b16 %v990, %v986
    %v1247 = vpack.c.b16 %v991, %v987
    %v1248 = vpack.c.b16 %v996, %v992
    %v1249 = vpack.c.b16 %v997, %v993
    %v1250 = vpack.c.b16 %v998, %v994
    %v1251 = vpack.c.b16 %v999, %v995
    %v1252 = vpack.c.b16 %v1004, %v1000
    %v1253 = vpack.c.b16 %v1005, %v1001
    %v1254 = vpack.c.b16 %v1006, %v1002
    %v1255 = vpack.c.b16 %v1007, %v1003
    %v1256 = vpack.c.b16 %v1012, %v1008
    %v1257 = vpack.c.b16 %v1013, %v1009
    %v1258 = vpack.c.b16 %v1014, %v1010
    %v1259 = vpack.c.b16 %v1015, %v1011
    %v1260 = vpack.c.b16 %v1020, %v1016
    %v1261 = vpack.c.b16 %v1021, %v1017
    %v1262 = vpack.c.b16 %v1022, %v1018
    %v1263 = vpack.c.b16 %v1023, %v1019
    %v1264 = vpack.c.b16 %v1028, %v1024
    %v1265 = vpack.c.b16 %v1029, %v1025
    %v1266 = vpack.c.b16 %v1030, %v1026
    %v1267 = vpack.c.b16 %v1031, %v1027
    %v1268 = vpack.c.b16 %v1036, %v1032
    %v1269 = vpack.c.b16 %v1037, %v1033
    %v1270 = vpack.c.b16 %v1038, %v1034
    %v1271 = vpack.c.b16 %v1039, %v1035
    %v1272 = vpack.c.b16 %v1044, %v1040
    %v1273 = vpack.c.b16 %v1045, %v1041
    %v1274 = vpack.c.b16 %v1046, %v1042
    %v1275 = vpack.c.b16 %v1047, %v1043
    %v1276 = vpack.c.b16 %v1052, %v1048
    %v1277 = vpack.c.b16 %v1053, %v1049
    %v1278 = vpack.c.b16 %v1054, %v1050
    %v1279 = vpack.c.b16 %v1055, %v1051
    %1504 = vmatprep.subr.bf16.mxu0 %v1085
    %1505 = vmatpush1.bf16.msra.mxu0 %v1084
    %1506 = vmatprep.subr.bf16.mxu0 %v1081
    %1507 = vmatpush1.bf16.msra.mxu0 %v1080
    %1508 = vmatprep.subr.bf16.mxu0 %v1077
    %1509 = vmatpush1.bf16.msra.mxu0 %v1076
    %1510 = vmatprep.subr.bf16.mxu0 %v1073
    %1511 = vmatpush1.bf16.msra.mxu0 %v1072
    %1512 = vmatprep.subr.bf16.mxu0 %v1069
    %1513 = vmatpush1.bf16.msra.mxu0 %v1068
    %1514 = vmatprep.subr.bf16.mxu0 %v1065
    %1515 = vmatpush1.bf16.msra.mxu0 %v1064
    %1516 = vmatprep.subr.bf16.mxu0 %v1061
    %1517 = vmatpush1.bf16.msra.mxu0 %v1060
    %1518 = vmatprep.subr.bf16.mxu0 %v1057
    %1519 = vmatpush1.bf16.msra.mxu0 %v1056
    %1520 = vmatprep.subr.bf16.mxu0 %v1117
    %1521 = vmatpush2.bf16.msra.mxu0 %v1116
    %1522 = vmatprep.subr.bf16.mxu0 %v1113
    %1523 = vmatpush2.bf16.msra.mxu0 %v1112
    %1524 = vmatprep.subr.bf16.mxu0 %v1109
    %1525 = vmatpush2.bf16.msra.mxu0 %v1108
    %1526 = vmatprep.subr.bf16.mxu0 %v1105
    %1527 = vmatpush2.bf16.msra.mxu0 %v1104
    %1528 = vmatprep.subr.bf16.mxu0 %v1101
    %1529 = vmatpush2.bf16.msra.mxu0 %v1100
    %1530 = vmatprep.subr.bf16.mxu0 %v1097
    %1531 = vmatpush2.bf16.msra.mxu0 %v1096
    %1532 = vmatprep.subr.bf16.mxu0 %v1093
    %1533 = vmatpush2.bf16.msra.mxu0 %v1092
    %1534 = vmatprep.subr.bf16.mxu0 %v1089
    %1535 = vmatpush2.bf16.msra.mxu0 %v1088
    %1536 = vmatprep.mubr.bf16.mxu0 %v371
    %1537 = vmatmul.mubr.bf16.gmra.mxu0 %v370
    %v1538 = vpop.f32.mrf.mxu0
    %v1539 = vadd.f32 %v331, %v1538
    %v1540 = vpop.f32.mrf.mxu0
    %v1541 = vadd.f32 %v335, %v1540
    %v1542 = vpop.f32.mrf.mxu0
    %v1543 = vadd.f32 %v331, %v1542
    %v1544 = vpop.f32.mrf.mxu0
    %v1545 = vadd.f32 %v335, %v1544
    %1546 = vdwg.mxu0
    %1547 = vmatprep.subr.bf16.mxu0 %v1149
    %1548 = vmatpush1.bf16.msra.mxu0 %v1148
    %1549 = vmatprep.subr.bf16.mxu0 %v1145
    %1550 = vmatpush1.bf16.msra.mxu0 %v1144
    %1551 = vmatprep.subr.bf16.mxu0 %v1141
    %1552 = vmatpush1.bf16.msra.mxu0 %v1140
    %1553 = vmatprep.subr.bf16.mxu0 %v1137
    %1554 = vmatpush1.bf16.msra.mxu0 %v1136
    %1555 = vmatprep.subr.bf16.mxu0 %v1133
    %1556 = vmatpush1.bf16.msra.mxu0 %v1132
    %1557 = vmatprep.subr.bf16.mxu0 %v1129
    %1558 = vmatpush1.bf16.msra.mxu0 %v1128
    %1559 = vmatprep.subr.bf16.mxu0 %v1125
    %1560 = vmatpush1.bf16.msra.mxu0 %v1124
    %1561 = vmatprep.subr.bf16.mxu0 %v1121
    %1562 = vmatpush1.bf16.msra.mxu0 %v1120
    %1563 = vmatprep.subr.bf16.mxu0 %v1181
    %1564 = vmatpush2.bf16.msra.mxu0 %v1180
    %1565 = vmatprep.subr.bf16.mxu0 %v1177
    %1566 = vmatpush2.bf16.msra.mxu0 %v1176
    %1567 = vmatprep.subr.bf16.mxu0 %v1173
    %1568 = vmatpush2.bf16.msra.mxu0 %v1172
    %1569 = vmatprep.subr.bf16.mxu0 %v1169
    %1570 = vmatpush2.bf16.msra.mxu0 %v1168
    %1571 = vmatprep.subr.bf16.mxu0 %v1165
    %1572 = vmatpush2.bf16.msra.mxu0 %v1164
    %1573 = vmatprep.subr.bf16.mxu0 %v1161
    %1574 = vmatpush2.bf16.msra.mxu0 %v1160
    %1575 = vmatprep.subr.bf16.mxu0 %v1157
    %1576 = vmatpush2.bf16.msra.mxu0 %v1156
    %1577 = vmatprep.subr.bf16.mxu0 %v1153
    %1578 = vmatpush2.bf16.msra.mxu0 %v1152
    %1579 = vmatprep.mubr.bf16.mxu0 %v373
    %1580 = vmatmul.mubr.bf16.gmra.mxu0 %v372
    %v1581 = vpop.f32.mrf.mxu0
    %v1582 = vadd.f32 %v1539, %v1581
    %v1583 = vpop.f32.mrf.mxu0
    %v1584 = vadd.f32 %v1541, %v1583
    %v1585 = vpop.f32.mrf.mxu0
    %v1586 = vadd.f32 %v1543, %v1585
    %v1587 = vpop.f32.mrf.mxu0
    %v1588 = vadd.f32 %v1545, %v1587
    %1589 = vdwg.mxu0
    %1590 = vmatprep.subr.bf16.mxu0 %v1213
    %1591 = vmatpush1.bf16.msra.mxu0 %v1212
    %1592 = vmatprep.subr.bf16.mxu0 %v1209
    %1593 = vmatpush1.bf16.msra.mxu0 %v1208
    %1594 = vmatprep.subr.bf16.mxu0 %v1205
    %1595 = vmatpush1.bf16.msra.mxu0 %v1204
    %1596 = vmatprep.subr.bf16.mxu0 %v1201
    %1597 = vmatpush1.bf16.msra.mxu0 %v1200
    %1598 = vmatprep.subr.bf16.mxu0 %v1197
    %1599 = vmatpush1.bf16.msra.mxu0 %v1196
    %1600 = vmatprep.subr.bf16.mxu0 %v1193
    %1601 = vmatpush1.bf16.msra.mxu0 %v1192
    %1602 = vmatprep.subr.bf16.mxu0 %v1189
    %1603 = vmatpush1.bf16.msra.mxu0 %v1188
    %1604 = vmatprep.subr.bf16.mxu0 %v1185
    %1605 = vmatpush1.bf16.msra.mxu0 %v1184
    %1606 = vmatprep.subr.bf16.mxu0 %v1245
    %1607 = vmatpush2.bf16.msra.mxu0 %v1244
    %1608 = vmatprep.subr.bf16.mxu0 %v1241
    %1609 = vmatpush2.bf16.msra.mxu0 %v1240
    %1610 = vmatprep.subr.bf16.mxu0 %v1237
    %1611 = vmatpush2.bf16.msra.mxu0 %v1236
    %1612 = vmatprep.subr.bf16.mxu0 %v1233
    %1613 = vmatpush2.bf16.msra.mxu0 %v1232
    %1614 = vmatprep.subr.bf16.mxu0 %v1229
    %1615 = vmatpush2.bf16.msra.mxu0 %v1228
    %1616 = vmatprep.subr.bf16.mxu0 %v1225
    %1617 = vmatpush2.bf16.msra.mxu0 %v1224
    %1618 = vmatprep.subr.bf16.mxu0 %v1221
    %1619 = vmatpush2.bf16.msra.mxu0 %v1220
    %1620 = vmatprep.subr.bf16.mxu0 %v1217
    %1621 = vmatpush2.bf16.msra.mxu0 %v1216
    %1622 = vmatprep.mubr.bf16.mxu0 %v375
    %1623 = vmatmul.mubr.bf16.gmra.mxu0 %v374
    %v1624 = vpop.f32.mrf.mxu0
    %v1625 = vadd.f32 %v1582, %v1624
    %v1626 = vpop.f32.mrf.mxu0
    %v1627 = vadd.f32 %v1584, %v1626
    %v1628 = vpop.f32.mrf.mxu0
    %v1629 = vadd.f32 %v1586, %v1628
    %v1630 = vpop.f32.mrf.mxu0
    %v1631 = vadd.f32 %v1588, %v1630
    %1632 = vdwg.mxu0
    %1633 = vmatprep.subr.bf16.mxu0 %v1277
    %1634 = vmatpush1.bf16.msra.mxu0 %v1276
    %1635 = vmatprep.subr.bf16.mxu0 %v1273
    %1636 = vmatpush1.bf16.msra.mxu0 %v1272
    %1637 = vmatprep.subr.bf16.mxu0 %v1269
    %1638 = vmatpush1.bf16.msra.mxu0 %v1268
    %1639 = vmatprep.subr.bf16.mxu0 %v1265
    %1640 = vmatpush1.bf16.msra.mxu0 %v1264
    %1641 = vmatprep.subr.bf16.mxu0 %v1261
    %1642 = vmatpush1.bf16.msra.mxu0 %v1260
    %1643 = vmatprep.subr.bf16.mxu0 %v1257
    %1644 = vmatpush1.bf16.msra.mxu0 %v1256
    %1645 = vmatprep.subr.bf16.mxu0 %v1253
    %1646 = vmatpush1.bf16.msra.mxu0 %v1252
    %1647 = vmatprep.subr.bf16.mxu0 %v1249
    %1648 = vmatpush1.bf16.msra.mxu0 %v1248
    %1649 = vmatprep.subr.bf16.mxu0 0
    %1650 = vmatpush2.bf16.msra.mxu0 0
    %1651 = vmatprep.subr.bf16.mxu0 0
    %1652 = vmatpush2.bf16.msra.mxu0 0
    %1653 = vmatprep.subr.bf16.mxu0 0
    %1654 = vmatpush2.bf16.msra.mxu0 0
    %1655 = vmatprep.subr.bf16.mxu0 0
    %1656 = vmatpush2.bf16.msra.mxu0 0
    %1657 = vmatprep.subr.bf16.mxu0 0
    %1658 = vmatpush2.bf16.msra.mxu0 0
    %1659 = vmatprep.subr.bf16.mxu0 0
    %1660 = vmatpush2.bf16.msra.mxu0 0
    %1661 = vmatprep.subr.bf16.mxu0 0
    %1662 = vmatpush2.bf16.msra.mxu0 0
    %1663 = vmatprep.subr.bf16.mxu0 0
    %1664 = vmatpush2.bf16.msra.mxu0 0
    %1665 = vmatprep.mubr.bf16.mxu0 0
    %1666 = vmatmul.mubr.bf16.gmra.mxu0 %v376
    %v1667 = vpop.f32.mrf.mxu0
    %v1668 = vadd.f32 %v1625, %v1667
    %v1669 = vpop.f32.mrf.mxu0
    %v1670 = vadd.f32 %v1627, %v1669
    %v1671 = vpop.f32.mrf.mxu0
    %v1672 = vadd.f32 %v1629, %v1671
    %v1673 = vpop.f32.mrf.mxu0
    %v1674 = vadd.f32 %v1631, %v1673
    %1675 = vdwg.mxu0
    %1676 = vmatprep.subr.bf16.mxu0 %v1087
    %1677 = vmatpush1.bf16.msra.mxu0 %v1086
    %1678 = vmatprep.subr.bf16.mxu0 %v1083
    %1679 = vmatpush1.bf16.msra.mxu0 %v1082
    %1680 = vmatprep.subr.bf16.mxu0 %v1079
    %1681 = vmatpush1.bf16.msra.mxu0 %v1078
    %1682 = vmatprep.subr.bf16.mxu0 %v1075
    %1683 = vmatpush1.bf16.msra.mxu0 %v1074
    %1684 = vmatprep.subr.bf16.mxu0 %v1071
    %1685 = vmatpush1.bf16.msra.mxu0 %v1070
    %1686 = vmatprep.subr.bf16.mxu0 %v1067
    %1687 = vmatpush1.bf16.msra.mxu0 %v1066
    %1688 = vmatprep.subr.bf16.mxu0 %v1063
    %1689 = vmatpush1.bf16.msra.mxu0 %v1062
    %1690 = vmatprep.subr.bf16.mxu0 %v1059
    %1691 = vmatpush1.bf16.msra.mxu0 %v1058
    %1692 = vmatprep.subr.bf16.mxu0 %v1119
    %1693 = vmatpush2.bf16.msra.mxu0 %v1118
    %1694 = vmatprep.subr.bf16.mxu0 %v1115
    %1695 = vmatpush2.bf16.msra.mxu0 %v1114
    %1696 = vmatprep.subr.bf16.mxu0 %v1111
    %1697 = vmatpush2.bf16.msra.mxu0 %v1110
    %1698 = vmatprep.subr.bf16.mxu0 %v1107
    %1699 = vmatpush2.bf16.msra.mxu0 %v1106
    %1700 = vmatprep.subr.bf16.mxu0 %v1103
    %1701 = vmatpush2.bf16.msra.mxu0 %v1102
    %1702 = vmatprep.subr.bf16.mxu0 %v1099
    %1703 = vmatpush2.bf16.msra.mxu0 %v1098
    %1704 = vmatprep.subr.bf16.mxu0 %v1095
    %1705 = vmatpush2.bf16.msra.mxu0 %v1094
    %1706 = vmatprep.subr.bf16.mxu0 %v1091
    %1707 = vmatpush2.bf16.msra.mxu0 %v1090
    %1708 = vmatprep.mubr.bf16.mxu0 %v371
    %1709 = vmatmul.mubr.bf16.gmra.mxu0 %v370
    %v1710 = vpop.f32.mrf.mxu0
    %v1711 = vadd.f32 %v339, %v1710
    %v1712 = vpop.f32.mrf.mxu0
    %v1713 = vadd.f32 %v343, %v1712
    %v1714 = vpop.f32.mrf.mxu0
    %v1715 = vadd.f32 %v339, %v1714
    %v1716 = vpop.f32.mrf.mxu0
    %v1717 = vadd.f32 %v343, %v1716
    %1718 = vdwg.mxu0
    %1719 = vmatprep.subr.bf16.mxu0 %v1151
    %1720 = vmatpush1.bf16.msra.mxu0 %v1150
    %1721 = vmatprep.subr.bf16.mxu0 %v1147
    %1722 = vmatpush1.bf16.msra.mxu0 %v1146
    %1723 = vmatprep.subr.bf16.mxu0 %v1143
    %1724 = vmatpush1.bf16.msra.mxu0 %v1142
    %1725 = vmatprep.subr.bf16.mxu0 %v1139
    %1726 = vmatpush1.bf16.msra.mxu0 %v1138
    %1727 = vmatprep.subr.bf16.mxu0 %v1135
    %1728 = vmatpush1.bf16.msra.mxu0 %v1134
    %1729 = vmatprep.subr.bf16.mxu0 %v1131
    %1730 = vmatpush1.bf16.msra.mxu0 %v1130
    %1731 = vmatprep.subr.bf16.mxu0 %v1127
    %1732 = vmatpush1.bf16.msra.mxu0 %v1126
    %1733 = vmatprep.subr.bf16.mxu0 %v1123
    %1734 = vmatpush1.bf16.msra.mxu0 %v1122
    %1735 = vmatprep.subr.bf16.mxu0 %v1183
    %1736 = vmatpush2.bf16.msra.mxu0 %v1182
    %1737 = vmatprep.subr.bf16.mxu0 %v1179
    %1738 = vmatpush2.bf16.msra.mxu0 %v1178
    %1739 = vmatprep.subr.bf16.mxu0 %v1175
    %1740 = vmatpush2.bf16.msra.mxu0 %v1174
    %1741 = vmatprep.subr.bf16.mxu0 %v1171
    %1742 = vmatpush2.bf16.msra.mxu0 %v1170
    %1743 = vmatprep.subr.bf16.mxu0 %v1167
    %1744 = vmatpush2.bf16.msra.mxu0 %v1166
    %1745 = vmatprep.subr.bf16.mxu0 %v1163
    %1746 = vmatpush2.bf16.msra.mxu0 %v1162
    %1747 = vmatprep.subr.bf16.mxu0 %v1159
    %1748 = vmatpush2.bf16.msra.mxu0 %v1158
    %1749 = vmatprep.subr.bf16.mxu0 %v1155
    %1750 = vmatpush2.bf16.msra.mxu0 %v1154
    %1751 = vmatprep.mubr.bf16.mxu0 %v373
    %1752 = vmatmul.mubr.bf16.gmra.mxu0 %v372
    %v1753 = vpop.f32.mrf.mxu0
    %v1754 = vadd.f32 %v1711, %v1753
    %v1755 = vpop.f32.mrf.mxu0
    %v1756 = vadd.f32 %v1713, %v1755
    %v1757 = vpop.f32.mrf.mxu0
    %v1758 = vadd.f32 %v1715, %v1757
    %v1759 = vpop.f32.mrf.mxu0
    %v1760 = vadd.f32 %v1717, %v1759
    %1761 = vdwg.mxu0
    %1762 = vmatprep.subr.bf16.mxu0 %v1215
    %1763 = vmatpush1.bf16.msra.mxu0 %v1214
    %1764 = vmatprep.subr.bf16.mxu0 %v1211
    %1765 = vmatpush1.bf16.msra.mxu0 %v1210
    %1766 = vmatprep.subr.bf16.mxu0 %v1207
    %1767 = vmatpush1.bf16.msra.mxu0 %v1206
    %1768 = vmatprep.subr.bf16.mxu0 %v1203
    %1769 = vmatpush1.bf16.msra.mxu0 %v1202
    %1770 = vmatprep.subr.bf16.mxu0 %v1199
    %1771 = vmatpush1.bf16.msra.mxu0 %v1198
    %1772 = vmatprep.subr.bf16.mxu0 %v1195
    %1773 = vmatpush1.bf16.msra.mxu0 %v1194
    %1774 = vmatprep.subr.bf16.mxu0 %v1191
    %1775 = vmatpush1.bf16.msra.mxu0 %v1190
    %1776 = vmatprep.subr.bf16.mxu0 %v1187
    %1777 = vmatpush1.bf16.msra.mxu0 %v1186
    %1778 = vmatprep.subr.bf16.mxu0 %v1247
    %1779 = vmatpush2.bf16.msra.mxu0 %v1246
    %1780 = vmatprep.subr.bf16.mxu0 %v1243
    %1781 = vmatpush2.bf16.msra.mxu0 %v1242
    %1782 = vmatprep.subr.bf16.mxu0 %v1239
    %1783 = vmatpush2.bf16.msra.mxu0 %v1238
    %1784 = vmatprep.subr.bf16.mxu0 %v1235
    %1785 = vmatpush2.bf16.msra.mxu0 %v1234
    %1786 = vmatprep.subr.bf16.mxu0 %v1231
    %1787 = vmatpush2.bf16.msra.mxu0 %v1230
    %1788 = vmatprep.subr.bf16.mxu0 %v1227
    %1789 = vmatpush2.bf16.msra.mxu0 %v1226
    %1790 = vmatprep.subr.bf16.mxu0 %v1223
    %1791 = vmatpush2.bf16.msra.mxu0 %v1222
    %1792 = vmatprep.subr.bf16.mxu0 %v1219
    %1793 = vmatpush2.bf16.msra.mxu0 %v1218
    %1794 = vmatprep.mubr.bf16.mxu0 %v375
    %1795 = vmatmul.mubr.bf16.gmra.mxu0 %v374
    %v1796 = vpop.f32.mrf.mxu0
    %v1797 = vadd.f32 %v1754, %v1796
    %v1798 = vpop.f32.mrf.mxu0
    %v1799 = vadd.f32 %v1756, %v1798
    %v1800 = vpop.f32.mrf.mxu0
    %v1801 = vadd.f32 %v1758, %v1800
    %v1802 = vpop.f32.mrf.mxu0
    %v1803 = vadd.f32 %v1760, %v1802
    %1804 = vdwg.mxu0
    %1805 = vmatprep.subr.bf16.mxu0 %v1279
    %1806 = vmatpush1.bf16.msra.mxu0 %v1278
    %1807 = vmatprep.subr.bf16.mxu0 %v1275
    %1808 = vmatpush1.bf16.msra.mxu0 %v1274
    %1809 = vmatprep.subr.bf16.mxu0 %v1271
    %1810 = vmatpush1.bf16.msra.mxu0 %v1270
    %1811 = vmatprep.subr.bf16.mxu0 %v1267
    %1812 = vmatpush1.bf16.msra.mxu0 %v1266
    %1813 = vmatprep.subr.bf16.mxu0 %v1263
    %1814 = vmatpush1.bf16.msra.mxu0 %v1262
    %1815 = vmatprep.subr.bf16.mxu0 %v1259
    %1816 = vmatpush1.bf16.msra.mxu0 %v1258
    %1817 = vmatprep.subr.bf16.mxu0 %v1255
    %1818 = vmatpush1.bf16.msra.mxu0 %v1254
    %1819 = vmatprep.subr.bf16.mxu0 %v1251
    %1820 = vmatpush1.bf16.msra.mxu0 %v1250
    %1821 = vmatprep.subr.bf16.mxu0 0
    %1822 = vmatpush2.bf16.msra.mxu0 0
    %1823 = vmatprep.subr.bf16.mxu0 0
    %1824 = vmatpush2.bf16.msra.mxu0 0
    %1825 = vmatprep.subr.bf16.mxu0 0
    %1826 = vmatpush2.bf16.msra.mxu0 0
    %1827 = vmatprep.subr.bf16.mxu0 0
    %1828 = vmatpush2.bf16.msra.mxu0 0
    %1829 = vmatprep.subr.bf16.mxu0 0
    %1830 = vmatpush2.bf16.msra.mxu0 0
    %1831 = vmatprep.subr.bf16.mxu0 0
    %1832 = vmatpush2.bf16.msra.mxu0 0
    %1833 = vmatprep.subr.bf16.mxu0 0
    %1834 = vmatpush2.bf16.msra.mxu0 0
    %1835 = vmatprep.subr.bf16.mxu0 0
    %1836 = vmatpush2.bf16.msra.mxu0 0
    %1837 = vmatprep.mubr.bf16.mxu0 0
    %1838 = vmatmul.mubr.bf16.gmra.mxu0 %v376
    %v1839 = vpop.f32.mrf.mxu0
    %v1840 = vadd.f32 %v1797, %v1839
    %v1841 = vpop.f32.mrf.mxu0
    %v1842 = vadd.f32 %v1799, %v1841
    %v1843 = vpop.f32.mrf.mxu0
    %v1844 = vadd.f32 %v1801, %v1843
    %v1845 = vpop.f32.mrf.mxu0
    %v1846 = vadd.f32 %v1803, %v1845
    %1847 = vdwg.mxu0
    %v1848 = vmax.f32 %v1668, 0.0
    %v1849 = vmax.f32 %v1670, 0.0
    %v1850 = vmax.f32 %v1840, 0.0
    %v1851 = vmax.f32 %v1842, 0.0
    %v1852 = vmax.f32 %v1672, 0.0
    %v1853 = vmax.f32 %v1674, 0.0
    %v1854 = vmax.f32 %v1844, 0.0
    %v1855 = vmax.f32 %v1846, 0.0
    %v1856 = vpack.c.bf16 %v1852, %v1848
    %v1857 = vpack.c.bf16 %v1853, %v1849
    %v1858 = vpack.c.bf16 %v1854, %v1850
    %v1859 = vpack.c.bf16 %v1855, %v1851
    %v1860 = vld [vmem:[#allocation8] sm:$0xff]
    %v1861 = vld [vmem:[#allocation8 + $0x8] sm:$0xff]
    %v1862 = vld [vmem:[#allocation8 + $0x10] sm:$0xff]
    %v1863 = vld [vmem:[#allocation8 + $0x18] sm:$0xff]
    %v1864 = vld [vmem:[#allocation8 + $0x20] sm:$0xff]
    %v1865 = vld [vmem:[#allocation8 + $0x28] sm:$0xff]
    %v1866 = vld [vmem:[#allocation8 + $0x30] sm:$0xff]
    %v1867 = vld [vmem:[#allocation8 + $0x38] sm:$0xff]
    %v1868 = vld [vmem:[#allocation8 + $0x40] sm:$0xff]
    %v1869 = vld [vmem:[#allocation8 + $0x48] sm:$0xff]
    %v1870 = vld [vmem:[#allocation8 + $0x50] sm:$0xff]
    %v1871 = vld [vmem:[#allocation8 + $0x58] sm:$0xff]
    %v1872 = vld [vmem:[#allocation8 + $0x60] sm:$0xff]
    %v1873 = vld [vmem:[#allocation8 + $0x68] sm:$0xff]
    %v1874 = vld [vmem:[#allocation8 + $0x70] sm:$0xff]
    %v1875 = vld [vmem:[#allocation8 + $0x78] sm:$0xff]
    %v1876 = vld [vmem:[#allocation8 + $0x80] sm:$0xff]
    %v1877 = vld [vmem:[#allocation8 + $0x88] sm:$0xff]
    %v1878 = vld [vmem:[#allocation8 + $0x90] sm:$0xff]
    %v1879 = vld [vmem:[#allocation8 + $0x98] sm:$0xff]
    %v1880 = vld [vmem:[#allocation8 + $0xa0] sm:$0xff]
    %v1881 = vld [vmem:[#allocation8 + $0xa8] sm:$0xff]
    %v1882 = vld [vmem:[#allocation8 + $0xb0] sm:$0xff]
    %v1883 = vld [vmem:[#allocation8 + $0xb8] sm:$0xff]
    %v1884 = vld [vmem:[#allocation8 + $0xc0] sm:$0xff]
    %v1885 = vld [vmem:[#allocation8 + $0xc8] sm:$0xff]
    %v1886 = vld [vmem:[#allocation8 + $0xd0] sm:$0xff]
    %v1887 = vld [vmem:[#allocation8 + $0xd8] sm:$0xff]
    %v1888 = vld [vmem:[#allocation8 + $0xe0] sm:$0xff]
    %v1889 = vld [vmem:[#allocation8 + $0xe8] sm:$0xff]
    %v1890 = vld [vmem:[#allocation8 + $0xf0] sm:$0xff]
    %v1891 = vld [vmem:[#allocation8 + $0xf8] sm:$0xff]
    %v1892 = vld [vmem:[#allocation8 + $0x100] sm:$0xff]
    %v1893 = vld [vmem:[#allocation8 + $0x108] sm:$0xff]
    %v1894 = vld [vmem:[#allocation8 + $0x110] sm:$0xff]
    %v1895 = vld [vmem:[#allocation8 + $0x118] sm:$0xff]
    %v1896 = vld [vmem:[#allocation8 + $0x120] sm:$0xff]
    %v1897 = vld [vmem:[#allocation8 + $0x128] sm:$0xff]
    %v1898 = vld [vmem:[#allocation8 + $0x130] sm:$0xff]
    %v1899 = vld [vmem:[#allocation8 + $0x138] sm:$0xff]
    %v1900 = vld [vmem:[#allocation8 + $0x140] sm:$0xff]
    %v1901 = vld [vmem:[#allocation8 + $0x148] sm:$0xff]
    %v1902 = vld [vmem:[#allocation8 + $0x150] sm:$0xff]
    %v1903 = vld [vmem:[#allocation8 + $0x158] sm:$0xff]
    %v1904 = vld [vmem:[#allocation8 + $0x160] sm:$0xff]
    %v1905 = vld [vmem:[#allocation8 + $0x168] sm:$0xff]
    %v1906 = vld [vmem:[#allocation8 + $0x170] sm:$0xff]
    %v1907 = vld [vmem:[#allocation8 + $0x178] sm:$0xff]
    %v1908 = vld [vmem:[#allocation8 + $0x180] sm:$0xff]
    %v1909 = vld [vmem:[#allocation8 + $0x188] sm:$0xff]
    %v1910 = vld [vmem:[#allocation8 + $0x190] sm:$0xff]
    %v1911 = vld [vmem:[#allocation8 + $0x198] sm:$0xff]
    %v1912 = vld [vmem:[#allocation8 + $0x1a0] sm:$0xff]
    %v1913 = vld [vmem:[#allocation8 + $0x1a8] sm:$0xff]
    %v1914 = vld [vmem:[#allocation8 + $0x1b0] sm:$0xff]
    %v1915 = vld [vmem:[#allocation8 + $0x1b8] sm:$0xff]
    %v1916 = vld [vmem:[#allocation8 + $0x1c0] sm:$0xff]
    %v1917 = vld [vmem:[#allocation8 + $0x1c8] sm:$0xff]
    %v1918 = vld [vmem:[#allocation8 + $0x1d0] sm:$0xff]
    %v1919 = vld [vmem:[#allocation8 + $0x1d8] sm:$0xff]
    %v1920 = vld [vmem:[#allocation8 + $0x1e0] sm:$0xff]
    %v1921 = vld [vmem:[#allocation8 + $0x1e8] sm:$0xff]
    %v1922 = vld [vmem:[#allocation8 + $0x1f0] sm:$0xff]
    %v1923 = vld [vmem:[#allocation8 + $0x1f8] sm:$0xff]
    %v1924 = vld [vmem:[#allocation8 + $0x200] sm:$0xff]
    %v1925 = vld [vmem:[#allocation8 + $0x208] sm:$0xff]
    %v1926 = vld [vmem:[#allocation8 + $0x210] sm:$0xff]
    %v1927 = vld [vmem:[#allocation8 + $0x218] sm:$0xff]
    %v1928 = vld [vmem:[#allocation8 + $0x220] sm:$0xff]
    %v1929 = vld [vmem:[#allocation8 + $0x228] sm:$0xff]
    %v1930 = vld [vmem:[#allocation8 + $0x230] sm:$0xff]
    %v1931 = vld [vmem:[#allocation8 + $0x238] sm:$0xff]
    %v1932 = vld [vmem:[#allocation8 + $0x240] sm:$0xff]
    %v1933 = vld [vmem:[#allocation8 + $0x248] sm:$0xff]
    %v1934 = vld [vmem:[#allocation8 + $0x250] sm:$0xff]
    %v1935 = vld [vmem:[#allocation8 + $0x258] sm:$0xff]
    %v1936 = vld [vmem:[#allocation8 + $0x260] sm:$0xff]
    %v1937 = vld [vmem:[#allocation8 + $0x268] sm:$0xff]
    %v1938 = vld [vmem:[#allocation8 + $0x270] sm:$0xff]
    %v1939 = vld [vmem:[#allocation8 + $0x278] sm:$0xff]
    %v1940 = vld [vmem:[#allocation8 + $0x280] sm:$0xff]
    %v1941 = vld [vmem:[#allocation8 + $0x288] sm:$0xff]
    %v1942 = vld [vmem:[#allocation8 + $0x290] sm:$0xff]
    %v1943 = vld [vmem:[#allocation8 + $0x298] sm:$0xff]
    %v1944 = vld [vmem:[#allocation8 + $0x2a0] sm:$0xff]
    %v1945 = vld [vmem:[#allocation8 + $0x2a8] sm:$0xff]
    %v1946 = vld [vmem:[#allocation8 + $0x2b0] sm:$0xff]
    %v1947 = vld [vmem:[#allocation8 + $0x2b8] sm:$0xff]
    %v1948 = vld [vmem:[#allocation8 + $0x2c0] sm:$0xff]
    %v1949 = vld [vmem:[#allocation8 + $0x2c8] sm:$0xff]
    %v1950 = vld [vmem:[#allocation8 + $0x2d0] sm:$0xff]
    %v1951 = vld [vmem:[#allocation8 + $0x2d8] sm:$0xff]
    %v1952 = vld [vmem:[#allocation8 + $0x2e0] sm:$0xff]
    %v1953 = vld [vmem:[#allocation8 + $0x2e8] sm:$0xff]
    %v1954 = vld [vmem:[#allocation8 + $0x2f0] sm:$0xff]
    %v1955 = vld [vmem:[#allocation8 + $0x2f8] sm:$0xff]
    %v1956 = vld [vmem:[#allocation8 + $0x300] sm:$0xff]
    %v1957 = vld [vmem:[#allocation8 + $0x308] sm:$0xff]
    %v1958 = vld [vmem:[#allocation8 + $0x310] sm:$0xff]
    %v1959 = vld [vmem:[#allocation8 + $0x318] sm:$0xff]
    %v1960 = vld [vmem:[#allocation8 + $0x320] sm:$0xff]
    %v1961 = vld [vmem:[#allocation8 + $0x328] sm:$0xff]
    %v1962 = vld [vmem:[#allocation8 + $0x330] sm:$0xff]
    %v1963 = vld [vmem:[#allocation8 + $0x338] sm:$0xff]
    %v1964 = vld [vmem:[#allocation8 + $0x340] sm:$0xff]
    %v1965 = vld [vmem:[#allocation8 + $0x348] sm:$0xff]
    %v1966 = vld [vmem:[#allocation8 + $0x350] sm:$0xff]
    %v1967 = vld [vmem:[#allocation8 + $0x358] sm:$0xff]
    %v1968 = vld [vmem:[#allocation8 + $0x360] sm:$0xff]
    %v1969 = vld [vmem:[#allocation8 + $0x368] sm:$0xff]
    %v1970 = vld [vmem:[#allocation8 + $0x370] sm:$0xff]
    %v1971 = vld [vmem:[#allocation8 + $0x378] sm:$0xff]
    %v1972 = vld [vmem:[#allocation8 + $0x380] sm:$0xff]
    %v1973 = vld [vmem:[#allocation8 + $0x388] sm:$0xff]
    %v1974 = vld [vmem:[#allocation8 + $0x390] sm:$0xff]
    %v1975 = vld [vmem:[#allocation8 + $0x398] sm:$0xff]
    %v1976 = vld [vmem:[#allocation8 + $0x3a0] sm:$0xff]
    %v1977 = vld [vmem:[#allocation8 + $0x3a8] sm:$0xff]
    %v1978 = vld [vmem:[#allocation8 + $0x3b0] sm:$0xff]
    %v1979 = vld [vmem:[#allocation8 + $0x3b8] sm:$0xff]
    %v1980 = vld [vmem:[#allocation8 + $0x3c0] sm:$0xff]
    %v1981 = vld [vmem:[#allocation8 + $0x3c8] sm:$0xff]
    %v1982 = vld [vmem:[#allocation8 + $0x3d0] sm:$0xff]
    %v1983 = vld [vmem:[#allocation8 + $0x3d8] sm:$0xff]
    %v1984 = vld [vmem:[#allocation8 + $0x3e0] sm:$0xff]
    %v1985 = vld [vmem:[#allocation8 + $0x3e8] sm:$0xff]
    %v1986 = vld [vmem:[#allocation8 + $0x3f0] sm:$0xff]
    %v1987 = vld [vmem:[#allocation8 + $0x3f8] sm:$0xff]
    %v1988 = vld [vmem:[%s4] sm:$0xf]
    %v1990 = vlaneseq
    %v1991 = vshrl.u32 %v1990, 7
    %v1992 = vsub.s32 0, %v1991
    %v1993 = vrot.slane %v1988, %v1992
    %v1994 = vlaneseq
    %v1995 = vshrl.u32 %v1994, 7
    %v1996 = vsub.s32 1, %v1995
    %v1997 = vrot.slane %v1988, %v1996
    %v1998 = vlaneseq
    %v1999 = vshrl.u32 %v1998, 7
    %v2000 = vsub.s32 2, %v1999
    %v2001 = vrot.slane %v1988, %v2000
    %v2002 = vlaneseq
    %v2003 = vshrl.u32 %v2002, 7
    %v2004 = vsub.s32 3, %v2003
    %v2005 = vrot.slane %v1988, %v2004
    %v2138 = vunpack.c.l.b16 %v1860
    %v2139 = vunpack.c.h.b16 %v1860
    %v2140 = vunpack.c.l.b16 %v1861
    %v2141 = vunpack.c.h.b16 %v1861
    %v2142 = vunpack.c.l.b16 %v1862
    %v2143 = vunpack.c.h.b16 %v1862
    %v2144 = vunpack.c.l.b16 %v1863
    %v2145 = vunpack.c.h.b16 %v1863
    %v2146 = vunpack.c.l.b16 %v1864
    %v2147 = vunpack.c.h.b16 %v1864
    %v2148 = vunpack.c.l.b16 %v1865
    %v2149 = vunpack.c.h.b16 %v1865
    %v2150 = vunpack.c.l.b16 %v1866
    %v2151 = vunpack.c.h.b16 %v1866
    %v2152 = vunpack.c.l.b16 %v1867
    %v2153 = vunpack.c.h.b16 %v1867
    %v2154 = vunpack.c.l.b16 %v1868
    %v2155 = vunpack.c.h.b16 %v1868
    %v2156 = vunpack.c.l.b16 %v1869
    %v2157 = vunpack.c.h.b16 %v1869
    %v2158 = vunpack.c.l.b16 %v1870
    %v2159 = vunpack.c.h.b16 %v1870
    %v2160 = vunpack.c.l.b16 %v1871
    %v2161 = vunpack.c.h.b16 %v1871
    %v2162 = vunpack.c.l.b16 %v1872
    %v2163 = vunpack.c.h.b16 %v1872
    %v2164 = vunpack.c.l.b16 %v1873
    %v2165 = vunpack.c.h.b16 %v1873
    %v2166 = vunpack.c.l.b16 %v1874
    %v2167 = vunpack.c.h.b16 %v1874
    %v2168 = vunpack.c.l.b16 %v1875
    %v2169 = vunpack.c.h.b16 %v1875
    %v2170 = vunpack.c.l.b16 %v1876
    %v2171 = vunpack.c.h.b16 %v1876
    %v2172 = vunpack.c.l.b16 %v1877
    %v2173 = vunpack.c.h.b16 %v1877
    %v2174 = vunpack.c.l.b16 %v1878
    %v2175 = vunpack.c.h.b16 %v1878
    %v2176 = vunpack.c.l.b16 %v1879
    %v2177 = vunpack.c.h.b16 %v1879
    %v2178 = vunpack.c.l.b16 %v1880
    %v2179 = vunpack.c.h.b16 %v1880
    %v2180 = vunpack.c.l.b16 %v1881
    %v2181 = vunpack.c.h.b16 %v1881
    %v2182 = vunpack.c.l.b16 %v1882
    %v2183 = vunpack.c.h.b16 %v1882
    %v2184 = vunpack.c.l.b16 %v1883
    %v2185 = vunpack.c.h.b16 %v1883
    %v2186 = vunpack.c.l.b16 %v1884
    %v2187 = vunpack.c.h.b16 %v1884
    %v2188 = vunpack.c.l.b16 %v1885
    %v2189 = vunpack.c.h.b16 %v1885
    %v2190 = vunpack.c.l.b16 %v1886
    %v2191 = vunpack.c.h.b16 %v1886
    %v2192 = vunpack.c.l.b16 %v1887
    %v2193 = vunpack.c.h.b16 %v1887
    %v2194 = vunpack.c.l.b16 %v1888
    %v2195 = vunpack.c.h.b16 %v1888
    %v2196 = vunpack.c.l.b16 %v1889
    %v2197 = vunpack.c.h.b16 %v1889
    %v2198 = vunpack.c.l.b16 %v1890
    %v2199 = vunpack.c.h.b16 %v1890
    %v2200 = vunpack.c.l.b16 %v1891
    %v2201 = vunpack.c.h.b16 %v1891
    %v2202 = vunpack.c.l.b16 %v1892
    %v2203 = vunpack.c.h.b16 %v1892
    %v2204 = vunpack.c.l.b16 %v1893
    %v2205 = vunpack.c.h.b16 %v1893
    %v2206 = vunpack.c.l.b16 %v1894
    %v2207 = vunpack.c.h.b16 %v1894
    %v2208 = vunpack.c.l.b16 %v1895
    %v2209 = vunpack.c.h.b16 %v1895
    %v2210 = vunpack.c.l.b16 %v1896
    %v2211 = vunpack.c.h.b16 %v1896
    %v2212 = vunpack.c.l.b16 %v1897
    %v2213 = vunpack.c.h.b16 %v1897
    %v2214 = vunpack.c.l.b16 %v1898
    %v2215 = vunpack.c.h.b16 %v1898
    %v2216 = vunpack.c.l.b16 %v1899
    %v2217 = vunpack.c.h.b16 %v1899
    %v2218 = vunpack.c.l.b16 %v1900
    %v2219 = vunpack.c.h.b16 %v1900
    %v2220 = vunpack.c.l.b16 %v1901
    %v2221 = vunpack.c.h.b16 %v1901
    %v2222 = vunpack.c.l.b16 %v1902
    %v2223 = vunpack.c.h.b16 %v1902
    %v2224 = vunpack.c.l.b16 %v1903
    %v2225 = vunpack.c.h.b16 %v1903
    %v2226 = vunpack.c.l.b16 %v1904
    %v2227 = vunpack.c.h.b16 %v1904
    %v2228 = vunpack.c.l.b16 %v1905
    %v2229 = vunpack.c.h.b16 %v1905
    %v2230 = vunpack.c.l.b16 %v1906
    %v2231 = vunpack.c.h.b16 %v1906
    %v2232 = vunpack.c.l.b16 %v1907
    %v2233 = vunpack.c.h.b16 %v1907
    %v2234 = vunpack.c.l.b16 %v1908
    %v2235 = vunpack.c.h.b16 %v1908
    %v2236 = vunpack.c.l.b16 %v1909
    %v2237 = vunpack.c.h.b16 %v1909
    %v2238 = vunpack.c.l.b16 %v1910
    %v2239 = vunpack.c.h.b16 %v1910
    %v2240 = vunpack.c.l.b16 %v1911
    %v2241 = vunpack.c.h.b16 %v1911
    %v2242 = vunpack.c.l.b16 %v1912
    %v2243 = vunpack.c.h.b16 %v1912
    %v2244 = vunpack.c.l.b16 %v1913
    %v2245 = vunpack.c.h.b16 %v1913
    %v2246 = vunpack.c.l.b16 %v1914
    %v2247 = vunpack.c.h.b16 %v1914
    %v2248 = vunpack.c.l.b16 %v1915
    %v2249 = vunpack.c.h.b16 %v1915
    %v2250 = vunpack.c.l.b16 %v1916
    %v2251 = vunpack.c.h.b16 %v1916
    %v2252 = vunpack.c.l.b16 %v1917
    %v2253 = vunpack.c.h.b16 %v1917
    %v2254 = vunpack.c.l.b16 %v1918
    %v2255 = vunpack.c.h.b16 %v1918
    %v2256 = vunpack.c.l.b16 %v1919
    %v2257 = vunpack.c.h.b16 %v1919
    %v2258 = vunpack.c.l.b16 %v1920
    %v2259 = vunpack.c.h.b16 %v1920
    %v2260 = vunpack.c.l.b16 %v1921
    %v2261 = vunpack.c.h.b16 %v1921
    %v2262 = vunpack.c.l.b16 %v1922
    %v2263 = vunpack.c.h.b16 %v1922
    %v2264 = vunpack.c.l.b16 %v1923
    %v2265 = vunpack.c.h.b16 %v1923
    %v2266 = vunpack.c.l.b16 %v1924
    %v2267 = vunpack.c.h.b16 %v1924
    %v2268 = vunpack.c.l.b16 %v1925
    %v2269 = vunpack.c.h.b16 %v1925
    %v2270 = vunpack.c.l.b16 %v1926
    %v2271 = vunpack.c.h.b16 %v1926
    %v2272 = vunpack.c.l.b16 %v1927
    %v2273 = vunpack.c.h.b16 %v1927
    %v2274 = vunpack.c.l.b16 %v1928
    %v2275 = vunpack.c.h.b16 %v1928
    %v2276 = vunpack.c.l.b16 %v1929
    %v2277 = vunpack.c.h.b16 %v1929
    %v2278 = vunpack.c.l.b16 %v1930
    %v2279 = vunpack.c.h.b16 %v1930
    %v2280 = vunpack.c.l.b16 %v1931
    %v2281 = vunpack.c.h.b16 %v1931
    %v2282 = vunpack.c.l.b16 %v1932
    %v2283 = vunpack.c.h.b16 %v1932
    %v2284 = vunpack.c.l.b16 %v1933
    %v2285 = vunpack.c.h.b16 %v1933
    %v2286 = vunpack.c.l.b16 %v1934
    %v2287 = vunpack.c.h.b16 %v1934
    %v2288 = vunpack.c.l.b16 %v1935
    %v2289 = vunpack.c.h.b16 %v1935
    %v2290 = vunpack.c.l.b16 %v1936
    %v2291 = vunpack.c.h.b16 %v1936
    %v2292 = vunpack.c.l.b16 %v1937
    %v2293 = vunpack.c.h.b16 %v1937
    %v2294 = vunpack.c.l.b16 %v1938
    %v2295 = vunpack.c.h.b16 %v1938
    %v2296 = vunpack.c.l.b16 %v1939
    %v2297 = vunpack.c.h.b16 %v1939
    %v2298 = vunpack.c.l.b16 %v1940
    %v2299 = vunpack.c.h.b16 %v1940
    %v2300 = vunpack.c.l.b16 %v1941
    %v2301 = vunpack.c.h.b16 %v1941
    %v2302 = vunpack.c.l.b16 %v1942
    %v2303 = vunpack.c.h.b16 %v1942
    %v2304 = vunpack.c.l.b16 %v1943
    %v2305 = vunpack.c.h.b16 %v1943
    %v2306 = vunpack.c.l.b16 %v1944
    %v2307 = vunpack.c.h.b16 %v1944
    %v2308 = vunpack.c.l.b16 %v1945
    %v2309 = vunpack.c.h.b16 %v1945
    %v2310 = vunpack.c.l.b16 %v1946
    %v2311 = vunpack.c.h.b16 %v1946
    %v2312 = vunpack.c.l.b16 %v1947
    %v2313 = vunpack.c.h.b16 %v1947
    %v2314 = vunpack.c.l.b16 %v1948
    %v2315 = vunpack.c.h.b16 %v1948
    %v2316 = vunpack.c.l.b16 %v1949
    %v2317 = vunpack.c.h.b16 %v1949
    %v2318 = vunpack.c.l.b16 %v1950
    %v2319 = vunpack.c.h.b16 %v1950
    %v2320 = vunpack.c.l.b16 %v1951
    %v2321 = vunpack.c.h.b16 %v1951
    %v2322 = vunpack.c.l.b16 %v1952
    %v2323 = vunpack.c.h.b16 %v1952
    %v2324 = vunpack.c.l.b16 %v1953
    %v2325 = vunpack.c.h.b16 %v1953
    %v2326 = vunpack.c.l.b16 %v1954
    %v2327 = vunpack.c.h.b16 %v1954
    %v2328 = vunpack.c.l.b16 %v1955
    %v2329 = vunpack.c.h.b16 %v1955
    %v2330 = vunpack.c.l.b16 %v1956
    %v2331 = vunpack.c.h.b16 %v1956
    %v2332 = vunpack.c.l.b16 %v1957
    %v2333 = vunpack.c.h.b16 %v1957
    %v2334 = vunpack.c.l.b16 %v1958
    %v2335 = vunpack.c.h.b16 %v1958
    %v2336 = vunpack.c.l.b16 %v1959
    %v2337 = vunpack.c.h.b16 %v1959
    %v2338 = vunpack.c.l.b16 %v1960
    %v2339 = vunpack.c.h.b16 %v1960
    %v2340 = vunpack.c.l.b16 %v1961
    %v2341 = vunpack.c.h.b16 %v1961
    %v2342 = vunpack.c.l.b16 %v1962
    %v2343 = vunpack.c.h.b16 %v1962
    %v2344 = vunpack.c.l.b16 %v1963
    %v2345 = vunpack.c.h.b16 %v1963
    %v2346 = vunpack.c.l.b16 %v1964
    %v2347 = vunpack.c.h.b16 %v1964
    %v2348 = vunpack.c.l.b16 %v1965
    %v2349 = vunpack.c.h.b16 %v1965
    %v2350 = vunpack.c.l.b16 %v1966
    %v2351 = vunpack.c.h.b16 %v1966
    %v2352 = vunpack.c.l.b16 %v1967
    %v2353 = vunpack.c.h.b16 %v1967
    %v2354 = vunpack.c.l.b16 %v1968
    %v2355 = vunpack.c.h.b16 %v1968
    %v2356 = vunpack.c.l.b16 %v1969
    %v2357 = vunpack.c.h.b16 %v1969
    %v2358 = vunpack.c.l.b16 %v1970
    %v2359 = vunpack.c.h.b16 %v1970
    %v2360 = vunpack.c.l.b16 %v1971
    %v2361 = vunpack.c.h.b16 %v1971
    %v2362 = vunpack.c.l.b16 %v1972
    %v2363 = vunpack.c.h.b16 %v1972
    %v2364 = vunpack.c.l.b16 %v1973
    %v2365 = vunpack.c.h.b16 %v1973
    %v2366 = vunpack.c.l.b16 %v1974
    %v2367 = vunpack.c.h.b16 %v1974
    %v2368 = vunpack.c.l.b16 %v1975
    %v2369 = vunpack.c.h.b16 %v1975
    %v2370 = vunpack.c.l.b16 %v1976
    %v2371 = vunpack.c.h.b16 %v1976
    %v2372 = vunpack.c.l.b16 %v1977
    %v2373 = vunpack.c.h.b16 %v1977
    %v2374 = vunpack.c.l.b16 %v1978
    %v2375 = vunpack.c.h.b16 %v1978
    %v2376 = vunpack.c.l.b16 %v1979
    %v2377 = vunpack.c.h.b16 %v1979
    %v2378 = vunpack.c.l.b16 %v1980
    %v2379 = vunpack.c.h.b16 %v1980
    %v2380 = vunpack.c.l.b16 %v1981
    %v2381 = vunpack.c.h.b16 %v1981
    %v2382 = vunpack.c.l.b16 %v1982
    %v2383 = vunpack.c.h.b16 %v1982
    %v2384 = vunpack.c.l.b16 %v1983
    %v2385 = vunpack.c.h.b16 %v1983
    %v2386 = vunpack.c.l.b16 %v1984
    %v2387 = vunpack.c.h.b16 %v1984
    %v2388 = vunpack.c.l.b16 %v1985
    %v2389 = vunpack.c.h.b16 %v1985
    %v2390 = vunpack.c.l.b16 %v1986
    %v2391 = vunpack.c.h.b16 %v1986
    %v2392 = vunpack.c.l.b16 %v1987
    %v2393 = vunpack.c.h.b16 %v1987
    %v2394 = vpack.c.b16 %v2142, %v2138
    %v2395 = vpack.c.b16 %v2143, %v2139
    %v2396 = vpack.c.b16 %v2144, %v2140
    %v2397 = vpack.c.b16 %v2145, %v2141
    %v2398 = vpack.c.b16 %v2150, %v2146
    %v2399 = vpack.c.b16 %v2151, %v2147
    %v2400 = vpack.c.b16 %v2152, %v2148
    %v2401 = vpack.c.b16 %v2153, %v2149
    %v2402 = vpack.c.b16 %v2158, %v2154
    %v2403 = vpack.c.b16 %v2159, %v2155
    %v2404 = vpack.c.b16 %v2160, %v2156
    %v2405 = vpack.c.b16 %v2161, %v2157
    %v2406 = vpack.c.b16 %v2166, %v2162
    %v2407 = vpack.c.b16 %v2167, %v2163
    %v2408 = vpack.c.b16 %v2168, %v2164
    %v2409 = vpack.c.b16 %v2169, %v2165
    %v2410 = vpack.c.b16 %v2174, %v2170
    %v2411 = vpack.c.b16 %v2175, %v2171
    %v2412 = vpack.c.b16 %v2176, %v2172
    %v2413 = vpack.c.b16 %v2177, %v2173
    %v2414 = vpack.c.b16 %v2182, %v2178
    %v2415 = vpack.c.b16 %v2183, %v2179
    %v2416 = vpack.c.b16 %v2184, %v2180
    %v2417 = vpack.c.b16 %v2185, %v2181
    %v2418 = vpack.c.b16 %v2190, %v2186
    %v2419 = vpack.c.b16 %v2191, %v2187
    %v2420 = vpack.c.b16 %v2192, %v2188
    %v2421 = vpack.c.b16 %v2193, %v2189
    %v2422 = vpack.c.b16 %v2198, %v2194
    %v2423 = vpack.c.b16 %v2199, %v2195
    %v2424 = vpack.c.b16 %v2200, %v2196
    %v2425 = vpack.c.b16 %v2201, %v2197
    %v2426 = vpack.c.b16 %v2206, %v2202
    %v2427 = vpack.c.b16 %v2207, %v2203
    %v2428 = vpack.c.b16 %v2208, %v2204
    %v2429 = vpack.c.b16 %v2209, %v2205
    %v2430 = vpack.c.b16 %v2214, %v2210
    %v2431 = vpack.c.b16 %v2215, %v2211
    %v2432 = vpack.c.b16 %v2216, %v2212
    %v2433 = vpack.c.b16 %v2217, %v2213
    %v2434 = vpack.c.b16 %v2222, %v2218
    %v2435 = vpack.c.b16 %v2223, %v2219
    %v2436 = vpack.c.b16 %v2224, %v2220
    %v2437 = vpack.c.b16 %v2225, %v2221
    %v2438 = vpack.c.b16 %v2230, %v2226
    %v2439 = vpack.c.b16 %v2231, %v2227
    %v2440 = vpack.c.b16 %v2232, %v2228
    %v2441 = vpack.c.b16 %v2233, %v2229
    %v2442 = vpack.c.b16 %v2238, %v2234
    %v2443 = vpack.c.b16 %v2239, %v2235
    %v2444 = vpack.c.b16 %v2240, %v2236
    %v2445 = vpack.c.b16 %v2241, %v2237
    %v2446 = vpack.c.b16 %v2246, %v2242
    %v2447 = vpack.c.b16 %v2247, %v2243
    %v2448 = vpack.c.b16 %v2248, %v2244
    %v2449 = vpack.c.b16 %v2249, %v2245
    %v2450 = vpack.c.b16 %v2254, %v2250
    %v2451 = vpack.c.b16 %v2255, %v2251
    %v2452 = vpack.c.b16 %v2256, %v2252
    %v2453 = vpack.c.b16 %v2257, %v2253
    %v2454 = vpack.c.b16 %v2262, %v2258
    %v2455 = vpack.c.b16 %v2263, %v2259
    %v2456 = vpack.c.b16 %v2264, %v2260
    %v2457 = vpack.c.b16 %v2265, %v2261
    %v2458 = vpack.c.b16 %v2270, %v2266
    %v2459 = vpack.c.b16 %v2271, %v2267
    %v2460 = vpack.c.b16 %v2272, %v2268
    %v2461 = vpack.c.b16 %v2273, %v2269
    %v2462 = vpack.c.b16 %v2278, %v2274
    %v2463 = vpack.c.b16 %v2279, %v2275
    %v2464 = vpack.c.b16 %v2280, %v2276
    %v2465 = vpack.c.b16 %v2281, %v2277
    %v2466 = vpack.c.b16 %v2286, %v2282
    %v2467 = vpack.c.b16 %v2287, %v2283
    %v2468 = vpack.c.b16 %v2288, %v2284
    %v2469 = vpack.c.b16 %v2289, %v2285
    %v2470 = vpack.c.b16 %v2294, %v2290
    %v2471 = vpack.c.b16 %v2295, %v2291
    %v2472 = vpack.c.b16 %v2296, %v2292
    %v2473 = vpack.c.b16 %v2297, %v2293
    %v2474 = vpack.c.b16 %v2302, %v2298
    %v2475 = vpack.c.b16 %v2303, %v2299
    %v2476 = vpack.c.b16 %v2304, %v2300
    %v2477 = vpack.c.b16 %v2305, %v2301
    %v2478 = vpack.c.b16 %v2310, %v2306
    %v2479 = vpack.c.b16 %v2311, %v2307
    %v2480 = vpack.c.b16 %v2312, %v2308
    %v2481 = vpack.c.b16 %v2313, %v2309
    %v2482 = vpack.c.b16 %v2318, %v2314
    %v2483 = vpack.c.b16 %v2319, %v2315
    %v2484 = vpack.c.b16 %v2320, %v2316
    %v2485 = vpack.c.b16 %v2321, %v2317
    %v2486 = vpack.c.b16 %v2326, %v2322
    %v2487 = vpack.c.b16 %v2327, %v2323
    %v2488 = vpack.c.b16 %v2328, %v2324
    %v2489 = vpack.c.b16 %v2329, %v2325
    %v2490 = vpack.c.b16 %v2334, %v2330
    %v2491 = vpack.c.b16 %v2335, %v2331
    %v2492 = vpack.c.b16 %v2336, %v2332
    %v2493 = vpack.c.b16 %v2337, %v2333
    %v2494 = vpack.c.b16 %v2342, %v2338
    %v2495 = vpack.c.b16 %v2343, %v2339
    %v2496 = vpack.c.b16 %v2344, %v2340
    %v2497 = vpack.c.b16 %v2345, %v2341
    %v2498 = vpack.c.b16 %v2350, %v2346
    %v2499 = vpack.c.b16 %v2351, %v2347
    %v2500 = vpack.c.b16 %v2352, %v2348
    %v2501 = vpack.c.b16 %v2353, %v2349
    %v2502 = vpack.c.b16 %v2358, %v2354
    %v2503 = vpack.c.b16 %v2359, %v2355
    %v2504 = vpack.c.b16 %v2360, %v2356
    %v2505 = vpack.c.b16 %v2361, %v2357
    %v2506 = vpack.c.b16 %v2366, %v2362
    %v2507 = vpack.c.b16 %v2367, %v2363
    %v2508 = vpack.c.b16 %v2368, %v2364
    %v2509 = vpack.c.b16 %v2369, %v2365
    %v2510 = vpack.c.b16 %v2374, %v2370
    %v2511 = vpack.c.b16 %v2375, %v2371
    %v2512 = vpack.c.b16 %v2376, %v2372
    %v2513 = vpack.c.b16 %v2377, %v2373
    %v2514 = vpack.c.b16 %v2382, %v2378
    %v2515 = vpack.c.b16 %v2383, %v2379
    %v2516 = vpack.c.b16 %v2384, %v2380
    %v2517 = vpack.c.b16 %v2385, %v2381
    %v2518 = vpack.c.b16 %v2390, %v2386
    %v2519 = vpack.c.b16 %v2391, %v2387
    %v2520 = vpack.c.b16 %v2392, %v2388
    %v2521 = vpack.c.b16 %v2393, %v2389
    %2650 = vmatprep.subr.bf16.mxu0 %v2423
    %2651 = vmatpush1.bf16.msra.mxu0 %v2422
    %2652 = vmatprep.subr.bf16.mxu0 %v2419
    %2653 = vmatpush1.bf16.msra.mxu0 %v2418
    %2654 = vmatprep.subr.bf16.mxu0 %v2415
    %2655 = vmatpush1.bf16.msra.mxu0 %v2414
    %2656 = vmatprep.subr.bf16.mxu0 %v2411
    %2657 = vmatpush1.bf16.msra.mxu0 %v2410
    %2658 = vmatprep.subr.bf16.mxu0 %v2407
    %2659 = vmatpush1.bf16.msra.mxu0 %v2406
    %2660 = vmatprep.subr.bf16.mxu0 %v2403
    %2661 = vmatpush1.bf16.msra.mxu0 %v2402
    %2662 = vmatprep.subr.bf16.mxu0 %v2399
    %2663 = vmatpush1.bf16.msra.mxu0 %v2398
    %2664 = vmatprep.subr.bf16.mxu0 %v2395
    %2665 = vmatpush1.bf16.msra.mxu0 %v2394
    %2666 = vmatprep.subr.bf16.mxu0 %v2455
    %2667 = vmatpush2.bf16.msra.mxu0 %v2454
    %2668 = vmatprep.subr.bf16.mxu0 %v2451
    %2669 = vmatpush2.bf16.msra.mxu0 %v2450
    %2670 = vmatprep.subr.bf16.mxu0 %v2447
    %2671 = vmatpush2.bf16.msra.mxu0 %v2446
    %2672 = vmatprep.subr.bf16.mxu0 %v2443
    %2673 = vmatpush2.bf16.msra.mxu0 %v2442
    %2674 = vmatprep.subr.bf16.mxu0 %v2439
    %2675 = vmatpush2.bf16.msra.mxu0 %v2438
    %2676 = vmatprep.subr.bf16.mxu0 %v2435
    %2677 = vmatpush2.bf16.msra.mxu0 %v2434
    %2678 = vmatprep.subr.bf16.mxu0 %v2431
    %2679 = vmatpush2.bf16.msra.mxu0 %v2430
    %2680 = vmatprep.subr.bf16.mxu0 %v2427
    %2681 = vmatpush2.bf16.msra.mxu0 %v2426
    %2682 = vmatprep.mubr.bf16.mxu0 %v1857
    %2683 = vmatmul.mubr.bf16.gmra.mxu0 %v1856
    %v2684 = vpop.f32.mrf.mxu0
    %v2685 = vadd.f32 %v1993, %v2684
    %v2686 = vpop.f32.mrf.mxu0
    %v2687 = vadd.f32 %v1997, %v2686
    %v2688 = vpop.f32.mrf.mxu0
    %v2689 = vadd.f32 %v1993, %v2688
    %v2690 = vpop.f32.mrf.mxu0
    %v2691 = vadd.f32 %v1997, %v2690
    %2692 = vdwg.mxu0
    %2693 = vmatprep.subr.bf16.mxu0 %v2487
    %2694 = vmatpush1.bf16.msra.mxu0 %v2486
    %2695 = vmatprep.subr.bf16.mxu0 %v2483
    %2696 = vmatpush1.bf16.msra.mxu0 %v2482
    %2697 = vmatprep.subr.bf16.mxu0 %v2479
    %2698 = vmatpush1.bf16.msra.mxu0 %v2478
    %2699 = vmatprep.subr.bf16.mxu0 %v2475
    %2700 = vmatpush1.bf16.msra.mxu0 %v2474
    %2701 = vmatprep.subr.bf16.mxu0 %v2471
    %2702 = vmatpush1.bf16.msra.mxu0 %v2470
    %2703 = vmatprep.subr.bf16.mxu0 %v2467
    %2704 = vmatpush1.bf16.msra.mxu0 %v2466
    %2705 = vmatprep.subr.bf16.mxu0 %v2463
    %2706 = vmatpush1.bf16.msra.mxu0 %v2462
    %2707 = vmatprep.subr.bf16.mxu0 %v2459
    %2708 = vmatpush1.bf16.msra.mxu0 %v2458
    %2709 = vmatprep.subr.bf16.mxu0 %v2519
    %2710 = vmatpush2.bf16.msra.mxu0 %v2518
    %2711 = vmatprep.subr.bf16.mxu0 %v2515
    %2712 = vmatpush2.bf16.msra.mxu0 %v2514
    %2713 = vmatprep.subr.bf16.mxu0 %v2511
    %2714 = vmatpush2.bf16.msra.mxu0 %v2510
    %2715 = vmatprep.subr.bf16.mxu0 %v2507
    %2716 = vmatpush2.bf16.msra.mxu0 %v2506
    %2717 = vmatprep.subr.bf16.mxu0 %v2503
    %2718 = vmatpush2.bf16.msra.mxu0 %v2502
    %2719 = vmatprep.subr.bf16.mxu0 %v2499
    %2720 = vmatpush2.bf16.msra.mxu0 %v2498
    %2721 = vmatprep.subr.bf16.mxu0 %v2495
    %2722 = vmatpush2.bf16.msra.mxu0 %v2494
    %2723 = vmatprep.subr.bf16.mxu0 %v2491
    %2724 = vmatpush2.bf16.msra.mxu0 %v2490
    %2725 = vmatprep.mubr.bf16.mxu0 %v1859
    %2726 = vmatmul.mubr.bf16.gmra.mxu0 %v1858
    %v2727 = vpop.f32.mrf.mxu0
    %v2728 = vadd.f32 %v2685, %v2727
    %v2729 = vpop.f32.mrf.mxu0
    %v2730 = vadd.f32 %v2687, %v2729
    %v2731 = vpop.f32.mrf.mxu0
    %v2732 = vadd.f32 %v2689, %v2731
    %v2733 = vpop.f32.mrf.mxu0
    %v2734 = vadd.f32 %v2691, %v2733
    %2735 = vdwg.mxu0
    %2736 = vmatprep.subr.bf16.mxu0 %v2425
    %2737 = vmatpush1.bf16.msra.mxu0 %v2424
    %2738 = vmatprep.subr.bf16.mxu0 %v2421
    %2739 = vmatpush1.bf16.msra.mxu0 %v2420
    %2740 = vmatprep.subr.bf16.mxu0 %v2417
    %2741 = vmatpush1.bf16.msra.mxu0 %v2416
    %2742 = vmatprep.subr.bf16.mxu0 %v2413
    %2743 = vmatpush1.bf16.msra.mxu0 %v2412
    %2744 = vmatprep.subr.bf16.mxu0 %v2409
    %2745 = vmatpush1.bf16.msra.mxu0 %v2408
    %2746 = vmatprep.subr.bf16.mxu0 %v2405
    %2747 = vmatpush1.bf16.msra.mxu0 %v2404
    %2748 = vmatprep.subr.bf16.mxu0 %v2401
    %2749 = vmatpush1.bf16.msra.mxu0 %v2400
    %2750 = vmatprep.subr.bf16.mxu0 %v2397
    %2751 = vmatpush1.bf16.msra.mxu0 %v2396
    %2752 = vmatprep.subr.bf16.mxu0 %v2457
    %2753 = vmatpush2.bf16.msra.mxu0 %v2456
    %2754 = vmatprep.subr.bf16.mxu0 %v2453
    %2755 = vmatpush2.bf16.msra.mxu0 %v2452
    %2756 = vmatprep.subr.bf16.mxu0 %v2449
    %2757 = vmatpush2.bf16.msra.mxu0 %v2448
    %2758 = vmatprep.subr.bf16.mxu0 %v2445
    %2759 = vmatpush2.bf16.msra.mxu0 %v2444
    %2760 = vmatprep.subr.bf16.mxu0 %v2441
    %2761 = vmatpush2.bf16.msra.mxu0 %v2440
    %2762 = vmatprep.subr.bf16.mxu0 %v2437
    %2763 = vmatpush2.bf16.msra.mxu0 %v2436
    %2764 = vmatprep.subr.bf16.mxu0 %v2433
    %2765 = vmatpush2.bf16.msra.mxu0 %v2432
    %2766 = vmatprep.subr.bf16.mxu0 %v2429
    %2767 = vmatpush2.bf16.msra.mxu0 %v2428
    %2768 = vmatprep.mubr.bf16.mxu0 %v1857
    %2769 = vmatmul.mubr.bf16.gmra.mxu0 %v1856
    %v2770 = vpop.f32.mrf.mxu0
    %v2771 = vadd.f32 %v2001, %v2770
    %v2772 = vpop.f32.mrf.mxu0
    %v2773 = vadd.f32 %v2005, %v2772
    %v2774 = vpop.f32.mrf.mxu0
    %v2775 = vadd.f32 %v2001, %v2774
    %v2776 = vpop.f32.mrf.mxu0
    %v2777 = vadd.f32 %v2005, %v2776
    %2778 = vdwg.mxu0
    %2779 = vmatprep.subr.bf16.mxu0 %v2489
    %2780 = vmatpush1.bf16.msra.mxu0 %v2488
    %2781 = vmatprep.subr.bf16.mxu0 %v2485
    %2782 = vmatpush1.bf16.msra.mxu0 %v2484
    %2783 = vmatprep.subr.bf16.mxu0 %v2481
    %2784 = vmatpush1.bf16.msra.mxu0 %v2480
    %2785 = vmatprep.subr.bf16.mxu0 %v2477
    %2786 = vmatpush1.bf16.msra.mxu0 %v2476
    %2787 = vmatprep.subr.bf16.mxu0 %v2473
    %2788 = vmatpush1.bf16.msra.mxu0 %v2472
    %2789 = vmatprep.subr.bf16.mxu0 %v2469
    %2790 = vmatpush1.bf16.msra.mxu0 %v2468
    %2791 = vmatprep.subr.bf16.mxu0 %v2465
    %2792 = vmatpush1.bf16.msra.mxu0 %v2464
    %2793 = vmatprep.subr.bf16.mxu0 %v2461
    %2794 = vmatpush1.bf16.msra.mxu0 %v2460
    %2795 = vmatprep.subr.bf16.mxu0 %v2521
    %2796 = vmatpush2.bf16.msra.mxu0 %v2520
    %2797 = vmatprep.subr.bf16.mxu0 %v2517
    %2798 = vmatpush2.bf16.msra.mxu0 %v2516
    %2799 = vmatprep.subr.bf16.mxu0 %v2513
    %2800 = vmatpush2.bf16.msra.mxu0 %v2512
    %2801 = vmatprep.subr.bf16.mxu0 %v2509
    %2802 = vmatpush2.bf16.msra.mxu0 %v2508
    %2803 = vmatprep.subr.bf16.mxu0 %v2505
    %2804 = vmatpush2.bf16.msra.mxu0 %v2504
    %2805 = vmatprep.subr.bf16.mxu0 %v2501
    %2806 = vmatpush2.bf16.msra.mxu0 %v2500
    %2807 = vmatprep.subr.bf16.mxu0 %v2497
    %2808 = vmatpush2.bf16.msra.mxu0 %v2496
    %2809 = vmatprep.subr.bf16.mxu0 %v2493
    %2810 = vmatpush2.bf16.msra.mxu0 %v2492
    %2811 = vmatprep.mubr.bf16.mxu0 %v1859
    %2812 = vmatmul.mubr.bf16.gmra.mxu0 %v1858
    %v2813 = vpop.f32.mrf.mxu0
    %v2814 = vadd.f32 %v2771, %v2813
    %v2815 = vpop.f32.mrf.mxu0
    %v2816 = vadd.f32 %v2773, %v2815
    %v2817 = vpop.f32.mrf.mxu0
    %v2818 = vadd.f32 %v2775, %v2817
    %v2819 = vpop.f32.mrf.mxu0
    %v2820 = vadd.f32 %v2777, %v2819
    %2821 = vdwg.mxu0
    %v2822 = vmax.f32 %v2728, 0.0
    %v2823 = vmax.f32 %v2730, 0.0
    %v2824 = vmax.f32 %v2814, 0.0
    %v2825 = vmax.f32 %v2816, 0.0
    %v2826 = vmax.f32 %v2732, 0.0
    %v2827 = vmax.f32 %v2734, 0.0
    %v2828 = vmax.f32 %v2818, 0.0
    %v2829 = vmax.f32 %v2820, 0.0
    %v2830 = vpack.c.bf16 %v2826, %v2822
    %v2831 = vpack.c.bf16 %v2827, %v2823
    %v2832 = vpack.c.bf16 %v2828, %v2824
    %v2833 = vpack.c.bf16 %v2829, %v2825
    %v2834 = vld [vmem:[#allocation10] sm:$0xf]
    %v2835 = vld [vmem:[#allocation10 + $0x4] sm:$0xf]
    %v2836 = vld [vmem:[#allocation10 + $0x8] sm:$0xf]
    %v2837 = vld [vmem:[#allocation10 + $0xc] sm:$0xf]
    %v2838 = vld [vmem:[#allocation10 + $0x10] sm:$0xf]
    %v2839 = vld [vmem:[#allocation10 + $0x14] sm:$0xf]
    %v2840 = vld [vmem:[#allocation10 + $0x18] sm:$0xf]
    %v2841 = vld [vmem:[#allocation10 + $0x1c] sm:$0xf]
    %v2842 = vld [vmem:[#allocation10 + $0x20] sm:$0xf]
    %v2843 = vld [vmem:[#allocation10 + $0x24] sm:$0xf]
    %v2844 = vld [vmem:[#allocation10 + $0x28] sm:$0xf]
    %v2845 = vld [vmem:[#allocation10 + $0x2c] sm:$0xf]
    %v2846 = vld [vmem:[#allocation10 + $0x30] sm:$0xf]
    %v2847 = vld [vmem:[#allocation10 + $0x34] sm:$0xf]
    %v2848 = vld [vmem:[#allocation10 + $0x38] sm:$0xf]
    %v2849 = vld [vmem:[#allocation10 + $0x3c] sm:$0xf]
    %v2850 = vld [vmem:[#allocation10 + $0x40] sm:$0xf]
    %v2851 = vld [vmem:[#allocation10 + $0x44] sm:$0xf]
    %v2852 = vld [vmem:[#allocation10 + $0x48] sm:$0xf]
    %v2853 = vld [vmem:[#allocation10 + $0x4c] sm:$0xf]
    %v2854 = vld [vmem:[#allocation10 + $0x50] sm:$0xf]
    %v2855 = vld [vmem:[#allocation10 + $0x54] sm:$0xf]
    %v2856 = vld [vmem:[#allocation10 + $0x58] sm:$0xf]
    %v2857 = vld [vmem:[#allocation10 + $0x5c] sm:$0xf]
    %v2858 = vld [vmem:[#allocation10 + $0x60] sm:$0xf]
    %v2859 = vld [vmem:[#allocation10 + $0x64] sm:$0xf]
    %v2860 = vld [vmem:[#allocation10 + $0x68] sm:$0xf]
    %v2861 = vld [vmem:[#allocation10 + $0x6c] sm:$0xf]
    %v2862 = vld [vmem:[#allocation10 + $0x70] sm:$0xf]
    %v2863 = vld [vmem:[#allocation10 + $0x74] sm:$0xf]
    %v2864 = vld [vmem:[#allocation10 + $0x78] sm:$0xf]
    %v2865 = vld [vmem:[#allocation10 + $0x7c] sm:$0xf]
    %v2866 = vld [vmem:[#allocation10 + $0x80] sm:$0xf]
    %v2867 = vld [vmem:[#allocation10 + $0x84] sm:$0xf]
    %v2868 = vld [vmem:[#allocation10 + $0x88] sm:$0xf]
    %v2869 = vld [vmem:[#allocation10 + $0x8c] sm:$0xf]
    %v2870 = vld [vmem:[#allocation10 + $0x90] sm:$0xf]
    %v2871 = vld [vmem:[#allocation10 + $0x94] sm:$0xf]
    %v2872 = vld [vmem:[#allocation10 + $0x98] sm:$0xf]
    %v2873 = vld [vmem:[#allocation10 + $0x9c] sm:$0xf]
    %v2874 = vld [vmem:[#allocation10 + $0xa0] sm:$0xf]
    %v2875 = vld [vmem:[#allocation10 + $0xa4] sm:$0xf]
    %v2876 = vld [vmem:[#allocation10 + $0xa8] sm:$0xf]
    %v2877 = vld [vmem:[#allocation10 + $0xac] sm:$0xf]
    %v2878 = vld [vmem:[#allocation10 + $0xb0] sm:$0xf]
    %v2879 = vld [vmem:[#allocation10 + $0xb4] sm:$0xf]
    %v2880 = vld [vmem:[#allocation10 + $0xb8] sm:$0xf]
    %v2881 = vld [vmem:[#allocation10 + $0xbc] sm:$0xf]
    %v2882 = vld [vmem:[#allocation10 + $0xc0] sm:$0xf]
    %v2883 = vld [vmem:[#allocation10 + $0xc4] sm:$0xf]
    %v2884 = vld [vmem:[#allocation10 + $0xc8] sm:$0xf]
    %v2885 = vld [vmem:[#allocation10 + $0xcc] sm:$0xf]
    %v2886 = vld [vmem:[#allocation10 + $0xd0] sm:$0xf]
    %v2887 = vld [vmem:[#allocation10 + $0xd4] sm:$0xf]
    %v2888 = vld [vmem:[#allocation10 + $0xd8] sm:$0xf]
    %v2889 = vld [vmem:[#allocation10 + $0xdc] sm:$0xf]
    %v2890 = vld [vmem:[#allocation10 + $0xe0] sm:$0xf]
    %v2891 = vld [vmem:[#allocation10 + $0xe4] sm:$0xf]
    %v2892 = vld [vmem:[#allocation10 + $0xe8] sm:$0xf]
    %v2893 = vld [vmem:[#allocation10 + $0xec] sm:$0xf]
    %v2894 = vld [vmem:[#allocation10 + $0xf0] sm:$0xf]
    %v2895 = vld [vmem:[#allocation10 + $0xf4] sm:$0xf]
    %v2896 = vld [vmem:[#allocation10 + $0xf8] sm:$0xf]
    %v2897 = vld [vmem:[#allocation10 + $0xfc] sm:$0xf]
    %v2898 = vld [vmem:[%s6] sm:$0x1]
    %v2900 = vlaneseq
    %v2901 = vshrl.u32 %v2900, 7
    %v2902 = vsub.s32 0, %v2901
    %v2903 = vrot.slane %v2898, %v2902
    %v2969 = vunpack.c.l.b16 %v2834
    %v2970 = vunpack.c.l.b16 %v2835
    %v2971 = vunpack.c.l.b16 %v2836
    %v2972 = vunpack.c.l.b16 %v2837
    %v2973 = vunpack.c.l.b16 %v2838
    %v2974 = vunpack.c.l.b16 %v2839
    %v2975 = vunpack.c.l.b16 %v2840
    %v2976 = vunpack.c.l.b16 %v2841
    %v2977 = vunpack.c.l.b16 %v2842
    %v2978 = vunpack.c.l.b16 %v2843
    %v2979 = vunpack.c.l.b16 %v2844
    %v2980 = vunpack.c.l.b16 %v2845
    %v2981 = vunpack.c.l.b16 %v2846
    %v2982 = vunpack.c.l.b16 %v2847
    %v2983 = vunpack.c.l.b16 %v2848
    %v2984 = vunpack.c.l.b16 %v2849
    %v2985 = vunpack.c.l.b16 %v2850
    %v2986 = vunpack.c.l.b16 %v2851
    %v2987 = vunpack.c.l.b16 %v2852
    %v2988 = vunpack.c.l.b16 %v2853
    %v2989 = vunpack.c.l.b16 %v2854
    %v2990 = vunpack.c.l.b16 %v2855
    %v2991 = vunpack.c.l.b16 %v2856
    %v2992 = vunpack.c.l.b16 %v2857
    %v2993 = vunpack.c.l.b16 %v2858
    %v2994 = vunpack.c.l.b16 %v2859
    %v2995 = vunpack.c.l.b16 %v2860
    %v2996 = vunpack.c.l.b16 %v2861
    %v2997 = vunpack.c.l.b16 %v2862
    %v2998 = vunpack.c.l.b16 %v2863
    %v2999 = vunpack.c.l.b16 %v2864
    %v3000 = vunpack.c.l.b16 %v2865
    %v3001 = vunpack.c.l.b16 %v2866
    %v3002 = vunpack.c.l.b16 %v2867
    %v3003 = vunpack.c.l.b16 %v2868
    %v3004 = vunpack.c.l.b16 %v2869
    %v3005 = vunpack.c.l.b16 %v2870
    %v3006 = vunpack.c.l.b16 %v2871
    %v3007 = vunpack.c.l.b16 %v2872
    %v3008 = vunpack.c.l.b16 %v2873
    %v3009 = vunpack.c.l.b16 %v2874
    %v3010 = vunpack.c.l.b16 %v2875
    %v3011 = vunpack.c.l.b16 %v2876
    %v3012 = vunpack.c.l.b16 %v2877
    %v3013 = vunpack.c.l.b16 %v2878
    %v3014 = vunpack.c.l.b16 %v2879
    %v3015 = vunpack.c.l.b16 %v2880
    %v3016 = vunpack.c.l.b16 %v2881
    %v3017 = vunpack.c.l.b16 %v2882
    %v3018 = vunpack.c.l.b16 %v2883
    %v3019 = vunpack.c.l.b16 %v2884
    %v3020 = vunpack.c.l.b16 %v2885
    %v3021 = vunpack.c.l.b16 %v2886
    %v3022 = vunpack.c.l.b16 %v2887
    %v3023 = vunpack.c.l.b16 %v2888
    %v3024 = vunpack.c.l.b16 %v2889
    %v3025 = vunpack.c.l.b16 %v2890
    %v3026 = vunpack.c.l.b16 %v2891
    %v3027 = vunpack.c.l.b16 %v2892
    %v3028 = vunpack.c.l.b16 %v2893
    %v3029 = vunpack.c.l.b16 %v2894
    %v3030 = vunpack.c.l.b16 %v2895
    %v3031 = vunpack.c.l.b16 %v2896
    %v3032 = vunpack.c.l.b16 %v2897
    %v3033 = vpack.c.b16 %v2970, %v2969
    %v3034 = vpack.c.b16 %v2972, %v2971
    %v3035 = vpack.c.b16 %v2974, %v2973
    %v3036 = vpack.c.b16 %v2976, %v2975
    %v3037 = vpack.c.b16 %v2978, %v2977
    %v3038 = vpack.c.b16 %v2980, %v2979
    %v3039 = vpack.c.b16 %v2982, %v2981
    %v3040 = vpack.c.b16 %v2984, %v2983
    %v3041 = vpack.c.b16 %v2986, %v2985
    %v3042 = vpack.c.b16 %v2988, %v2987
    %v3043 = vpack.c.b16 %v2990, %v2989
    %v3044 = vpack.c.b16 %v2992, %v2991
    %v3045 = vpack.c.b16 %v2994, %v2993
    %v3046 = vpack.c.b16 %v2996, %v2995
    %v3047 = vpack.c.b16 %v2998, %v2997
    %v3048 = vpack.c.b16 %v3000, %v2999
    %v3049 = vpack.c.b16 %v3002, %v3001
    %v3050 = vpack.c.b16 %v3004, %v3003
    %v3051 = vpack.c.b16 %v3006, %v3005
    %v3052 = vpack.c.b16 %v3008, %v3007
    %v3053 = vpack.c.b16 %v3010, %v3009
    %v3054 = vpack.c.b16 %v3012, %v3011
    %v3055 = vpack.c.b16 %v3014, %v3013
    %v3056 = vpack.c.b16 %v3016, %v3015
    %v3057 = vpack.c.b16 %v3018, %v3017
    %v3058 = vpack.c.b16 %v3020, %v3019
    %v3059 = vpack.c.b16 %v3022, %v3021
    %v3060 = vpack.c.b16 %v3024, %v3023
    %v3061 = vpack.c.b16 %v3026, %v3025
    %v3062 = vpack.c.b16 %v3028, %v3027
    %v3063 = vpack.c.b16 %v3030, %v3029
    %v3064 = vpack.c.b16 %v3032, %v3031
    %3097 = vmatprep.subr.bf16.mxu0 0
    %3098 = vmatpush1.bf16.msra.mxu0 %v3040
    %3099 = vmatprep.subr.bf16.mxu0 0
    %3100 = vmatpush1.bf16.msra.mxu0 %v3039
    %3101 = vmatprep.subr.bf16.mxu0 0
    %3102 = vmatpush1.bf16.msra.mxu0 %v3038
    %3103 = vmatprep.subr.bf16.mxu0 0
    %3104 = vmatpush1.bf16.msra.mxu0 %v3037
    %3105 = vmatprep.subr.bf16.mxu0 0
    %3106 = vmatpush1.bf16.msra.mxu0 %v3036
    %3107 = vmatprep.subr.bf16.mxu0 0
    %3108 = vmatpush1.bf16.msra.mxu0 %v3035
    %3109 = vmatprep.subr.bf16.mxu0 0
    %3110 = vmatpush1.bf16.msra.mxu0 %v3034
    %3111 = vmatprep.subr.bf16.mxu0 0
    %3112 = vmatpush1.bf16.msra.mxu0 %v3033
    %3113 = vmatprep.subr.bf16.mxu0 0
    %3114 = vmatpush2.bf16.msra.mxu0 %v3048
    %3115 = vmatprep.subr.bf16.mxu0 0
    %3116 = vmatpush2.bf16.msra.mxu0 %v3047
    %3117 = vmatprep.subr.bf16.mxu0 0
    %3118 = vmatpush2.bf16.msra.mxu0 %v3046
    %3119 = vmatprep.subr.bf16.mxu0 0
    %3120 = vmatpush2.bf16.msra.mxu0 %v3045
    %3121 = vmatprep.subr.bf16.mxu0 0
    %3122 = vmatpush2.bf16.msra.mxu0 %v3044
    %3123 = vmatprep.subr.bf16.mxu0 0
    %3124 = vmatpush2.bf16.msra.mxu0 %v3043
    %3125 = vmatprep.subr.bf16.mxu0 0
    %3126 = vmatpush2.bf16.msra.mxu0 %v3042
    %3127 = vmatprep.subr.bf16.mxu0 0
    %3128 = vmatpush2.bf16.msra.mxu0 %v3041
    %3129 = vmatprep.mubr.bf16.mxu0 %v2831
    %3130 = vmatmul.mubr.bf16.gmra.mxu0 %v2830
    %v3131 = vpop.f32.mrf.mxu0
    %v3132 = vadd.f32 %v2903, %v3131
    %v3133 = vpop.f32.mrf.mxu0
    %v3134 = vpop.f32.mrf.mxu0
    %v3135 = vadd.f32 %v2903, %v3134
    %v3136 = vpop.f32.mrf.mxu0
    %3137 = vdwg.mxu0
    %3138 = vmatprep.subr.bf16.mxu0 0
    %3139 = vmatpush1.bf16.msra.mxu0 %v3056
    %3140 = vmatprep.subr.bf16.mxu0 0
    %3141 = vmatpush1.bf16.msra.mxu0 %v3055
    %3142 = vmatprep.subr.bf16.mxu0 0
    %3143 = vmatpush1.bf16.msra.mxu0 %v3054
    %3144 = vmatprep.subr.bf16.mxu0 0
    %3145 = vmatpush1.bf16.msra.mxu0 %v3053
    %3146 = vmatprep.subr.bf16.mxu0 0
    %3147 = vmatpush1.bf16.msra.mxu0 %v3052
    %3148 = vmatprep.subr.bf16.mxu0 0
    %3149 = vmatpush1.bf16.msra.mxu0 %v3051
    %3150 = vmatprep.subr.bf16.mxu0 0
    %3151 = vmatpush1.bf16.msra.mxu0 %v3050
    %3152 = vmatprep.subr.bf16.mxu0 0
    %3153 = vmatpush1.bf16.msra.mxu0 %v3049
    %3154 = vmatprep.subr.bf16.mxu0 0
    %3155 = vmatpush2.bf16.msra.mxu0 %v3064
    %3156 = vmatprep.subr.bf16.mxu0 0
    %3157 = vmatpush2.bf16.msra.mxu0 %v3063
    %3158 = vmatprep.subr.bf16.mxu0 0
    %3159 = vmatpush2.bf16.msra.mxu0 %v3062
    %3160 = vmatprep.subr.bf16.mxu0 0
    %3161 = vmatpush2.bf16.msra.mxu0 %v3061
    %3162 = vmatprep.subr.bf16.mxu0 0
    %3163 = vmatpush2.bf16.msra.mxu0 %v3060
    %3164 = vmatprep.subr.bf16.mxu0 0
    %3165 = vmatpush2.bf16.msra.mxu0 %v3059
    %3166 = vmatprep.subr.bf16.mxu0 0
    %3167 = vmatpush2.bf16.msra.mxu0 %v3058
    %3168 = vmatprep.subr.bf16.mxu0 0
    %3169 = vmatpush2.bf16.msra.mxu0 %v3057
    %3170 = vmatprep.mubr.bf16.mxu0 %v2833
    %3171 = vmatmul.mubr.bf16.gmra.mxu0 %v2832
    %v3172 = vpop.f32.mrf.mxu0
    %v3173 = vadd.f32 %v3132, %v3172
    %v3174 = vpop.f32.mrf.mxu0
    %v3175 = vpop.f32.mrf.mxu0
    %v3176 = vadd.f32 %v3135, %v3175
    %v3177 = vpop.f32.mrf.mxu0
    %3178 = vdwg.mxu0
    %v3179 = vmax.f32 %v3173, 0.0
    %v3180 = vmax.f32 %v3176, 0.0
    %v3181 = vlaneseq
    %v3182 = vand.u32 %v3181, 127
    %vm3183 = vcmp.lt.s32.totalorder %v3182, 10
    %v3184 = vsel %vm3183, %v3179, -1e+30
    %v3185 = vsel %vm3183, %v3180, -1e+30
    %3186 = vmax.xlane.f32.xlu0 %v3184
    %v3187 = vpop.xlane.xlu0 %3186
    %3188 = vmax.xlane.f32.xlu0 %v3185
    %v3189 = vpop.xlane.xlu0 %3188
    %v3190 = vsub.f32 %v3184, %v3187
    %v3191 = vsub.f32 %v3185, %v3189
    %v3192 = vmul.f32 %v3190, 1.442695
    %v3193 = vpow.pop %v3192
    %v3194 = vmul.f32 %v3191, 1.442695
    %v3195 = vpow.pop %v3194
    %3196 = vadd.xlane.f32.xlu0 %v3193
    %v3197 = vpop.xlane.xlu0 %3196
    %3198 = vadd.xlane.f32.xlu0 %v3195
    %v3199 = vpop.xlane.xlu0 %3198
    %v3200 = vlog2.pop %v3197
    %v3201 = vmul.f32 %v3200, 0.6931472
    %v3202 = vlog2.pop %v3199
    %v3203 = vmul.f32 %v3202, 0.6931472
    %v3204 = vsub.f32 %v3190, %v3201
    %v3205 = vsub.f32 %v3191, %v3203
    %3206 = vst [vmem:[#allocation11] sm:$0xff] %v3204
    %3207 = vst [vmem:[#allocation11 + $0x8] sm:$0xff] %v3205
    // Predicated region
    $region50: #{tpu_custom_call.1} parent=1 // pred_check
      _
    $region51: #{tpu_custom_call.1} parent=1 // pred_check_branch
      %3209 = sbr.rel (0) target = $region53
    $region52: #{tpu_custom_call.1} parent=1 // pred_region
      %s3211 = ssub.s32 256, 256
      %3212 = vsyncadd [#allocation4], %s3211
      %s3213 = sshll.u32 [#allocation11], 4
      %s3214 = int_to_ptr.vmem [resolvable:$true] %s3213
      %3219 = dma.vmem_to_hbm [thread:$0]  %s3214, 256, %s7, [#allocation4], 128, 128, 8
    $region53: #{tpu_custom_call.1} parent=1 // pred_fallthru
      _
    // Predicated region
    $region54: #{tpu_custom_call.1} parent=1 // pred_check
      _
    $region55: #{tpu_custom_call.1} parent=1 // pred_check_branch
      %3221 = sbr.rel (0) target = $region57
    $region56: #{tpu_custom_call.1} parent=1 // pred_region
      %3222 = dma.done [#allocation4], 256
    $region57: #{tpu_custom_call.1} parent=1 // pred_fallthru
      _
    %3223 = vsyncpa [#allocation3], 1
    %3224 = vsyncpa [#allocation6], 1
    %3225 = vsyncpa [#allocation9], 1
    %3226 = vsyncpa [#allocation4], 1

// kernel: tpu_custom_call.1
$region0: #{tpu_custom_call.1}
  #allocation0 [shape = 'u32[]', space=smem, size = 0x4, offset = 0x4, fixed_abs, tag = 'smem constant byte address 0x4 - core index']
  #allocation1 [shape = 'u32[144,128]{1,0:T(1,128)}', space=vmem, size = 0x12000, scoped, tag = 'internal scratch']
  %s0 = inlined_call_operand.hbm [shape: bf16[16,896], index: 0, kind: input, shape index: {}]
  %s1 = inlined_call_operand.hbm [shape: bf16[896,512], index: 1, kind: input, shape index: {}]
  %s2 = inlined_call_operand.hbm [shape: f32[1,512], index: 2, kind: input, shape index: {}]
  %s3 = inlined_call_operand.hbm [shape: bf16[512,512], index: 3, kind: input, shape index: {}]
  %s4 = inlined_call_operand.vmem [shape: f32[1,512], index: 4, kind: input, shape index: {}]
  %s5 = inlined_call_operand.hbm [shape: bf16[512,128], index: 5, kind: input, shape index: {}]
  %s6 = inlined_call_operand.vmem [shape: f32[1,128], index: 6, kind: input, shape index: {}]
  %s7 = inlined_call_operand.hbm [shape: f32[16,128], index: 7, kind: output, shape index: {}]
  %s8 = sld [smem:[#allocation0]]
  $region58: #{tpu_custom_call.1} parent=0
    _
  %s10 = ssub.s32 1, %s8
  %s11 = scalar_select 0, %s10, %s8
  $region1: #{tpu_custom_call.1} parent=0
    #allocation2 [shape = 'u8[28672]{0}', space=vmem, size = 0x7000, scoped, tag = 'input window, operand 0, single buffered']
    #allocation3 [shape = 's32[1]{0}', space=sflag, size = 0x4, scoped, tag = 'scoped memory for tpu_custom_call.1']
    #allocation4 [shape = 's32[1]{0}', space=sflag, size = 0x4, scoped, tag = 'scoped memory for tpu_custom_call.1']
    #allocation5 [shape = 'u8[917504]{0}', space=vmem, size = 0xe0000, scoped, tag = 'input window, operand 1, single buffered']
    #allocation6 [shape = 's32[1]{0}', space=sflag, size = 0x4, scoped, tag = 'scoped memory for tpu_custom_call.1']
    #allocation7 [shape = 'u8[2048]{0}', space=vmem, size = 0x800, scoped, tag = 'input window, operand 2, single buffered']
    #allocation8 [shape = 'u8[524288]{0}', space=vmem, size = 0x80000, scoped, tag = 'input window, operand 3, single buffered']
    #allocation9 [shape = 's32[1]{0}', space=sflag, size = 0x4, scoped, tag = 'scoped memory for tpu_custom_call.1']
    #allocation10 [shape = 'u8[131072]{0}', space=vmem, size = 0x20000, scoped, tag = 'input window, operand 5, single buffered']
    #allocation11 [shape = 'u8[8192]{0}', space=vmem, size = 0x2000, scoped, tag = 'output window, operand 0, single buffered']
    %12 = vsyncpa [#allocation3], 0
    %13 = vsyncpa [#allocation6], 0
    %14 = vsyncpa [#allocation9], 0
    %15 = vsyncpa [#allocation4], 0
    // Predicated region
    $region2: #{tpu_custom_call.1} parent=1 // pred_check
      _
    $region3: #{tpu_custom_call.1} parent=1 // pred_check_branch
      %17 = sbr.rel (0) target = $region5
    $region4: #{tpu_custom_call.1} parent=1 // pred_region
      %s19 = ssub.s32 896, 896
      %20 = vsyncadd [#allocation3], %s19
      %s21 = sshll.u32 [#allocation2], 4
      %s22 = int_to_ptr.vmem [resolvable:$true] %s21
      %27 = dma.hbm_to_vmem [thread:$0]  %s0, 896, %s22, [#allocation3], 448, 448, 28
    $region5: #{tpu_custom_call.1} parent=1 // pred_fallthru
      _
    // Predicated region
    $region6: #{tpu_custom_call.1} parent=1 // pred_check
      _
    $region7: #{tpu_custom_call.1} parent=1 // pred_check_branch
      %29 = sbr.rel (0) target = $region9
    $region8: #{tpu_custom_call.1} parent=1 // pred_region
      %s31 = ssub.s32 28672, 28672
      %32 = vsyncadd [#allocation6], %s31
      %s33 = sshll.u32 [#allocation5], 4
      %s34 = int_to_ptr.vmem [resolvable:$true] %s33
      %39 = dma.hbm_to_vmem [thread:$0]  %s1, 28672, %s34, [#allocation6], 256, 256, 16
    $region9: #{tpu_custom_call.1} parent=1 // pred_fallthru
      _
    // Predicated region
    $region10: #{tpu_custom_call.1} parent=1 // pred_check
      _
    $region11: #{tpu_custom_call.1} parent=1 // pred_check_branch
      %41 = sbr.rel (0) target = $region13
    $region12: #{tpu_custom_call.1} parent=1 // pred_region
      %s43 = ssub.s32 64, 64
      %44 = vsyncadd [#allocation6], %s43
      %s46 = sshll.u32 [#allocation7], 4
      %s47 = int_to_ptr.vmem [resolvable:$true] %s46
      %49 = dma.hbm_to_vmem [thread:$0]  %s2, 64, %s47, [#allocation6]
    $region13: #{tpu_custom_call.1} parent=1 // pred_fallthru
      _
    // Predicated region
    $region14: #{tpu_custom_call.1} parent=1 // pred_check
      _
    $region15: #{tpu_custom_call.1} parent=1 // pred_check_branch
      %51 = sbr.rel (0) target = $region17
    $region16: #{tpu_custom_call.1} parent=1 // pred_region
      %s53 = ssub.s32 16384, 16384
      %54 = vsyncadd [#allocation9], %s53
      %s55 = sshll.u32 [#allocation8], 4
      %s56 = int_to_ptr.vmem [resolvable:$true] %s55
      %61 = dma.hbm_to_vmem [thread:$0]  %s3, 16384, %s56, [#allocation9], 256, 256, 16
    $region17: #{tpu_custom_call.1} parent=1 // pred_fallthru
      _
    // Predicated region
    $region18: #{tpu_custom_call.1} parent=1 // pred_check
      _
    $region19: #{tpu_custom_call.1} parent=1 // pred_check_branch
      %63 = sbr.rel (0) target = $region21
    $region20: #{tpu_custom_call.1} parent=1 // pred_region
      _
    $region21: #{tpu_custom_call.1} parent=1 // pred_fallthru
      _
    // Predicated region
    $region22: #{tpu_custom_call.1} parent=1 // pred_check
      _
    $region23: #{tpu_custom_call.1} parent=1 // pred_check_branch
      %65 = sbr.rel (0) target = $region25
    $region24: #{tpu_custom_call.1} parent=1 // pred_region
      %s67 = ssub.s32 4096, 4096
      %68 = vsyncadd [#allocation9], %s67
      %s69 = sshll.u32 [#allocation10], 4
      %s70 = int_to_ptr.vmem [resolvable:$true] %s69
      %75 = dma.hbm_to_vmem [thread:$0]  %s5, 4096, %s70, [#allocation9], 64, 64, 4
    $region25: #{tpu_custom_call.1} parent=1 // pred_fallthru
      _
    // Predicated region
    $region26: #{tpu_custom_call.1} parent=1 // pred_check
      _
    $region27: #{tpu_custom_call.1} parent=1 // pred_check_branch
      %77 = sbr.rel (0) target = $region29
    $region28: #{tpu_custom_call.1} parent=1 // pred_region
      _
    $region29: #{tpu_custom_call.1} parent=1 // pred_fallthru
      _
    // Predicated region
    $region30: #{tpu_custom_call.1} parent=1 // pred_check
      _
    $region31: #{tpu_custom_call.1} parent=1 // pred_check_branch
      %79 = sbr.rel (0) target = $region33
    $region32: #{tpu_custom_call.1} parent=1 // pred_region
      %80 = dma.done [#allocation3], 896
    $region33: #{tpu_custom_call.1} parent=1 // pred_fallthru
      _
    // Predicated region
    $region34: #{tpu_custom_call.1} parent=1 // pred_check
      _
    $region35: #{tpu_custom_call.1} parent=1 // pred_check_branch
      %82 = sbr.rel (0) target = $region37
    $region36: #{tpu_custom_call.1} parent=1 // pred_region
      %83 = dma.done [#allocation6], 28672
    $region37: #{tpu_custom_call.1} parent=1 // pred_fallthru
      _
    // Predicated region
    $region38: #{tpu_custom_call.1} parent=1 // pred_check
      _
    $region39: #{tpu_custom_call.1} parent=1 // pred_check_branch
      %85 = sbr.rel (0) target = $region41
    $region40: #{tpu_custom_call.1} parent=1 // pred_region
      %86 = dma.done [#allocation6], 64
    $region41: #{tpu_custom_call.1} parent=1 // pred_fallthru
      _
    // Predicated region
    $region42: #{tpu_custom_call.1} parent=1 // pred_check
      _
    $region43: #{tpu_custom_call.1} parent=1 // pred_check_branch
      %88 = sbr.rel (0) target = $region45
    $region44: #{tpu_custom_call.1} parent=1 // pred_region
      %89 = dma.done [#allocation9], 16384
    $region45: #{tpu_custom_call.1} parent=1 // pred_fallthru
      _
    // Predicated region
    $region46: #{tpu_custom_call.1} parent=1 // pred_check
      _
    $region47: #{tpu_custom_call.1} parent=1 // pred_check_branch
      %91 = sbr.rel (0) target = $region49
    $region48: #{tpu_custom_call.1} parent=1 // pred_region
      %92 = dma.done [#allocation9], 4096
    $region49: #{tpu_custom_call.1} parent=1 // pred_fallthru
      _
    %v94 = vld [vmem:[#allocation2] sm:$0xff]
    %v95 = vld [vmem:[#allocation2 + $0x8] sm:$0xff]
    %v96 = vld [vmem:[#allocation2 + $0x10] sm:$0xff]
    %v97 = vld [vmem:[#allocation2 + $0x18] sm:$0xf]
    %v98 = vld [vmem:[#allocation2 + $0x1c] sm:$0xff]
    %v99 = vld [vmem:[#allocation2 + $0x24] sm:$0xff]
    %v100 = vld [vmem:[#allocation2 + $0x2c] sm:$0xff]
    %v101 = vld [vmem:[#allocation2 + $0x34] sm:$0xf]
    %v102 = vld [vmem:[#allocation5] sm:$0xff]
    %v103 = vld [vmem:[#allocation5 + $0x8] sm:$0xff]
    %v104 = vld [vmem:[#allocation5 + $0x10] sm:$0xff]
    %v105 = vld [vmem:[#allocation5 + $0x18] sm:$0xff]
    %v106 = vld [vmem:[#allocation5 + $0x20] sm:$0xff]
    %v107 = vld [vmem:[#allocation5 + $0x28] sm:$0xff]
    %v108 = vld [vmem:[#allocation5 + $0x30] sm:$0xff]
    %v109 = vld [vmem:[#allocation5 + $0x38] sm:$0xff]
    %v110 = vld [vmem:[#allocation5 + $0x40] sm:$0xff]
    %v111 = vld [vmem:[#allocation5 + $0x48] sm:$0xff]
    %v112 = vld [vmem:[#allocation5 + $0x50] sm:$0xff]
    %v113 = vld [vmem:[#allocation5 + $0x58] sm:$0xff]
    %v114 = vld [vmem:[#allocation5 + $0x60] sm:$0xff]
    %v115 = vld [vmem:[#allocation5 + $0x68] sm:$0xff]
    %v116 = vld [vmem:[#allocation5 + $0x70] sm:$0xff]
    %v117 = vld [vmem:[#allocation5 + $0x78] sm:$0xff]
    %v118 = vld [vmem:[#allocation5 + $0x80] sm:$0xff]
    %v119 = vld [vmem:[#allocation5 + $0x88] sm:$0xff]
    %v120 = vld [vmem:[#allocation5 + $0x90] sm:$0xff]
    %v121 = vld [vmem:[#allocation5 + $0x98] sm:$0xff]
    %v122 = vld [vmem:[#allocation5 + $0xa0] sm:$0xff]
    %v123 = vld [vmem:[#allocation5 + $0xa8] sm:$0xff]
    %v124 = vld [vmem:[#allocation5 + $0xb0] sm:$0xff]
    %v125 = vld [vmem:[#allocation5 + $0xb8] sm:$0xff]
    %v126 = vld [vmem:[#allocation5 + $0xc0] sm:$0xff]
    %v127 = vld [vmem:[#allocation5 + $0xc8] sm:$0xff]
    %v128 = vld [vmem:[#allocation5 + $0xd0] sm:$0xff]
    %v129 = vld [vmem:[#allocation5 + $0xd8] sm:$0xff]
    %v130 = vld [vmem:[#allocation5 + $0xe0] sm:$0xff]
    %v131 = vld [vmem:[#allocation5 + $0xe8] sm:$0xff]
    %v132 = vld [vmem:[#allocation5 + $0xf0] sm:$0xff]
    %v133 = vld [vmem:[#allocation5 + $0xf8] sm:$0xff]
    %v134 = vld [vmem:[#allocation5 + $0x100] sm:$0xff]
    %v135 = vld [vmem:[#allocation5 + $0x108] sm:$0xff]
    %v136 = vld [vmem:[#allocation5 + $0x110] sm:$0xff]
    %v137 = vld [vmem:[#allocation5 + $0x118] sm:$0xff]
    %v138 = vld [vmem:[#allocation5 + $0x120] sm:$0xff]
    %v139 = vld [vmem:[#allocation5 + $0x128] sm:$0xff]
    %v140 = vld [vmem:[#allocation5 + $0x130] sm:$0xff]
    %v141 = vld [vmem:[#allocation5 + $0x138] sm:$0xff]
    %v142 = vld [vmem:[#allocation5 + $0x140] sm:$0xff]
    %v143 = vld [vmem:[#allocation5 + $0x148] sm:$0xff]
    %v144 = vld [vmem:[#allocation5 + $0x150] sm:$0xff]
    %v145 = vld [vmem:[#allocation5 + $0x158] sm:$0xff]
    %v146 = vld [vmem:[#allocation5 + $0x160] sm:$0xff]
    %v147 = vld [vmem:[#allocation5 + $0x168] sm:$0xff]
    %v148 = vld [vmem:[#allocation5 + $0x170] sm:$0xff]
    %v149 = vld [vmem:[#allocation5 + $0x178] sm:$0xff]
    %v150 = vld [vmem:[#allocation5 + $0x180] sm:$0xff]
    %v151 = vld [vmem:[#allocation5 + $0x188] sm:$0xff]
    %v152 = vld [vmem:[#allocation5 + $0x190] sm:$0xff]
    %v153 = vld [vmem:[#allocation5 + $0x198] sm:$0xff]
    %v154 = vld [vmem:[#allocation5 + $0x1a0] sm:$0xff]
    %v155 = vld [vmem:[#allocation5 + $0x1a8] sm:$0xff]
    %v156 = vld [vmem:[#allocation5 + $0x1b0] sm:$0xff]
    %v157 = vld [vmem:[#allocation5 + $0x1b8] sm:$0xff]
    %v158 = vld [vmem:[#allocation5 + $0x1c0] sm:$0xff]
    %v159 = vld [vmem:[#allocation5 + $0x1c8] sm:$0xff]
    %v160 = vld [vmem:[#allocation5 + $0x1d0] sm:$0xff]
    %v161 = vld [vmem:[#allocation5 + $0x1d8] sm:$0xff]
    %v162 = vld [vmem:[#allocation5 + $0x1e0] sm:$0xff]
    %v163 = vld [vmem:[#allocation5 + $0x1e8] sm:$0xff]
    %v164 = vld [vmem:[#allocation5 + $0x1f0] sm:$0xff]
    %v165 = vld [vmem:[#allocation5 + $0x1f8] sm:$0xff]
    %v166 = vld [vmem:[#allocation5 + $0x200] sm:$0xff]
    %v167 = vld [vmem:[#allocation5 + $0x208] sm:$0xff]
    %v168 = vld [vmem:[#allocation5 + $0x210] sm:$0xff]
    %v169 = vld [vmem:[#allocation5 + $0x218] sm:$0xff]
    %v170 = vld [vmem:[#allocation5 + $0x220] sm:$0xff]
    %v171 = vld [vmem:[#allocation5 + $0x228] sm:$0xff]
    %v172 = vld [vmem:[#allocation5 + $0x230] sm:$0xff]
    %v173 = vld [vmem:[#allocation5 + $0x238] sm:$0xff]
    %v174 = vld [vmem:[#allocation5 + $0x240] sm:$0xff]
    %v175 = vld [vmem:[#allocation5 + $0x248] sm:$0xff]
    %v176 = vld [vmem:[#allocation5 + $0x250] sm:$0xff]
    %v177 = vld [vmem:[#allocation5 + $0x258] sm:$0xff]
    %v178 = vld [vmem:[#allocation5 + $0x260] sm:$0xff]
    %v179 = vld [vmem:[#allocation5 + $0x268] sm:$0xff]
    %v180 = vld [vmem:[#allocation5 + $0x270] sm:$0xff]
    %v181 = vld [vmem:[#allocation5 + $0x278] sm:$0xff]
    %v182 = vld [vmem:[#allocation5 + $0x280] sm:$0xff]
    %v183 = vld [vmem:[#allocation5 + $0x288] sm:$0xff]
    %v184 = vld [vmem:[#allocation5 + $0x290] sm:$0xff]
    %v185 = vld [vmem:[#allocation5 + $0x298] sm:$0xff]
    %v186 = vld [vmem:[#allocation5 + $0x2a0] sm:$0xff]
    %v187 = vld [vmem:[#allocation5 + $0x2a8] sm:$0xff]
    %v188 = vld [vmem:[#allocation5 + $0x2b0] sm:$0xff]
    %v189 = vld [vmem:[#allocation5 + $0x2b8] sm:$0xff]
    %v190 = vld [vmem:[#allocation5 + $0x2c0] sm:$0xff]
    %v191 = vld [vmem:[#allocation5 + $0x2c8] sm:$0xff]
    %v192 = vld [vmem:[#allocation5 + $0x2d0] sm:$0xff]
    %v193 = vld [vmem:[#allocation5 + $0x2d8] sm:$0xff]
    %v194 = vld [vmem:[#allocation5 + $0x2e0] sm:$0xff]
    %v195 = vld [vmem:[#allocation5 + $0x2e8] sm:$0xff]
    %v196 = vld [vmem:[#allocation5 + $0x2f0] sm:$0xff]
    %v197 = vld [vmem:[#allocation5 + $0x2f8] sm:$0xff]
    %v198 = vld [vmem:[#allocation5 + $0x300] sm:$0xff]
    %v199 = vld [vmem:[#allocation5 + $0x308] sm:$0xff]
    %v200 = vld [vmem:[#allocation5 + $0x310] sm:$0xff]
    %v201 = vld [vmem:[#allocation5 + $0x318] sm:$0xff]
    %v202 = vld [vmem:[#allocation5 + $0x320] sm:$0xff]
    %v203 = vld [vmem:[#allocation5 + $0x328] sm:$0xff]
    %v204 = vld [vmem:[#allocation5 + $0x330] sm:$0xff]
    %v205 = vld [vmem:[#allocation5 + $0x338] sm:$0xff]
    %v206 = vld [vmem:[#allocation5 + $0x340] sm:$0xff]
    %v207 = vld [vmem:[#allocation5 + $0x348] sm:$0xff]
    %v208 = vld [vmem:[#allocation5 + $0x350] sm:$0xff]
    %v209 = vld [vmem:[#allocation5 + $0x358] sm:$0xff]
    %v210 = vld [vmem:[#allocation5 + $0x360] sm:$0xff]
    %v211 = vld [vmem:[#allocation5 + $0x368] sm:$0xff]
    %v212 = vld [vmem:[#allocation5 + $0x370] sm:$0xff]
    %v213 = vld [vmem:[#allocation5 + $0x378] sm:$0xff]
    %v214 = vld [vmem:[#allocation5 + $0x380] sm:$0xff]
    %v215 = vld [vmem:[#allocation5 + $0x388] sm:$0xff]
    %v216 = vld [vmem:[#allocation5 + $0x390] sm:$0xff]
    %v217 = vld [vmem:[#allocation5 + $0x398] sm:$0xff]
    %v218 = vld [vmem:[#allocation5 + $0x3a0] sm:$0xff]
    %v219 = vld [vmem:[#allocation5 + $0x3a8] sm:$0xff]
    %v220 = vld [vmem:[#allocation5 + $0x3b0] sm:$0xff]
    %v221 = vld [vmem:[#allocation5 + $0x3b8] sm:$0xff]
    %v222 = vld [vmem:[#allocation5 + $0x3c0] sm:$0xff]
    %v223 = vld [vmem:[#allocation5 + $0x3c8] sm:$0xff]
    %v224 = vld [vmem:[#allocation5 + $0x3d0] sm:$0xff]
    %v225 = vld [vmem:[#allocation5 + $0x3d8] sm:$0xff]
    %v226 = vld [vmem:[#allocation5 + $0x3e0] sm:$0xff]
    %v227 = vld [vmem:[#allocation5 + $0x3e8] sm:$0xff]
    %v228 = vld [vmem:[#allocation5 + $0x3f0] sm:$0xff]
    %v229 = vld [vmem:[#allocation5 + $0x3f8] sm:$0xff]
    %v230 = vld [vmem:[#allocation5 + $0x400] sm:$0xff]
    %v231 = vld [vmem:[#allocation5 + $0x408] sm:$0xff]
    %v232 = vld [vmem:[#allocation5 + $0x410] sm:$0xff]
    %v233 = vld [vmem:[#allocation5 + $0x418] sm:$0xff]
    %v234 = vld [vmem:[#allocation5 + $0x420] sm:$0xff]
    %v235 = vld [vmem:[#allocation5 + $0x428] sm:$0xff]
    %v236 = vld [vmem:[#allocation5 + $0x430] sm:$0xff]
    %v237 = vld [vmem:[#allocation5 + $0x438] sm:$0xff]
    %v238 = vld [vmem:[#allocation5 + $0x440] sm:$0xff]
    %v239 = vld [vmem:[#allocation5 + $0x448] sm:$0xff]
    %v240 = vld [vmem:[#allocation5 + $0x450] sm:$0xff]
    %v241 = vld [vmem:[#allocation5 + $0x458] sm:$0xff]
    %v242 = vld [vmem:[#allocation5 + $0x460] sm:$0xff]
    %v243 = vld [vmem:[#allocation5 + $0x468] sm:$0xff]
    %v244 = vld [vmem:[#allocation5 + $0x470] sm:$0xff]
    %v245 = vld [vmem:[#allocation5 + $0x478] sm:$0xff]
    %v246 = vld [vmem:[#allocation5 + $0x480] sm:$0xff]
    %v247 = vld [vmem:[#allocation5 + $0x488] sm:$0xff]
    %v248 = vld [vmem:[#allocation5 + $0x490] sm:$0xff]
    %v249 = vld [vmem:[#allocation5 + $0x498] sm:$0xff]
    %v250 = vld [vmem:[#allocation5 + $0x4a0] sm:$0xff]
    %v251 = vld [vmem:[#allocation5 + $0x4a8] sm:$0xff]
    %v252 = vld [vmem:[#allocation5 + $0x4b0] sm:$0xff]
    %v253 = vld [vmem:[#allocation5 + $0x4b8] sm:$0xff]
    %v254 = vld [vmem:[#allocation5 + $0x4c0] sm:$0xff]
    %v255 = vld [vmem:[#allocation5 + $0x4c8] sm:$0xff]
    %v256 = vld [vmem:[#allocation5 + $0x4d0] sm:$0xff]
    %v257 = vld [vmem:[#allocation5 + $0x4d8] sm:$0xff]
    %v258 = vld [vmem:[#allocation5 + $0x4e0] sm:$0xff]
    %v259 = vld [vmem:[#allocation5 + $0x4e8] sm:$0xff]
    %v260 = vld [vmem:[#allocation5 + $0x4f0] sm:$0xff]
    %v261 = vld [vmem:[#allocation5 + $0x4f8] sm:$0xff]
    %v262 = vld [vmem:[#allocation5 + $0x500] sm:$0xff]
    %v263 = vld [vmem:[#allocation5 + $0x508] sm:$0xff]
    %v264 = vld [vmem:[#allocation5 + $0x510] sm:$0xff]
    %v265 = vld [vmem:[#allocation5 + $0x518] sm:$0xff]
    %v266 = vld [vmem:[#allocation5 + $0x520] sm:$0xff]
    %v267 = vld [vmem:[#allocation5 + $0x528] sm:$0xff]
    %v268 = vld [vmem:[#allocation5 + $0x530] sm:$0xff]
    %v269 = vld [vmem:[#allocation5 + $0x538] sm:$0xff]
    %v270 = vld [vmem:[#allocation5 + $0x540] sm:$0xff]
    %v271 = vld [vmem:[#allocation5 + $0x548] sm:$0xff]
    %v272 = vld [vmem:[#allocation5 + $0x550] sm:$0xff]
    %v273 = vld [vmem:[#allocation5 + $0x558] sm:$0xff]
    %v274 = vld [vmem:[#allocation5 + $0x560] sm:$0xff]
    %v275 = vld [vmem:[#allocation5 + $0x568] sm:$0xff]
    %v276 = vld [vmem:[#allocation5 + $0x570] sm:$0xff]
    %v277 = vld [vmem:[#allocation5 + $0x578] sm:$0xff]
    %v278 = vld [vmem:[#allocation5 + $0x580] sm:$0xff]
    %v279 = vld [vmem:[#allocation5 + $0x588] sm:$0xff]
    %v280 = vld [vmem:[#allocation5 + $0x590] sm:$0xff]
    %v281 = vld [vmem:[#allocation5 + $0x598] sm:$0xff]
    %v282 = vld [vmem:[#allocation5 + $0x5a0] sm:$0xff]
    %v283 = vld [vmem:[#allocation5 + $0x5a8] sm:$0xff]
    %v284 = vld [vmem:[#allocation5 + $0x5b0] sm:$0xff]
    %v285 = vld [vmem:[#allocation5 + $0x5b8] sm:$0xff]
    %v286 = vld [vmem:[#allocation5 + $0x5c0] sm:$0xff]
    %v287 = vld [vmem:[#allocation5 + $0x5c8] sm:$0xff]
    %v288 = vld [vmem:[#allocation5 + $0x5d0] sm:$0xff]
    %v289 = vld [vmem:[#allocation5 + $0x5d8] sm:$0xff]
    %v290 = vld [vmem:[#allocation5 + $0x5e0] sm:$0xff]
    %v291 = vld [vmem:[#allocation5 + $0x5e8] sm:$0xff]
    %v292 = vld [vmem:[#allocation5 + $0x5f0] sm:$0xff]
    %v293 = vld [vmem:[#allocation5 + $0x5f8] sm:$0xff]
    %v294 = vld [vmem:[#allocation5 + $0x600] sm:$0xff]
    %v295 = vld [vmem:[#allocation5 + $0x608] sm:$0xff]
    %v296 = vld [vmem:[#allocation5 + $0x610] sm:$0xff]
    %v297 = vld [vmem:[#allocation5 + $0x618] sm:$0xff]
    %v298 = vld [vmem:[#allocation5 + $0x620] sm:$0xff]
    %v299 = vld [vmem:[#allocation5 + $0x628] sm:$0xff]
    %v300 = vld [vmem:[#allocation5 + $0x630] sm:$0xff]
    %v301 = vld [vmem:[#allocation5 + $0x638] sm:$0xff]
    %v302 = vld [vmem:[#allocation5 + $0x640] sm:$0xff]
    %v303 = vld [vmem:[#allocation5 + $0x648] sm:$0xff]
    %v304 = vld [vmem:[#allocation5 + $0x650] sm:$0xff]
    %v305 = vld [vmem:[#allocation5 + $0x658] sm:$0xff]
    %v306 = vld [vmem:[#allocation5 + $0x660] sm:$0xff]
    %v307 = vld [vmem:[#allocation5 + $0x668] sm:$0xff]
    %v308 = vld [vmem:[#allocation5 + $0x670] sm:$0xff]
    %v309 = vld [vmem:[#allocation5 + $0x678] sm:$0xff]
    %v310 = vld [vmem:[#allocation5 + $0x680] sm:$0xff]
    %v311 = vld [vmem:[#allocation5 + $0x688] sm:$0xff]
    %v312 = vld [vmem:[#allocation5 + $0x690] sm:$0xff]
    %v313 = vld [vmem:[#allocation5 + $0x698] sm:$0xff]
    %v314 = vld [vmem:[#allocation5 + $0x6a0] sm:$0xff]
    %v315 = vld [vmem:[#allocation5 + $0x6a8] sm:$0xff]
    %v316 = vld [vmem:[#allocation5 + $0x6b0] sm:$0xff]
    %v317 = vld [vmem:[#allocation5 + $0x6b8] sm:$0xff]
    %v318 = vld [vmem:[#allocation5 + $0x6c0] sm:$0xff]
    %v319 = vld [vmem:[#allocation5 + $0x6c8] sm:$0xff]
    %v320 = vld [vmem:[#allocation5 + $0x6d0] sm:$0xff]
    %v321 = vld [vmem:[#allocation5 + $0x6d8] sm:$0xff]
    %v322 = vld [vmem:[#allocation5 + $0x6e0] sm:$0xff]
    %v323 = vld [vmem:[#allocation5 + $0x6e8] sm:$0xff]
    %v324 = vld [vmem:[#allocation5 + $0x6f0] sm:$0xff]
    %v325 = vld [vmem:[#allocation5 + $0x6f8] sm:$0xff]
    %v326 = vld [vmem:[#allocation7] sm:$0xf]
    %v328 = vlaneseq
    %v329 = vshrl.u32 %v328, 7
    %v330 = vsub.s32 0, %v329
    %v331 = vrot.slane %v326, %v330
    %v332 = vlaneseq
    %v333 = vshrl.u32 %v332, 7
    %v334 = vsub.s32 1, %v333
    %v335 = vrot.slane %v326, %v334
    %v336 = vlaneseq
    %v337 = vshrl.u32 %v336, 7
    %v338 = vsub.s32 2, %v337
    %v339 = vrot.slane %v326, %v338
    %v340 = vlaneseq
    %v341 = vshrl.u32 %v340, 7
    %v342 = vsub.s32 3, %v341
    %v343 = vrot.slane %v326, %v342
    %v356 = vunpack.c.l.b16 %v94
    %v357 = vunpack.c.h.b16 %v94
    %v358 = vunpack.c.l.b16 %v95
    %v359 = vunpack.c.h.b16 %v95
    %v360 = vunpack.c.l.b16 %v96
    %v361 = vunpack.c.h.b16 %v96
    %v362 = vunpack.c.l.b16 %v97
    %v363 = vunpack.c.l.b16 %v98
    %v364 = vunpack.c.h.b16 %v98
    %v365 = vunpack.c.l.b16 %v99
    %v366 = vunpack.c.h.b16 %v99
    %v367 = vunpack.c.l.b16 %v100
    %v368 = vunpack.c.h.b16 %v100
    %v369 = vunpack.c.l.b16 %v101
    %v370 = vpack.c.b16 %v363, %v356
    %v371 = vpack.c.b16 %v364, %v357
    %v372 = vpack.c.b16 %v365, %v358
    %v373 = vpack.c.b16 %v366, %v359
    %v374 = vpack.c.b16 %v367, %v360
    %v375 = vpack.c.b16 %v368, %v361
    %v376 = vpack.c.b16 %v369, %v362
    %v608 = vunpack.c.l.b16 %v102
    %v609 = vunpack.c.h.b16 %v102
    %v610 = vunpack.c.l.b16 %v103
    %v611 = vunpack.c.h.b16 %v103
    %v612 = vunpack.c.l.b16 %v104
    %v613 = vunpack.c.h.b16 %v104
    %v614 = vunpack.c.l.b16 %v105
    %v615 = vunpack.c.h.b16 %v105
    %v616 = vunpack.c.l.b16 %v106
    %v617 = vunpack.c.h.b16 %v106
    %v618 = vunpack.c.l.b16 %v107
    %v619 = vunpack.c.h.b16 %v107
    %v620 = vunpack.c.l.b16 %v108
    %v621 = vunpack.c.h.b16 %v108
    %v622 = vunpack.c.l.b16 %v109
    %v623 = vunpack.c.h.b16 %v109
    %v624 = vunpack.c.l.b16 %v110
    %v625 = vunpack.c.h.b16 %v110
    %v626 = vunpack.c.l.b16 %v111
    %v627 = vunpack.c.h.b16 %v111
    %v628 = vunpack.c.l.b16 %v112
    %v629 = vunpack.c.h.b16 %v112
    %v630 = vunpack.c.l.b16 %v113
    %v631 = vunpack.c.h.b16 %v113
    %v632 = vunpack.c.l.b16 %v114
    %v633 = vunpack.c.h.b16 %v114
    %v634 = vunpack.c.l.b16 %v115
    %v635 = vunpack.c.h.b16 %v115
    %v636 = vunpack.c.l.b16 %v116
    %v637 = vunpack.c.h.b16 %v116
    %v638 = vunpack.c.l.b16 %v117
    %v639 = vunpack.c.h.b16 %v117
    %v640 = vunpack.c.l.b16 %v118
    %v641 = vunpack.c.h.b16 %v118
    %v642 = vunpack.c.l.b16 %v119
    %v643 = vunpack.c.h.b16 %v119
    %v644 = vunpack.c.l.b16 %v120
    %v645 = vunpack.c.h.b16 %v120
    %v646 = vunpack.c.l.b16 %v121
    %v647 = vunpack.c.h.b16 %v121
    %v648 = vunpack.c.l.b16 %v122
    %v649 = vunpack.c.h.b16 %v122
    %v650 = vunpack.c.l.b16 %v123
    %v651 = vunpack.c.h.b16 %v123
    %v652 = vunpack.c.l.b16 %v124
    %v653 = vunpack.c.h.b16 %v124
    %v654 = vunpack.c.l.b16 %v125
    %v655 = vunpack.c.h.b16 %v125
    %v656 = vunpack.c.l.b16 %v126
    %v657 = vunpack.c.h.b16 %v126
    %v658 = vunpack.c.l.b16 %v127
    %v659 = vunpack.c.h.b16 %v127
    %v660 = vunpack.c.l.b16 %v128
    %v661 = vunpack.c.h.b16 %v128
    %v662 = vunpack.c.l.b16 %v129
    %v663 = vunpack.c.h.b16 %v129
    %v664 = vunpack.c.l.b16 %v130
    %v665 = vunpack.c.h.b16 %v130
    %v666 = vunpack.c.l.b16 %v131
    %v667 = vunpack.c.h.b16 %v131
    %v668 = vunpack.c.l.b16 %v132
    %v669 = vunpack.c.h.b16 %v132
    %v670 = vunpack.c.l.b16 %v133
    %v671 = vunpack.c.h.b16 %v133
    %v672 = vunpack.c.l.b16 %v134
    %v673 = vunpack.c.h.b16 %v134
    %v674 = vunpack.c.l.b16 %v135
    %v675 = vunpack.c.h.b16 %v135
    %v676 = vunpack.c.l.b16 %v136
    %v677 = vunpack.c.h.b16 %v136
    %v678 = vunpack.c.l.b16 %v137
    %v679 = vunpack.c.h.b16 %v137
    %v680 = vunpack.c.l.b16 %v138
    %v681 = vunpack.c.h.b16 %v138
    %v682 = vunpack.c.l.b16 %v139
    %v683 = vunpack.c.h.b16 %v139
    %v684 = vunpack.c.l.b16 %v140
    %v685 = vunpack.c.h.b16 %v140
    %v686 = vunpack.c.l.b16 %v141
    %v687 = vunpack.c.h.b16 %v141
    %v688 = vunpack.c.l.b16 %v142
    %v689 = vunpack.c.h.b16 %v142
    %v690 = vunpack.c.l.b16 %v143
    %v691 = vunpack.c.h.b16 %v143
    %v692 = vunpack.c.l.b16 %v144
    %v693 = vunpack.c.h.b16 %v144
    %v694 = vunpack.c.l.b16 %v145
    %v695 = vunpack.c.h.b16 %v145
    %v696 = vunpack.c.l.b16 %v146
    %v697 = vunpack.c.h.b16 %v146
    %v698 = vunpack.c.l.b16 %v147
    %v699 = vunpack.c.h.b16 %v147
    %v700 = vunpack.c.l.b16 %v148
    %v701 = vunpack.c.h.b16 %v148
    %v702 = vunpack.c.l.b16 %v149
    %v703 = vunpack.c.h.b16 %v149
    %v704 = vunpack.c.l.b16 %v150
    %v705 = vunpack.c.h.b16 %v150
    %v706 = vunpack.c.l.b16 %v151
    %v707 = vunpack.c.h.b16 %v151
    %v708 = vunpack.c.l.b16 %v152
    %v709 = vunpack.c.h.b16 %v152
    %v710 = vunpack.c.l.b16 %v153
    %v711 = vunpack.c.h.b16 %v153
    %v712 = vunpack.c.l.b16 %v154
    %v713 = vunpack.c.h.b16 %v154
    %v714 = vunpack.c.l.b16 %v155
    %v715 = vunpack.c.h.b16 %v155
    %v716 = vunpack.c.l.b16 %v156
    %v717 = vunpack.c.h.b16 %v156
    %v718 = vunpack.c.l.b16 %v157
    %v719 = vunpack.c.h.b16 %v157
    %v720 = vunpack.c.l.b16 %v158
    %v721 = vunpack.c.h.b16 %v158
    %v722 = vunpack.c.l.b16 %v159
    %v723 = vunpack.c.h.b16 %v159
    %v724 = vunpack.c.l.b16 %v160
    %v725 = vunpack.c.h.b16 %v160
    %v726 = vunpack.c.l.b16 %v161
    %v727 = vunpack.c.h.b16 %v161
    %v728 = vunpack.c.l.b16 %v162
    %v729 = vunpack.c.h.b16 %v162
    %v730 = vunpack.c.l.b16 %v163
    %v731 = vunpack.c.h.b16 %v163
    %v732 = vunpack.c.l.b16 %v164
    %v733 = vunpack.c.h.b16 %v164
    %v734 = vunpack.c.l.b16 %v165
    %v735 = vunpack.c.h.b16 %v165
    %v736 = vunpack.c.l.b16 %v166
    %v737 = vunpack.c.h.b16 %v166
    %v738 = vunpack.c.l.b16 %v167
    %v739 = vunpack.c.h.b16 %v167
    %v740 = vunpack.c.l.b16 %v168
    %v741 = vunpack.c.h.b16 %v168
    %v742 = vunpack.c.l.b16 %v169
    %v743 = vunpack.c.h.b16 %v169
    %v744 = vunpack.c.l.b16 %v170
    %v745 = vunpack.c.h.b16 %v170
    %v746 = vunpack.c.l.b16 %v171
    %v747 = vunpack.c.h.b16 %v171
    %v748 = vunpack.c.l.b16 %v172
    %v749 = vunpack.c.h.b16 %v172
    %v750 = vunpack.c.l.b16 %v173
    %v751 = vunpack.c.h.b16 %v173
    %v752 = vunpack.c.l.b16 %v174
    %v753 = vunpack.c.h.b16 %v174
    %v754 = vunpack.c.l.b16 %v175
    %v755 = vunpack.c.h.b16 %v175
    %v756 = vunpack.c.l.b16 %v176
    %v757 = vunpack.c.h.b16 %v176
    %v758 = vunpack.c.l.b16 %v177
    %v759 = vunpack.c.h.b16 %v177
    %v760 = vunpack.c.l.b16 %v178
    %v761 = vunpack.c.h.b16 %v178
    %v762 = vunpack.c.l.b16 %v179
    %v763 = vunpack.c.h.b16 %v179
    %v764 = vunpack.c.l.b16 %v180
    %v765 = vunpack.c.h.b16 %v180
    %v766 = vunpack.c.l.b16 %v181
    %v767 = vunpack.c.h.b16 %v181
    %v768 = vunpack.c.l.b16 %v182
    %v769 = vunpack.c.h.b16 %v182
    %v770 = vunpack.c.l.b16 %v183
    %v771 = vunpack.c.h.b16 %v183
    %v772 = vunpack.c.l.b16 %v184
    %v773 = vunpack.c.h.b16 %v184
    %v774 = vunpack.c.l.b16 %v185
    %v775 = vunpack.c.h.b16 %v185
    %v776 = vunpack.c.l.b16 %v186
    %v777 = vunpack.c.h.b16 %v186
    %v778 = vunpack.c.l.b16 %v187
    %v779 = vunpack.c.h.b16 %v187
    %v780 = vunpack.c.l.b16 %v188
    %v781 = vunpack.c.h.b16 %v188
    %v782 = vunpack.c.l.b16 %v189
    %v783 = vunpack.c.h.b16 %v189
    %v784 = vunpack.c.l.b16 %v190
    %v785 = vunpack.c.h.b16 %v190
    %v786 = vunpack.c.l.b16 %v191
    %v787 = vunpack.c.h.b16 %v191
    %v788 = vunpack.c.l.b16 %v192
    %v789 = vunpack.c.h.b16 %v192
    %v790 = vunpack.c.l.b16 %v193
    %v791 = vunpack.c.h.b16 %v193
    %v792 = vunpack.c.l.b16 %v194
    %v793 = vunpack.c.h.b16 %v194
    %v794 = vunpack.c.l.b16 %v195
    %v795 = vunpack.c.h.b16 %v195
    %v796 = vunpack.c.l.b16 %v196
    %v797 = vunpack.c.h.b16 %v196
    %v798 = vunpack.c.l.b16 %v197
    %v799 = vunpack.c.h.b16 %v197
    %v800 = vunpack.c.l.b16 %v198
    %v801 = vunpack.c.h.b16 %v198
    %v802 = vunpack.c.l.b16 %v199
    %v803 = vunpack.c.h.b16 %v199
    %v804 = vunpack.c.l.b16 %v200
    %v805 = vunpack.c.h.b16 %v200
    %v806 = vunpack.c.l.b16 %v201
    %v807 = vunpack.c.h.b16 %v201
    %v808 = vunpack.c.l.b16 %v202
    %v809 = vunpack.c.h.b16 %v202
    %v810 = vunpack.c.l.b16 %v203
    %v811 = vunpack.c.h.b16 %v203
    %v812 = vunpack.c.l.b16 %v204
    %v813 = vunpack.c.h.b16 %v204
    %v814 = vunpack.c.l.b16 %v205
    %v815 = vunpack.c.h.b16 %v205
    %v816 = vunpack.c.l.b16 %v206
    %v817 = vunpack.c.h.b16 %v206
    %v818 = vunpack.c.l.b16 %v207
    %v819 = vunpack.c.h.b16 %v207
    %v820 = vunpack.c.l.b16 %v208
    %v821 = vunpack.c.h.b16 %v208
    %v822 = vunpack.c.l.b16 %v209
    %v823 = vunpack.c.h.b16 %v209
    %v824 = vunpack.c.l.b16 %v210
    %v825 = vunpack.c.h.b16 %v210
    %v826 = vunpack.c.l.b16 %v211
    %v827 = vunpack.c.h.b16 %v211
    %v828 = vunpack.c.l.b16 %v212
    %v829 = vunpack.c.h.b16 %v212
    %v830 = vunpack.c.l.b16 %v213
    %v831 = vunpack.c.h.b16 %v213
    %v832 = vunpack.c.l.b16 %v214
    %v833 = vunpack.c.h.b16 %v214
    %v834 = vunpack.c.l.b16 %v215
    %v835 = vunpack.c.h.b16 %v215
    %v836 = vunpack.c.l.b16 %v216
    %v837 = vunpack.c.h.b16 %v216
    %v838 = vunpack.c.l.b16 %v217
    %v839 = vunpack.c.h.b16 %v217
    %v840 = vunpack.c.l.b16 %v218
    %v841 = vunpack.c.h.b16 %v218
    %v842 = vunpack.c.l.b16 %v219
    %v843 = vunpack.c.h.b16 %v219
    %v844 = vunpack.c.l.b16 %v220
    %v845 = vunpack.c.h.b16 %v220
    %v846 = vunpack.c.l.b16 %v221
    %v847 = vunpack.c.h.b16 %v221
    %v848 = vunpack.c.l.b16 %v222
    %v849 = vunpack.c.h.b16 %v222
    %v850 = vunpack.c.l.b16 %v223
    %v851 = vunpack.c.h.b16 %v223
    %v852 = vunpack.c.l.b16 %v224
    %v853 = vunpack.c.h.b16 %v224
    %v854 = vunpack.c.l.b16 %v225
    %v855 = vunpack.c.h.b16 %v225
    %v856 = vunpack.c.l.b16 %v226
    %v857 = vunpack.c.h.b16 %v226
    %v858 = vunpack.c.l.b16 %v227
    %v859 = vunpack.c.h.b16 %v227
    %v860 = vunpack.c.l.b16 %v228
    %v861 = vunpack.c.h.b16 %v228
    %v862 = vunpack.c.l.b16 %v229
    %v863 = vunpack.c.h.b16 %v229
    %v864 = vunpack.c.l.b16 %v230
    %v865 = vunpack.c.h.b16 %v230
    %v866 = vunpack.c.l.b16 %v231
    %v867 = vunpack.c.h.b16 %v231
    %v868 = vunpack.c.l.b16 %v232
    %v869 = vunpack.c.h.b16 %v232
    %v870 = vunpack.c.l.b16 %v233
    %v871 = vunpack.c.h.b16 %v233
    %v872 = vunpack.c.l.b16 %v234
    %v873 = vunpack.c.h.b16 %v234
    %v874 = vunpack.c.l.b16 %v235
    %v875 = vunpack.c.h.b16 %v235
    %v876 = vunpack.c.l.b16 %v236
    %v877 = vunpack.c.h.b16 %v236
    %v878 = vunpack.c.l.b16 %v237
    %v879 = vunpack.c.h.b16 %v237
    %v880 = vunpack.c.l.b16 %v238
    %v881 = vunpack.c.h.b16 %v238
    %v882 = vunpack.c.l.b16 %v239
    %v883 = vunpack.c.h.b16 %v239
    %v884 = vunpack.c.l.b16 %v240
    %v885 = vunpack.c.h.b16 %v240
    %v886 = vunpack.c.l.b16 %v241
    %v887 = vunpack.c.h.b16 %v241
    %v888 = vunpack.c.l.b16 %v242
    %v889 = vunpack.c.h.b16 %v242
    %v890 = vunpack.c.l.b16 %v243
    %v891 = vunpack.c.h.b16 %v243
    %v892 = vunpack.c.l.b16 %v244
    %v893 = vunpack.c.h.b16 %v244
    %v894 = vunpack.c.l.b16 %v245
    %v895 = vunpack.c.h.b16 %v245
    %v896 = vunpack.c.l.b16 %v246
    %v897 = vunpack.c.h.b16 %v246
    %v898 = vunpack.c.l.b16 %v247
    %v899 = vunpack.c.h.b16 %v247
    %v900 = vunpack.c.l.b16 %v248
    %v901 = vunpack.c.h.b16 %v248
    %v902 = vunpack.c.l.b16 %v249
    %v903 = vunpack.c.h.b16 %v249
    %v904 = vunpack.c.l.b16 %v250
    %v905 = vunpack.c.h.b16 %v250
    %v906 = vunpack.c.l.b16 %v251
    %v907 = vunpack.c.h.b16 %v251
    %v908 = vunpack.c.l.b16 %v252
    %v909 = vunpack.c.h.b16 %v252
    %v910 = vunpack.c.l.b16 %v253
    %v911 = vunpack.c.h.b16 %v253
    %v912 = vunpack.c.l.b16 %v254
    %v913 = vunpack.c.h.b16 %v254
    %v914 = vunpack.c.l.b16 %v255
    %v915 = vunpack.c.h.b16 %v255
    %v916 = vunpack.c.l.b16 %v256
    %v917 = vunpack.c.h.b16 %v256
    %v918 = vunpack.c.l.b16 %v257
    %v919 = vunpack.c.h.b16 %v257
    %v920 = vunpack.c.l.b16 %v258
    %v921 = vunpack.c.h.b16 %v258
    %v922 = vunpack.c.l.b16 %v259
    %v923 = vunpack.c.h.b16 %v259
    %v924 = vunpack.c.l.b16 %v260
    %v925 = vunpack.c.h.b16 %v260
    %v926 = vunpack.c.l.b16 %v261
    %v927 = vunpack.c.h.b16 %v261
    %v928 = vunpack.c.l.b16 %v262
    %v929 = vunpack.c.h.b16 %v262
    %v930 = vunpack.c.l.b16 %v263
    %v931 = vunpack.c.h.b16 %v263
    %v932 = vunpack.c.l.b16 %v264
    %v933 = vunpack.c.h.b16 %v264
    %v934 = vunpack.c.l.b16 %v265
    %v935 = vunpack.c.h.b16 %v265
    %v936 = vunpack.c.l.b16 %v266
    %v937 = vunpack.c.h.b16 %v266
    %v938 = vunpack.c.l.b16 %v267
    %v939 = vunpack.c.h.b16 %v267
    %v940 = vunpack.c.l.b16 %v268
    %v941 = vunpack.c.h.b16 %v268
    %v942 = vunpack.c.l.b16 %v269
    %v943 = vunpack.c.h.b16 %v269
    %v944 = vunpack.c.l.b16 %v270
    %v945 = vunpack.c.h.b16 %v270
    %v946 = vunpack.c.l.b16 %v271
    %v947 = vunpack.c.h.b16 %v271
    %v948 = vunpack.c.l.b16 %v272
    %v949 = vunpack.c.h.b16 %v272
    %v950 = vunpack.c.l.b16 %v273
    %v951 = vunpack.c.h.b16 %v273
    %v952 = vunpack.c.l.b16 %v274
    %v953 = vunpack.c.h.b16 %v274
    %v954 = vunpack.c.l.b16 %v275
    %v955 = vunpack.c.h.b16 %v275
    %v956 = vunpack.c.l.b16 %v276
    %v957 = vunpack.c.h.b16 %v276
    %v958 = vunpack.c.l.b16 %v277
    %v959 = vunpack.c.h.b16 %v277
    %v960 = vunpack.c.l.b16 %v278
    %v961 = vunpack.c.h.b16 %v278
    %v962 = vunpack.c.l.b16 %v279
    %v963 = vunpack.c.h.b16 %v279
    %v964 = vunpack.c.l.b16 %v280
    %v965 = vunpack.c.h.b16 %v280
    %v966 = vunpack.c.l.b16 %v281
    %v967 = vunpack.c.h.b16 %v281
    %v968 = vunpack.c.l.b16 %v282
    %v969 = vunpack.c.h.b16 %v282
    %v970 = vunpack.c.l.b16 %v283
    %v971 = vunpack.c.h.b16 %v283
    %v972 = vunpack.c.l.b16 %v284
    %v973 = vunpack.c.h.b16 %v284
    %v974 = vunpack.c.l.b16 %v285
    %v975 = vunpack.c.h.b16 %v285
    %v976 = vunpack.c.l.b16 %v286
    %v977 = vunpack.c.h.b16 %v286
    %v978 = vunpack.c.l.b16 %v287
    %v979 = vunpack.c.h.b16 %v287
    %v980 = vunpack.c.l.b16 %v288
    %v981 = vunpack.c.h.b16 %v288
    %v982 = vunpack.c.l.b16 %v289
    %v983 = vunpack.c.h.b16 %v289
    %v984 = vunpack.c.l.b16 %v290
    %v985 = vunpack.c.h.b16 %v290
    %v986 = vunpack.c.l.b16 %v291
    %v987 = vunpack.c.h.b16 %v291
    %v988 = vunpack.c.l.b16 %v292
    %v989 = vunpack.c.h.b16 %v292
    %v990 = vunpack.c.l.b16 %v293
    %v991 = vunpack.c.h.b16 %v293
    %v992 = vunpack.c.l.b16 %v294
    %v993 = vunpack.c.h.b16 %v294
    %v994 = vunpack.c.l.b16 %v295
    %v995 = vunpack.c.h.b16 %v295
    %v996 = vunpack.c.l.b16 %v296
    %v997 = vunpack.c.h.b16 %v296
    %v998 = vunpack.c.l.b16 %v297
    %v999 = vunpack.c.h.b16 %v297
    %v1000 = vunpack.c.l.b16 %v298
    %v1001 = vunpack.c.h.b16 %v298
    %v1002 = vunpack.c.l.b16 %v299
    %v1003 = vunpack.c.h.b16 %v299
    %v1004 = vunpack.c.l.b16 %v300
    %v1005 = vunpack.c.h.b16 %v300
    %v1006 = vunpack.c.l.b16 %v301
    %v1007 = vunpack.c.h.b16 %v301
    %v1008 = vunpack.c.l.b16 %v302
    %v1009 = vunpack.c.h.b16 %v302
    %v1010 = vunpack.c.l.b16 %v303
    %v1011 = vunpack.c.h.b16 %v303
    %v1012 = vunpack.c.l.b16 %v304
    %v1013 = vunpack.c.h.b16 %v304
    %v1014 = vunpack.c.l.b16 %v305
    %v1015 = vunpack.c.h.b16 %v305
    %v1016 = vunpack.c.l.b16 %v306
    %v1017 = vunpack.c.h.b16 %v306
    %v1018 = vunpack.c.l.b16 %v307
    %v1019 = vunpack.c.h.b16 %v307
    %v1020 = vunpack.c.l.b16 %v308
    %v1021 = vunpack.c.h.b16 %v308
    %v1022 = vunpack.c.l.b16 %v309
    %v1023 = vunpack.c.h.b16 %v309
    %v1024 = vunpack.c.l.b16 %v310
    %v1025 = vunpack.c.h.b16 %v310
    %v1026 = vunpack.c.l.b16 %v311
    %v1027 = vunpack.c.h.b16 %v311
    %v1028 = vunpack.c.l.b16 %v312
    %v1029 = vunpack.c.h.b16 %v312
    %v1030 = vunpack.c.l.b16 %v313
    %v1031 = vunpack.c.h.b16 %v313
    %v1032 = vunpack.c.l.b16 %v314
    %v1033 = vunpack.c.h.b16 %v314
    %v1034 = vunpack.c.l.b16 %v315
    %v1035 = vunpack.c.h.b16 %v315
    %v1036 = vunpack.c.l.b16 %v316
    %v1037 = vunpack.c.h.b16 %v316
    %v1038 = vunpack.c.l.b16 %v317
    %v1039 = vunpack.c.h.b16 %v317
    %v1040 = vunpack.c.l.b16 %v318
    %v1041 = vunpack.c.h.b16 %v318
    %v1042 = vunpack.c.l.b16 %v319
    %v1043 = vunpack.c.h.b16 %v319
    %v1044 = vunpack.c.l.b16 %v320
    %v1045 = vunpack.c.h.b16 %v320
    %v1046 = vunpack.c.l.b16 %v321
    %v1047 = vunpack.c.h.b16 %v321
    %v1048 = vunpack.c.l.b16 %v322
    %v1049 = vunpack.c.h.b16 %v322
    %v1050 = vunpack.c.l.b16 %v323
    %v1051 = vunpack.c.h.b16 %v323
    %v1052 = vunpack.c.l.b16 %v324
    %v1053 = vunpack.c.h.b16 %v324
    %v1054 = vunpack.c.l.b16 %v325
    %v1055 = vunpack.c.h.b16 %v325
    %v1056 = vpack.c.b16 %v612, %v608
    %v1057 = vpack.c.b16 %v613, %v609
    %v1058 = vpack.c.b16 %v614, %v610
    %v1059 = vpack.c.b16 %v615, %v611
    %v1060 = vpack.c.b16 %v620, %v616
    %v1061 = vpack.c.b16 %v621, %v617
    %v1062 = vpack.c.b16 %v622, %v618
    %v1063 = vpack.c.b16 %v623, %v619
    %v1064 = vpack.c.b16 %v628, %v624
    %v1065 = vpack.c.b16 %v629, %v625
    %v1066 = vpack.c.b16 %v630, %v626
    %v1067 = vpack.c.b16 %v631, %v627
    %v1068 = vpack.c.b16 %v636, %v632
    %v1069 = vpack.c.b16 %v637, %v633
    %v1070 = vpack.c.b16 %v638, %v634
    %v1071 = vpack.c.b16 %v639, %v635
    %v1072 = vpack.c.b16 %v644, %v640
    %v1073 = vpack.c.b16 %v645, %v641
    %v1074 = vpack.c.b16 %v646, %v642
    %v1075 = vpack.c.b16 %v647, %v643
    %v1076 = vpack.c.b16 %v652, %v648
    %v1077 = vpack.c.b16 %v653, %v649
    %v1078 = vpack.c.b16 %v654, %v650
    %v1079 = vpack.c.b16 %v655, %v651
    %v1080 = vpack.c.b16 %v660, %v656
    %v1081 = vpack.c.b16 %v661, %v657
    %v1082 = vpack.c.b16 %v662, %v658
    %v1083 = vpack.c.b16 %v663, %v659
    %v1084 = vpack.c.b16 %v668, %v664
    %v1085 = vpack.c.b16 %v669, %v665
    %v1086 = vpack.c.b16 %v670, %v666
    %v1087 = vpack.c.b16 %v671, %v667
    %v1088 = vpack.c.b16 %v676, %v672
    %v1089 = vpack.c.b16 %v677, %v673
    %v1090 = vpack.c.b16 %v678, %v674
    %v1091 = vpack.c.b16 %v679, %v675
    %v1092 = vpack.c.b16 %v684, %v680
    %v1093 = vpack.c.b16 %v685, %v681
    %v1094 = vpack.c.b16 %v686, %v682
    %v1095 = vpack.c.b16 %v687, %v683
    %v1096 = vpack.c.b16 %v692, %v688
    %v1097 = vpack.c.b16 %v693, %v689
    %v1098 = vpack.c.b16 %v694, %v690
    %v1099 = vpack.c.b16 %v695, %v691
    %v1100 = vpack.c.b16 %v700, %v696
    %v1101 = vpack.c.b16 %v701, %v697
    %v1102 = vpack.c.b16 %v702, %v698
    %v1103 = vpack.c.b16 %v703, %v699
    %v1104 = vpack.c.b16 %v708, %v704
    %v1105 = vpack.c.b16 %v709, %v705
    %v1106 = vpack.c.b16 %v710, %v706
    %v1107 = vpack.c.b16 %v711, %v707
    %v1108 = vpack.c.b16 %v716, %v712
    %v1109 = vpack.c.b16 %v717, %v713
    %v1110 = vpack.c.b16 %v718, %v714
    %v1111 = vpack.c.b16 %v719, %v715
    %v1112 = vpack.c.b16 %v724, %v720
    %v1113 = vpack.c.b16 %v725, %v721
    %v1114 = vpack.c.b16 %v726, %v722
    %v1115 = vpack.c.b16 %v727, %v723
    %v1116 = vpack.c.b16 %v732, %v728
    %v1117 = vpack.c.b16 %v733, %v729
    %v1118 = vpack.c.b16 %v734, %v730
    %v1119 = vpack.c.b16 %v735, %v731
    %v1120 = vpack.c.b16 %v740, %v736
    %v1121 = vpack.c.b16 %v741, %v737
    %v1122 = vpack.c.b16 %v742, %v738
    %v1123 = vpack.c.b16 %v743, %v739
    %v1124 = vpack.c.b16 %v748, %v744
    %v1125 = vpack.c.b16 %v749, %v745
    %v1126 = vpack.c.b16 %v750, %v746
    %v1127 = vpack.c.b16 %v751, %v747
    %v1128 = vpack.c.b16 %v756, %v752
    %v1129 = vpack.c.b16 %v757, %v753
    %v1130 = vpack.c.b16 %v758, %v754
    %v1131 = vpack.c.b16 %v759, %v755
    %v1132 = vpack.c.b16 %v764, %v760
    %v1133 = vpack.c.b16 %v765, %v761
    %v1134 = vpack.c.b16 %v766, %v762
    %v1135 = vpack.c.b16 %v767, %v763
    %v1136 = vpack.c.b16 %v772, %v768
    %v1137 = vpack.c.b16 %v773, %v769
    %v1138 = vpack.c.b16 %v774, %v770
    %v1139 = vpack.c.b16 %v775, %v771
    %v1140 = vpack.c.b16 %v780, %v776
    %v1141 = vpack.c.b16 %v781, %v777
    %v1142 = vpack.c.b16 %v782, %v778
    %v1143 = vpack.c.b16 %v783, %v779
    %v1144 = vpack.c.b16 %v788, %v784
    %v1145 = vpack.c.b16 %v789, %v785
    %v1146 = vpack.c.b16 %v790, %v786
    %v1147 = vpack.c.b16 %v791, %v787
    %v1148 = vpack.c.b16 %v796, %v792
    %v1149 = vpack.c.b16 %v797, %v793
    %v1150 = vpack.c.b16 %v798, %v794
    %v1151 = vpack.c.b16 %v799, %v795
    %v1152 = vpack.c.b16 %v804, %v800
    %v1153 = vpack.c.b16 %v805, %v801
    %v1154 = vpack.c.b16 %v806, %v802
    %v1155 = vpack.c.b16 %v807, %v803
    %v1156 = vpack.c.b16 %v812, %v808
    %v1157 = vpack.c.b16 %v813, %v809
    %v1158 = vpack.c.b16 %v814, %v810
    %v1159 = vpack.c.b16 %v815, %v811
    %v1160 = vpack.c.b16 %v820, %v816
    %v1161 = vpack.c.b16 %v821, %v817
    %v1162 = vpack.c.b16 %v822, %v818
    %v1163 = vpack.c.b16 %v823, %v819
    %v1164 = vpack.c.b16 %v828, %v824
    %v1165 = vpack.c.b16 %v829, %v825
    %v1166 = vpack.c.b16 %v830, %v826
    %v1167 = vpack.c.b16 %v831, %v827
    %v1168 = vpack.c.b16 %v836, %v832
    %v1169 = vpack.c.b16 %v837, %v833
    %v1170 = vpack.c.b16 %v838, %v834
    %v1171 = vpack.c.b16 %v839, %v835
    %v1172 = vpack.c.b16 %v844, %v840
    %v1173 = vpack.c.b16 %v845, %v841
    %v1174 = vpack.c.b16 %v846, %v842
    %v1175 = vpack.c.b16 %v847, %v843
    %v1176 = vpack.c.b16 %v852, %v848
    %v1177 = vpack.c.b16 %v853, %v849
    %v1178 = vpack.c.b16 %v854, %v850
    %v1179 = vpack.c.b16 %v855, %v851
    %v1180 = vpack.c.b16 %v860, %v856
    %v1181 = vpack.c.b16 %v861, %v857
    %v1182 = vpack.c.b16 %v862, %v858
    %v1183 = vpack.c.b16 %v863, %v859
    %v1184 = vpack.c.b16 %v868, %v864
    %v1185 = vpack.c.b16 %v869, %v865
    %v1186 = vpack.c.b16 %v870, %v866
    %v1187 = vpack.c.b16 %v871, %v867
    %v1188 = vpack.c.b16 %v876, %v872
    %v1189 = vpack.c.b16 %v877, %v873
    %v1190 = vpack.c.b16 %v878, %v874
    %v1191 = vpack.c.b16 %v879, %v875
    %v1192 = vpack.c.b16 %v884, %v880
    %v1193 = vpack.c.b16 %v885, %v881
    %v1194 = vpack.c.b16 %v886, %v882
    %v1195 = vpack.c.b16 %v887, %v883
    %v1196 = vpack.c.b16 %v892, %v888
    %v1197 = vpack.c.b16 %v893, %v889
    %v1198 = vpack.c.b16 %v894, %v890
    %v1199 = vpack.c.b16 %v895, %v891
    %v1200 = vpack.c.b16 %v900, %v896
    %v1201 = vpack.c.b16 %v901, %v897
    %v1202 = vpack.c.b16 %v902, %v898
    %v1203 = vpack.c.b16 %v903, %v899
    %v1204 = vpack.c.b16 %v908, %v904
    %v1205 = vpack.c.b16 %v909, %v905
    %v1206 = vpack.c.b16 %v910, %v906
    %v1207 = vpack.c.b16 %v911, %v907
    %v1208 = vpack.c.b16 %v916, %v912
    %v1209 = vpack.c.b16 %v917, %v913
    %v1210 = vpack.c.b16 %v918, %v914
    %v1211 = vpack.c.b16 %v919, %v915
    %v1212 = vpack.c.b16 %v924, %v920
    %v1213 = vpack.c.b16 %v925, %v921
    %v1214 = vpack.c.b16 %v926, %v922
    %v1215 = vpack.c.b16 %v927, %v923
    %v1216 = vpack.c.b16 %v932, %v928
    %v1217 = vpack.c.b16 %v933, %v929
    %v1218 = vpack.c.b16 %v934, %v930
    %v1219 = vpack.c.b16 %v935, %v931
    %v1220 = vpack.c.b16 %v940, %v936
    %v1221 = vpack.c.b16 %v941, %v937
    %v1222 = vpack.c.b16 %v942, %v938
    %v1223 = vpack.c.b16 %v943, %v939
    %v1224 = vpack.c.b16 %v948, %v944
    %v1225 = vpack.c.b16 %v949, %v945
    %v1226 = vpack.c.b16 %v950, %v946
    %v1227 = vpack.c.b16 %v951, %v947
    %v1228 = vpack.c.b16 %v956, %v952
    %v1229 = vpack.c.b16 %v957, %v953
    %v1230 = vpack.c.b16 %v958, %v954
    %v1231 = vpack.c.b16 %v959, %v955
    %v1232 = vpack.c.b16 %v964, %v960
    %v1233 = vpack.c.b16 %v965, %v961
    %v1234 = vpack.c.b16 %v966, %v962
    %v1235 = vpack.c.b16 %v967, %v963
    %v1236 = vpack.c.b16 %v972, %v968
    %v1237 = vpack.c.b16 %v973, %v969
    %v1238 = vpack.c.b16 %v974, %v970
    %v1239 = vpack.c.b16 %v975, %v971
    %v1240 = vpack.c.b16 %v980, %v976
    %v1241 = vpack.c.b16 %v981, %v977
    %v1242 = vpack.c.b16 %v982, %v978
    %v1243 = vpack.c.b16 %v983, %v979
    %v1244 = vpack.c.b16 %v988, %v984
    %v1245 = vpack.c.b16 %v989, %v985
    %v1246 = vpack.c.b16 %v990, %v986
    %v1247 = vpack.c.b16 %v991, %v987
    %v1248 = vpack.c.b16 %v996, %v992
    %v1249 = vpack.c.b16 %v997, %v993
    %v1250 = vpack.c.b16 %v998, %v994
    %v1251 = vpack.c.b16 %v999, %v995
    %v1252 = vpack.c.b16 %v1004, %v1000
    %v1253 = vpack.c.b16 %v1005, %v1001
    %v1254 = vpack.c.b16 %v1006, %v1002
    %v1255 = vpack.c.b16 %v1007, %v1003
    %v1256 = vpack.c.b16 %v1012, %v1008
    %v1257 = vpack.c.b16 %v1013, %v1009
    %v1258 = vpack.c.b16 %v1014, %v1010
    %v1259 = vpack.c.b16 %v1015, %v1011
    %v1260 = vpack.c.b16 %v1020, %v1016
    %v1261 = vpack.c.b16 %v1021, %v1017
    %v1262 = vpack.c.b16 %v1022, %v1018
    %v1263 = vpack.c.b16 %v1023, %v1019
    %v1264 = vpack.c.b16 %v1028, %v1024
    %v1265 = vpack.c.b16 %v1029, %v1025
    %v1266 = vpack.c.b16 %v1030, %v1026
    %v1267 = vpack.c.b16 %v1031, %v1027
    %v1268 = vpack.c.b16 %v1036, %v1032
    %v1269 = vpack.c.b16 %v1037, %v1033
    %v1270 = vpack.c.b16 %v1038, %v1034
    %v1271 = vpack.c.b16 %v1039, %v1035
    %v1272 = vpack.c.b16 %v1044, %v1040
    %v1273 = vpack.c.b16 %v1045, %v1041
    %v1274 = vpack.c.b16 %v1046, %v1042
    %v1275 = vpack.c.b16 %v1047, %v1043
    %v1276 = vpack.c.b16 %v1052, %v1048
    %v1277 = vpack.c.b16 %v1053, %v1049
    %v1278 = vpack.c.b16 %v1054, %v1050
    %v1279 = vpack.c.b16 %v1055, %v1051
    %1504 = vmatprep.subr.bf16.mxu0 %v1085
    %1505 = vmatpush1.bf16.msra.mxu0 %v1084
    %1506 = vmatprep.subr.bf16.mxu0 %v1081
    %1507 = vmatpush1.bf16.msra.mxu0 %v1080
    %1508 = vmatprep.subr.bf16.mxu0 %v1077
    %1509 = vmatpush1.bf16.msra.mxu0 %v1076
    %1510 = vmatprep.subr.bf16.mxu0 %v1073
    %1511 = vmatpush1.bf16.msra.mxu0 %v1072
    %1512 = vmatprep.subr.bf16.mxu0 %v1069
    %1513 = vmatpush1.bf16.msra.mxu0 %v1068
    %1514 = vmatprep.subr.bf16.mxu0 %v1065
    %1515 = vmatpush1.bf16.msra.mxu0 %v1064
    %1516 = vmatprep.subr.bf16.mxu0 %v1061
    %1517 = vmatpush1.bf16.msra.mxu0 %v1060
    %1518 = vmatprep.subr.bf16.mxu0 %v1057
    %1519 = vmatpush1.bf16.msra.mxu0 %v1056
    %1520 = vmatprep.subr.bf16.mxu0 %v1117
    %1521 = vmatpush2.bf16.msra.mxu0 %v1116
    %1522 = vmatprep.subr.bf16.mxu0 %v1113
    %1523 = vmatpush2.bf16.msra.mxu0 %v1112
    %1524 = vmatprep.subr.bf16.mxu0 %v1109
    %1525 = vmatpush2.bf16.msra.mxu0 %v1108
    %1526 = vmatprep.subr.bf16.mxu0 %v1105
    %1527 = vmatpush2.bf16.msra.mxu0 %v1104
    %1528 = vmatprep.subr.bf16.mxu0 %v1101
    %1529 = vmatpush2.bf16.msra.mxu0 %v1100
    %1530 = vmatprep.subr.bf16.mxu0 %v1097
    %1531 = vmatpush2.bf16.msra.mxu0 %v1096
    %1532 = vmatprep.subr.bf16.mxu0 %v1093
    %1533 = vmatpush2.bf16.msra.mxu0 %v1092
    %1534 = vmatprep.subr.bf16.mxu0 %v1089
    %1535 = vmatpush2.bf16.msra.mxu0 %v1088
    %1536 = vmatprep.mubr.bf16.mxu0 %v371
    %1537 = vmatmul.mubr.bf16.gmra.mxu0 %v370
    %v1538 = vpop.f32.mrf.mxu0
    %v1539 = vadd.f32 %v331, %v1538
    %v1540 = vpop.f32.mrf.mxu0
    %v1541 = vadd.f32 %v335, %v1540
    %v1542 = vpop.f32.mrf.mxu0
    %v1543 = vadd.f32 %v331, %v1542
    %v1544 = vpop.f32.mrf.mxu0
    %v1545 = vadd.f32 %v335, %v1544
    %1546 = vdwg.mxu0
    %1547 = vmatprep.subr.bf16.mxu0 %v1149
    %1548 = vmatpush1.bf16.msra.mxu0 %v1148
    %1549 = vmatprep.subr.bf16.mxu0 %v1145
    %1550 = vmatpush1.bf16.msra.mxu0 %v1144
    %1551 = vmatprep.subr.bf16.mxu0 %v1141
    %1552 = vmatpush1.bf16.msra.mxu0 %v1140
    %1553 = vmatprep.subr.bf16.mxu0 %v1137
    %1554 = vmatpush1.bf16.msra.mxu0 %v1136
    %1555 = vmatprep.subr.bf16.mxu0 %v1133
    %1556 = vmatpush1.bf16.msra.mxu0 %v1132
    %1557 = vmatprep.subr.bf16.mxu0 %v1129
    %1558 = vmatpush1.bf16.msra.mxu0 %v1128
    %1559 = vmatprep.subr.bf16.mxu0 %v1125
    %1560 = vmatpush1.bf16.msra.mxu0 %v1124
    %1561 = vmatprep.subr.bf16.mxu0 %v1121
    %1562 = vmatpush1.bf16.msra.mxu0 %v1120
    %1563 = vmatprep.subr.bf16.mxu0 %v1181
    %1564 = vmatpush2.bf16.msra.mxu0 %v1180
    %1565 = vmatprep.subr.bf16.mxu0 %v1177
    %1566 = vmatpush2.bf16.msra.mxu0 %v1176
    %1567 = vmatprep.subr.bf16.mxu0 %v1173
    %1568 = vmatpush2.bf16.msra.mxu0 %v1172
    %1569 = vmatprep.subr.bf16.mxu0 %v1169
    %1570 = vmatpush2.bf16.msra.mxu0 %v1168
    %1571 = vmatprep.subr.bf16.mxu0 %v1165
    %1572 = vmatpush2.bf16.msra.mxu0 %v1164
    %1573 = vmatprep.subr.bf16.mxu0 %v1161
    %1574 = vmatpush2.bf16.msra.mxu0 %v1160
    %1575 = vmatprep.subr.bf16.mxu0 %v1157
    %1576 = vmatpush2.bf16.msra.mxu0 %v1156
    %1577 = vmatprep.subr.bf16.mxu0 %v1153
    %1578 = vmatpush2.bf16.msra.mxu0 %v1152
    %1579 = vmatprep.mubr.bf16.mxu0 %v373
    %1580 = vmatmul.mubr.bf16.gmra.mxu0 %v372
    %v1581 = vpop.f32.mrf.mxu0
    %v1582 = vadd.f32 %v1539, %v1581
    %v1583 = vpop.f32.mrf.mxu0
    %v1584 = vadd.f32 %v1541, %v1583
    %v1585 = vpop.f32.mrf.mxu0
    %v1586 = vadd.f32 %v1543, %v1585
    %v1587 = vpop.f32.mrf.mxu0
    %v1588 = vadd.f32 %v1545, %v1587
    %1589 = vdwg.mxu0
    %1590 = vmatprep.subr.bf16.mxu0 %v1213
    %1591 = vmatpush1.bf16.msra.mxu0 %v1212
    %1592 = vmatprep.subr.bf16.mxu0 %v1209
    %1593 = vmatpush1.bf16.msra.mxu0 %v1208
    %1594 = vmatprep.subr.bf16.mxu0 %v1205
    %1595 = vmatpush1.bf16.msra.mxu0 %v1204
    %1596 = vmatprep.subr.bf16.mxu0 %v1201
    %1597 = vmatpush1.bf16.msra.mxu0 %v1200
    %1598 = vmatprep.subr.bf16.mxu0 %v1197
    %1599 = vmatpush1.bf16.msra.mxu0 %v1196
    %1600 = vmatprep.subr.bf16.mxu0 %v1193
    %1601 = vmatpush1.bf16.msra.mxu0 %v1192
    %1602 = vmatprep.subr.bf16.mxu0 %v1189
    %1603 = vmatpush1.bf16.msra.mxu0 %v1188
    %1604 = vmatprep.subr.bf16.mxu0 %v1185
    %1605 = vmatpush1.bf16.msra.mxu0 %v1184
    %1606 = vmatprep.subr.bf16.mxu0 %v1245
    %1607 = vmatpush2.bf16.msra.mxu0 %v1244
    %1608 = vmatprep.subr.bf16.mxu0 %v1241
    %1609 = vmatpush2.bf16.msra.mxu0 %v1240
    %1610 = vmatprep.subr.bf16.mxu0 %v1237
    %1611 = vmatpush2.bf16.msra.mxu0 %v1236
    %1612 = vmatprep.subr.bf16.mxu0 %v1233
    %1613 = vmatpush2.bf16.msra.mxu0 %v1232
    %1614 = vmatprep.subr.bf16.mxu0 %v1229
    %1615 = vmatpush2.bf16.msra.mxu0 %v1228
    %1616 = vmatprep.subr.bf16.mxu0 %v1225
    %1617 = vmatpush2.bf16.msra.mxu0 %v1224
    %1618 = vmatprep.subr.bf16.mxu0 %v1221
    %1619 = vmatpush2.bf16.msra.mxu0 %v1220
    %1620 = vmatprep.subr.bf16.mxu0 %v1217
    %1621 = vmatpush2.bf16.msra.mxu0 %v1216
    %1622 = vmatprep.mubr.bf16.mxu0 %v375
    %1623 = vmatmul.mubr.bf16.gmra.mxu0 %v374
    %v1624 = vpop.f32.mrf.mxu0
    %v1625 = vadd.f32 %v1582, %v1624
    %v1626 = vpop.f32.mrf.mxu0
    %v1627 = vadd.f32 %v1584, %v1626
    %v1628 = vpop.f32.mrf.mxu0
    %v1629 = vadd.f32 %v1586, %v1628
    %v1630 = vpop.f32.mrf.mxu0
    %v1631 = vadd.f32 %v1588, %v1630
    %1632 = vdwg.mxu0
    %1633 = vmatprep.subr.bf16.mxu0 %v1277
    %1634 = vmatpush1.bf16.msra.mxu0 %v1276
    %1635 = vmatprep.subr.bf16.mxu0 %v1273
    %1636 = vmatpush1.bf16.msra.mxu0 %v1272
    %1637 = vmatprep.subr.bf16.mxu0 %v1269
    %1638 = vmatpush1.bf16.msra.mxu0 %v1268
    %1639 = vmatprep.subr.bf16.mxu0 %v1265
    %1640 = vmatpush1.bf16.msra.mxu0 %v1264
    %1641 = vmatprep.subr.bf16.mxu0 %v1261
    %1642 = vmatpush1.bf16.msra.mxu0 %v1260
    %1643 = vmatprep.subr.bf16.mxu0 %v1257
    %1644 = vmatpush1.bf16.msra.mxu0 %v1256
    %1645 = vmatprep.subr.bf16.mxu0 %v1253
    %1646 = vmatpush1.bf16.msra.mxu0 %v1252
    %1647 = vmatprep.subr.bf16.mxu0 %v1249
    %1648 = vmatpush1.bf16.msra.mxu0 %v1248
    %1649 = vmatprep.subr.bf16.mxu0 0
    %1650 = vmatpush2.bf16.msra.mxu0 0
    %1651 = vmatprep.subr.bf16.mxu0 0
    %1652 = vmatpush2.bf16.msra.mxu0 0
    %1653 = vmatprep.subr.bf16.mxu0 0
    %1654 = vmatpush2.bf16.msra.mxu0 0
    %1655 = vmatprep.subr.bf16.mxu0 0
    %1656 = vmatpush2.bf16.msra.mxu0 0
    %1657 = vmatprep.subr.bf16.mxu0 0
    %1658 = vmatpush2.bf16.msra.mxu0 0
    %1659 = vmatprep.subr.bf16.mxu0 0
    %1660 = vmatpush2.bf16.msra.mxu0 0
    %1661 = vmatprep.subr.bf16.mxu0 0
    %1662 = vmatpush2.bf16.msra.mxu0 0
    %1663 = vmatprep.subr.bf16.mxu0 0
    %1664 = vmatpush2.bf16.msra.mxu0 0
    %1665 = vmatprep.mubr.bf16.mxu0 0
    %1666 = vmatmul.mubr.bf16.gmra.mxu0 %v376
    %v1667 = vpop.f32.mrf.mxu0
    %v1668 = vadd.f32 %v1625, %v1667
    %v1669 = vpop.f32.mrf.mxu0
    %v1670 = vadd.f32 %v1627, %v1669
    %v1671 = vpop.f32.mrf.mxu0
    %v1672 = vadd.f32 %v1629, %v1671
    %v1673 = vpop.f32.mrf.mxu0
    %v1674 = vadd.f32 %v1631, %v1673
    %1675 = vdwg.mxu0
    %1676 = vmatprep.subr.bf16.mxu0 %v1087
    %1677 = vmatpush1.bf16.msra.mxu0 %v1086
    %1678 = vmatprep.subr.bf16.mxu0 %v1083
    %1679 = vmatpush1.bf16.msra.mxu0 %v1082
    %1680 = vmatprep.subr.bf16.mxu0 %v1079
    %1681 = vmatpush1.bf16.msra.mxu0 %v1078
    %1682 = vmatprep.subr.bf16.mxu0 %v1075
    %1683 = vmatpush1.bf16.msra.mxu0 %v1074
    %1684 = vmatprep.subr.bf16.mxu0 %v1071
    %1685 = vmatpush1.bf16.msra.mxu0 %v1070
    %1686 = vmatprep.subr.bf16.mxu0 %v1067
    %1687 = vmatpush1.bf16.msra.mxu0 %v1066
    %1688 = vmatprep.subr.bf16.mxu0 %v1063
    %1689 = vmatpush1.bf16.msra.mxu0 %v1062
    %1690 = vmatprep.subr.bf16.mxu0 %v1059
    %1691 = vmatpush1.bf16.msra.mxu0 %v1058
    %1692 = vmatprep.subr.bf16.mxu0 %v1119
    %1693 = vmatpush2.bf16.msra.mxu0 %v1118
    %1694 = vmatprep.subr.bf16.mxu0 %v1115
    %1695 = vmatpush2.bf16.msra.mxu0 %v1114
    %1696 = vmatprep.subr.bf16.mxu0 %v1111
    %1697 = vmatpush2.bf16.msra.mxu0 %v1110
    %1698 = vmatprep.subr.bf16.mxu0 %v1107
    %1699 = vmatpush2.bf16.msra.mxu0 %v1106
    %1700 = vmatprep.subr.bf16.mxu0 %v1103
    %1701 = vmatpush2.bf16.msra.mxu0 %v1102
    %1702 = vmatprep.subr.bf16.mxu0 %v1099
    %1703 = vmatpush2.bf16.msra.mxu0 %v1098
    %1704 = vmatprep.subr.bf16.mxu0 %v1095
    %1705 = vmatpush2.bf16.msra.mxu0 %v1094
    %1706 = vmatprep.subr.bf16.mxu0 %v1091
    %1707 = vmatpush2.bf16.msra.mxu0 %v1090
    %1708 = vmatprep.mubr.bf16.mxu0 %v371
    %1709 = vmatmul.mubr.bf16.gmra.mxu0 %v370
    %v1710 = vpop.f32.mrf.mxu0
    %v1711 = vadd.f32 %v339, %v1710
    %v1712 = vpop.f32.mrf.mxu0
    %v1713 = vadd.f32 %v343, %v1712
    %v1714 = vpop.f32.mrf.mxu0
    %v1715 = vadd.f32 %v339, %v1714
    %v1716 = vpop.f32.mrf.mxu0
    %v1717 = vadd.f32 %v343, %v1716
    %1718 = vdwg.mxu0
    %1719 = vmatprep.subr.bf16.mxu0 %v1151
    %1720 = vmatpush1.bf16.msra.mxu0 %v1150
    %1721 = vmatprep.subr.bf16.mxu0 %v1147
    %1722 = vmatpush1.bf16.msra.mxu0 %v1146
    %1723 = vmatprep.subr.bf16.mxu0 %v1143
    %1724 = vmatpush1.bf16.msra.mxu0 %v1142
    %1725 = vmatprep.subr.bf16.mxu0 %v1139
    %1726 = vmatpush1.bf16.msra.mxu0 %v1138
    %1727 = vmatprep.subr.bf16.mxu0 %v1135
    %1728 = vmatpush1.bf16.msra.mxu0 %v1134
    %1729 = vmatprep.subr.bf16.mxu0 %v1131
    %1730 = vmatpush1.bf16.msra.mxu0 %v1130
    %1731 = vmatprep.subr.bf16.mxu0 %v1127
    %1732 = vmatpush1.bf16.msra.mxu0 %v1126
    %1733 = vmatprep.subr.bf16.mxu0 %v1123
    %1734 = vmatpush1.bf16.msra.mxu0 %v1122
    %1735 = vmatprep.subr.bf16.mxu0 %v1183
    %1736 = vmatpush2.bf16.msra.mxu0 %v1182
    %1737 = vmatprep.subr.bf16.mxu0 %v1179
    %1738 = vmatpush2.bf16.msra.mxu0 %v1178
    %1739 = vmatprep.subr.bf16.mxu0 %v1175
    %1740 = vmatpush2.bf16.msra.mxu0 %v1174
    %1741 = vmatprep.subr.bf16.mxu0 %v1171
    %1742 = vmatpush2.bf16.msra.mxu0 %v1170
    %1743 = vmatprep.subr.bf16.mxu0 %v1167
    %1744 = vmatpush2.bf16.msra.mxu0 %v1166
    %1745 = vmatprep.subr.bf16.mxu0 %v1163
    %1746 = vmatpush2.bf16.msra.mxu0 %v1162
    %1747 = vmatprep.subr.bf16.mxu0 %v1159
    %1748 = vmatpush2.bf16.msra.mxu0 %v1158
    %1749 = vmatprep.subr.bf16.mxu0 %v1155
    %1750 = vmatpush2.bf16.msra.mxu0 %v1154
    %1751 = vmatprep.mubr.bf16.mxu0 %v373
    %1752 = vmatmul.mubr.bf16.gmra.mxu0 %v372
    %v1753 = vpop.f32.mrf.mxu0
    %v1754 = vadd.f32 %v1711, %v1753
    %v1755 = vpop.f32.mrf.mxu0
    %v1756 = vadd.f32 %v1713, %v1755
    %v1757 = vpop.f32.mrf.mxu0
    %v1758 = vadd.f32 %v1715, %v1757
    %v1759 = vpop.f32.mrf.mxu0
    %v1760 = vadd.f32 %v1717, %v1759
    %1761 = vdwg.mxu0
    %1762 = vmatprep.subr.bf16.mxu0 %v1215
    %1763 = vmatpush1.bf16.msra.mxu0 %v1214
    %1764 = vmatprep.subr.bf16.mxu0 %v1211
    %1765 = vmatpush1.bf16.msra.mxu0 %v1210
    %1766 = vmatprep.subr.bf16.mxu0 %v1207
    %1767 = vmatpush1.bf16.msra.mxu0 %v1206
    %1768 = vmatprep.subr.bf16.mxu0 %v1203
    %1769 = vmatpush1.bf16.msra.mxu0 %v1202
    %1770 = vmatprep.subr.bf16.mxu0 %v1199
    %1771 = vmatpush1.bf16.msra.mxu0 %v1198
    %1772 = vmatprep.subr.bf16.mxu0 %v1195
    %1773 = vmatpush1.bf16.msra.mxu0 %v1194
    %1774 = vmatprep.subr.bf16.mxu0 %v1191
    %1775 = vmatpush1.bf16.msra.mxu0 %v1190
    %1776 = vmatprep.subr.bf16.mxu0 %v1187
    %1777 = vmatpush1.bf16.msra.mxu0 %v1186
    %1778 = vmatprep.subr.bf16.mxu0 %v1247
    %1779 = vmatpush2.bf16.msra.mxu0 %v1246
    %1780 = vmatprep.subr.bf16.mxu0 %v1243
    %1781 = vmatpush2.bf16.msra.mxu0 %v1242
    %1782 = vmatprep.subr.bf16.mxu0 %v1239
    %1783 = vmatpush2.bf16.msra.mxu0 %v1238
    %1784 = vmatprep.subr.bf16.mxu0 %v1235
    %1785 = vmatpush2.bf16.msra.mxu0 %v1234
    %1786 = vmatprep.subr.bf16.mxu0 %v1231
    %1787 = vmatpush2.bf16.msra.mxu0 %v1230
    %1788 = vmatprep.subr.bf16.mxu0 %v1227
    %1789 = vmatpush2.bf16.msra.mxu0 %v1226
    %1790 = vmatprep.subr.bf16.mxu0 %v1223
    %1791 = vmatpush2.bf16.msra.mxu0 %v1222
    %1792 = vmatprep.subr.bf16.mxu0 %v1219
    %1793 = vmatpush2.bf16.msra.mxu0 %v1218
    %1794 = vmatprep.mubr.bf16.mxu0 %v375
    %1795 = vmatmul.mubr.bf16.gmra.mxu0 %v374
    %v1796 = vpop.f32.mrf.mxu0
    %v1797 = vadd.f32 %v1754, %v1796
    %v1798 = vpop.f32.mrf.mxu0
    %v1799 = vadd.f32 %v1756, %v1798
    %v1800 = vpop.f32.mrf.mxu0
    %v1801 = vadd.f32 %v1758, %v1800
    %v1802 = vpop.f32.mrf.mxu0
    %v1803 = vadd.f32 %v1760, %v1802
    %1804 = vdwg.mxu0
    %1805 = vmatprep.subr.bf16.mxu0 %v1279
    %1806 = vmatpush1.bf16.msra.mxu0 %v1278
    %1807 = vmatprep.subr.bf16.mxu0 %v1275
    %1808 = vmatpush1.bf16.msra.mxu0 %v1274
    %1809 = vmatprep.subr.bf16.mxu0 %v1271
    %1810 = vmatpush1.bf16.msra.mxu0 %v1270
    %1811 = vmatprep.subr.bf16.mxu0 %v1267
    %1812 = vmatpush1.bf16.msra.mxu0 %v1266
    %1813 = vmatprep.subr.bf16.mxu0 %v1263
    %1814 = vmatpush1.bf16.msra.mxu0 %v1262
    %1815 = vmatprep.subr.bf16.mxu0 %v1259
    %1816 = vmatpush1.bf16.msra.mxu0 %v1258
    %1817 = vmatprep.subr.bf16.mxu0 %v1255
    %1818 = vmatpush1.bf16.msra.mxu0 %v1254
    %1819 = vmatprep.subr.bf16.mxu0 %v1251
    %1820 = vmatpush1.bf16.msra.mxu0 %v1250
    %1821 = vmatprep.subr.bf16.mxu0 0
    %1822 = vmatpush2.bf16.msra.mxu0 0
    %1823 = vmatprep.subr.bf16.mxu0 0
    %1824 = vmatpush2.bf16.msra.mxu0 0
    %1825 = vmatprep.subr.bf16.mxu0 0
    %1826 = vmatpush2.bf16.msra.mxu0 0
    %1827 = vmatprep.subr.bf16.mxu0 0
    %1828 = vmatpush2.bf16.msra.mxu0 0
    %1829 = vmatprep.subr.bf16.mxu0 0
    %1830 = vmatpush2.bf16.msra.mxu0 0
    %1831 = vmatprep.subr.bf16.mxu0 0
    %1832 = vmatpush2.bf16.msra.mxu0 0
    %1833 = vmatprep.subr.bf16.mxu0 0
    %1834 = vmatpush2.bf16.msra.mxu0 0
    %1835 = vmatprep.subr.bf16.mxu0 0
    %1836 = vmatpush2.bf16.msra.mxu0 0
    %1837 = vmatprep.mubr.bf16.mxu0 0
    %1838 = vmatmul.mubr.bf16.gmra.mxu0 %v376
    %v1839 = vpop.f32.mrf.mxu0
    %v1840 = vadd.f32 %v1797, %v1839
    %v1841 = vpop.f32.mrf.mxu0
    %v1842 = vadd.f32 %v1799, %v1841
    %v1843 = vpop.f32.mrf.mxu0
    %v1844 = vadd.f32 %v1801, %v1843
    %v1845 = vpop.f32.mrf.mxu0
    %v1846 = vadd.f32 %v1803, %v1845
    %1847 = vdwg.mxu0
    %v1848 = vmax.f32 %v1668, 0.0
    %v1849 = vmax.f32 %v1670, 0.0
    %v1850 = vmax.f32 %v1840, 0.0
    %v1851 = vmax.f32 %v1842, 0.0
    %v1852 = vmax.f32 %v1672, 0.0
    %v1853 = vmax.f32 %v1674, 0.0
    %v1854 = vmax.f32 %v1844, 0.0
    %v1855 = vmax.f32 %v1846, 0.0
    %v1856 = vpack.c.bf16 %v1852, %v1848
    %v1857 = vpack.c.bf16 %v1853, %v1849
    %v1858 = vpack.c.bf16 %v1854, %v1850
    %v1859 = vpack.c.bf16 %v1855, %v1851
    %v1860 = vld [vmem:[#allocation8] sm:$0xff]
    %v1861 = vld [vmem:[#allocation8 + $0x8] sm:$0xff]
    %v1862 = vld [vmem:[#allocation8 + $0x10] sm:$0xff]
    %v1863 = vld [vmem:[#allocation8 + $0x18] sm:$0xff]
    %v1864 = vld [vmem:[#allocation8 + $0x20] sm:$0xff]
    %v1865 = vld [vmem:[#allocation8 + $0x28] sm:$0xff]
    %v1866 = vld [vmem:[#allocation8 + $0x30] sm:$0xff]
    %v1867 = vld [vmem:[#allocation8 + $0x38] sm:$0xff]
    %v1868 = vld [vmem:[#allocation8 + $0x40] sm:$0xff]
    %v1869 = vld [vmem:[#allocation8 + $0x48] sm:$0xff]
    %v1870 = vld [vmem:[#allocation8 + $0x50] sm:$0xff]
    %v1871 = vld [vmem:[#allocation8 + $0x58] sm:$0xff]
    %v1872 = vld [vmem:[#allocation8 + $0x60] sm:$0xff]
    %v1873 = vld [vmem:[#allocation8 + $0x68] sm:$0xff]
    %v1874 = vld [vmem:[#allocation8 + $0x70] sm:$0xff]
    %v1875 = vld [vmem:[#allocation8 + $0x78] sm:$0xff]
    %v1876 = vld [vmem:[#allocation8 + $0x80] sm:$0xff]
    %v1877 = vld [vmem:[#allocation8 + $0x88] sm:$0xff]
    %v1878 = vld [vmem:[#allocation8 + $0x90] sm:$0xff]
    %v1879 = vld [vmem:[#allocation8 + $0x98] sm:$0xff]
    %v1880 = vld [vmem:[#allocation8 + $0xa0] sm:$0xff]
    %v1881 = vld [vmem:[#allocation8 + $0xa8] sm:$0xff]
    %v1882 = vld [vmem:[#allocation8 + $0xb0] sm:$0xff]
    %v1883 = vld [vmem:[#allocation8 + $0xb8] sm:$0xff]
    %v1884 = vld [vmem:[#allocation8 + $0xc0] sm:$0xff]
    %v1885 = vld [vmem:[#allocation8 + $0xc8] sm:$0xff]
    %v1886 = vld [vmem:[#allocation8 + $0xd0] sm:$0xff]
    %v1887 = vld [vmem:[#allocation8 + $0xd8] sm:$0xff]
    %v1888 = vld [vmem:[#allocation8 + $0xe0] sm:$0xff]
    %v1889 = vld [vmem:[#allocation8 + $0xe8] sm:$0xff]
    %v1890 = vld [vmem:[#allocation8 + $0xf0] sm:$0xff]
    %v1891 = vld [vmem:[#allocation8 + $0xf8] sm:$0xff]
    %v1892 = vld [vmem:[#allocation8 + $0x100] sm:$0xff]
    %v1893 = vld [vmem:[#allocation8 + $0x108] sm:$0xff]
    %v1894 = vld [vmem:[#allocation8 + $0x110] sm:$0xff]
    %v1895 = vld [vmem:[#allocation8 + $0x118] sm:$0xff]
    %v1896 = vld [vmem:[#allocation8 + $0x120] sm:$0xff]
    %v1897 = vld [vmem:[#allocation8 + $0x128] sm:$0xff]
    %v1898 = vld [vmem:[#allocation8 + $0x130] sm:$0xff]
    %v1899 = vld [vmem:[#allocation8 + $0x138] sm:$0xff]
    %v1900 = vld [vmem:[#allocation8 + $0x140] sm:$0xff]
    %v1901 = vld [vmem:[#allocation8 + $0x148] sm:$0xff]
    %v1902 = vld [vmem:[#allocation8 + $0x150] sm:$0xff]
    %v1903 = vld [vmem:[#allocation8 + $0x158] sm:$0xff]
    %v1904 = vld [vmem:[#allocation8 + $0x160] sm:$0xff]
    %v1905 = vld [vmem:[#allocation8 + $0x168] sm:$0xff]
    %v1906 = vld [vmem:[#allocation8 + $0x170] sm:$0xff]
    %v1907 = vld [vmem:[#allocation8 + $0x178] sm:$0xff]
    %v1908 = vld [vmem:[#allocation8 + $0x180] sm:$0xff]
    %v1909 = vld [vmem:[#allocation8 + $0x188] sm:$0xff]
    %v1910 = vld [vmem:[#allocation8 + $0x190] sm:$0xff]
    %v1911 = vld [vmem:[#allocation8 + $0x198] sm:$0xff]
    %v1912 = vld [vmem:[#allocation8 + $0x1a0] sm:$0xff]
    %v1913 = vld [vmem:[#allocation8 + $0x1a8] sm:$0xff]
    %v1914 = vld [vmem:[#allocation8 + $0x1b0] sm:$0xff]
    %v1915 = vld [vmem:[#allocation8 + $0x1b8] sm:$0xff]
    %v1916 = vld [vmem:[#allocation8 + $0x1c0] sm:$0xff]
    %v1917 = vld [vmem:[#allocation8 + $0x1c8] sm:$0xff]
    %v1918 = vld [vmem:[#allocation8 + $0x1d0] sm:$0xff]
    %v1919 = vld [vmem:[#allocation8 + $0x1d8] sm:$0xff]
    %v1920 = vld [vmem:[#allocation8 + $0x1e0] sm:$0xff]
    %v1921 = vld [vmem:[#allocation8 + $0x1e8] sm:$0xff]
    %v1922 = vld [vmem:[#allocation8 + $0x1f0] sm:$0xff]
    %v1923 = vld [vmem:[#allocation8 + $0x1f8] sm:$0xff]
    %v1924 = vld [vmem:[#allocation8 + $0x200] sm:$0xff]
    %v1925 = vld [vmem:[#allocation8 + $0x208] sm:$0xff]
    %v1926 = vld [vmem:[#allocation8 + $0x210] sm:$0xff]
    %v1927 = vld [vmem:[#allocation8 + $0x218] sm:$0xff]
    %v1928 = vld [vmem:[#allocation8 + $0x220] sm:$0xff]
    %v1929 = vld [vmem:[#allocation8 + $0x228] sm:$0xff]
    %v1930 = vld [vmem:[#allocation8 + $0x230] sm:$0xff]
    %v1931 = vld [vmem:[#allocation8 + $0x238] sm:$0xff]
    %v1932 = vld [vmem:[#allocation8 + $0x240] sm:$0xff]
    %v1933 = vld [vmem:[#allocation8 + $0x248] sm:$0xff]
    %v1934 = vld [vmem:[#allocation8 + $0x250] sm:$0xff]
    %v1935 = vld [vmem:[#allocation8 + $0x258] sm:$0xff]
    %v1936 = vld [vmem:[#allocation8 + $0x260] sm:$0xff]
    %v1937 = vld [vmem:[#allocation8 + $0x268] sm:$0xff]
    %v1938 = vld [vmem:[#allocation8 + $0x270] sm:$0xff]
    %v1939 = vld [vmem:[#allocation8 + $0x278] sm:$0xff]
    %v1940 = vld [vmem:[#allocation8 + $0x280] sm:$0xff]
    %v1941 = vld [vmem:[#allocation8 + $0x288] sm:$0xff]
    %v1942 = vld [vmem:[#allocation8 + $0x290] sm:$0xff]
    %v1943 = vld [vmem:[#allocation8 + $0x298] sm:$0xff]
    %v1944 = vld [vmem:[#allocation8 + $0x2a0] sm:$0xff]
    %v1945 = vld [vmem:[#allocation8 + $0x2a8] sm:$0xff]
    %v1946 = vld [vmem:[#allocation8 + $0x2b0] sm:$0xff]
    %v1947 = vld [vmem:[#allocation8 + $0x2b8] sm:$0xff]
    %v1948 = vld [vmem:[#allocation8 + $0x2c0] sm:$0xff]
    %v1949 = vld [vmem:[#allocation8 + $0x2c8] sm:$0xff]
    %v1950 = vld [vmem:[#allocation8 + $0x2d0] sm:$0xff]
    %v1951 = vld [vmem:[#allocation8 + $0x2d8] sm:$0xff]
    %v1952 = vld [vmem:[#allocation8 + $0x2e0] sm:$0xff]
    %v1953 = vld [vmem:[#allocation8 + $0x2e8] sm:$0xff]
    %v1954 = vld [vmem:[#allocation8 + $0x2f0] sm:$0xff]
    %v1955 = vld [vmem:[#allocation8 + $0x2f8] sm:$0xff]
    %v1956 = vld [vmem:[#allocation8 + $0x300] sm:$0xff]
    %v1957 = vld [vmem:[#allocation8 + $0x308] sm:$0xff]
    %v1958 = vld [vmem:[#allocation8 + $0x310] sm:$0xff]
    %v1959 = vld [vmem:[#allocation8 + $0x318] sm:$0xff]
    %v1960 = vld [vmem:[#allocation8 + $0x320] sm:$0xff]
    %v1961 = vld [vmem:[#allocation8 + $0x328] sm:$0xff]
    %v1962 = vld [vmem:[#allocation8 + $0x330] sm:$0xff]
    %v1963 = vld [vmem:[#allocation8 + $0x338] sm:$0xff]
    %v1964 = vld [vmem:[#allocation8 + $0x340] sm:$0xff]
    %v1965 = vld [vmem:[#allocation8 + $0x348] sm:$0xff]
    %v1966 = vld [vmem:[#allocation8 + $0x350] sm:$0xff]
    %v1967 = vld [vmem:[#allocation8 + $0x358] sm:$0xff]
    %v1968 = vld [vmem:[#allocation8 + $0x360] sm:$0xff]
    %v1969 = vld [vmem:[#allocation8 + $0x368] sm:$0xff]
    %v1970 = vld [vmem:[#allocation8 + $0x370] sm:$0xff]
    %v1971 = vld [vmem:[#allocation8 + $0x378] sm:$0xff]
    %v1972 = vld [vmem:[#allocation8 + $0x380] sm:$0xff]
    %v1973 = vld [vmem:[#allocation8 + $0x388] sm:$0xff]
    %v1974 = vld [vmem:[#allocation8 + $0x390] sm:$0xff]
    %v1975 = vld [vmem:[#allocation8 + $0x398] sm:$0xff]
    %v1976 = vld [vmem:[#allocation8 + $0x3a0] sm:$0xff]
    %v1977 = vld [vmem:[#allocation8 + $0x3a8] sm:$0xff]
    %v1978 = vld [vmem:[#allocation8 + $0x3b0] sm:$0xff]
    %v1979 = vld [vmem:[#allocation8 + $0x3b8] sm:$0xff]
    %v1980 = vld [vmem:[#allocation8 + $0x3c0] sm:$0xff]
    %v1981 = vld [vmem:[#allocation8 + $0x3c8] sm:$0xff]
    %v1982 = vld [vmem:[#allocation8 + $0x3d0] sm:$0xff]
    %v1983 = vld [vmem:[#allocation8 + $0x3d8] sm:$0xff]
    %v1984 = vld [vmem:[#allocation8 + $0x3e0] sm:$0xff]
    %v1985 = vld [vmem:[#allocation8 + $0x3e8] sm:$0xff]
    %v1986 = vld [vmem:[#allocation8 + $0x3f0] sm:$0xff]
    %v1987 = vld [vmem:[#allocation8 + $0x3f8] sm:$0xff]
    %v1988 = vld [vmem:[%s4] sm:$0xf]
    %v1990 = vlaneseq
    %v1991 = vshrl.u32 %v1990, 7
    %v1992 = vsub.s32 0, %v1991
    %v1993 = vrot.slane %v1988, %v1992
    %v1994 = vlaneseq
    %v1995 = vshrl.u32 %v1994, 7
    %v1996 = vsub.s32 1, %v1995
    %v1997 = vrot.slane %v1988, %v1996
    %v1998 = vlaneseq
    %v1999 = vshrl.u32 %v1998, 7
    %v2000 = vsub.s32 2, %v1999
    %v2001 = vrot.slane %v1988, %v2000
    %v2002 = vlaneseq
    %v2003 = vshrl.u32 %v2002, 7
    %v2004 = vsub.s32 3, %v2003
    %v2005 = vrot.slane %v1988, %v2004
    %v2138 = vunpack.c.l.b16 %v1860
    %v2139 = vunpack.c.h.b16 %v1860
    %v2140 = vunpack.c.l.b16 %v1861
    %v2141 = vunpack.c.h.b16 %v1861
    %v2142 = vunpack.c.l.b16 %v1862
    %v2143 = vunpack.c.h.b16 %v1862
    %v2144 = vunpack.c.l.b16 %v1863
    %v2145 = vunpack.c.h.b16 %v1863
    %v2146 = vunpack.c.l.b16 %v1864
    %v2147 = vunpack.c.h.b16 %v1864
    %v2148 = vunpack.c.l.b16 %v1865
    %v2149 = vunpack.c.h.b16 %v1865
    %v2150 = vunpack.c.l.b16 %v1866
    %v2151 = vunpack.c.h.b16 %v1866
    %v2152 = vunpack.c.l.b16 %v1867
    %v2153 = vunpack.c.h.b16 %v1867
    %v2154 = vunpack.c.l.b16 %v1868
    %v2155 = vunpack.c.h.b16 %v1868
    %v2156 = vunpack.c.l.b16 %v1869
    %v2157 = vunpack.c.h.b16 %v1869
    %v2158 = vunpack.c.l.b16 %v1870
    %v2159 = vunpack.c.h.b16 %v1870
    %v2160 = vunpack.c.l.b16 %v1871
    %v2161 = vunpack.c.h.b16 %v1871
    %v2162 = vunpack.c.l.b16 %v1872
    %v2163 = vunpack.c.h.b16 %v1872
    %v2164 = vunpack.c.l.b16 %v1873
    %v2165 = vunpack.c.h.b16 %v1873
    %v2166 = vunpack.c.l.b16 %v1874
    %v2167 = vunpack.c.h.b16 %v1874
    %v2168 = vunpack.c.l.b16 %v1875
    %v2169 = vunpack.c.h.b16 %v1875
    %v2170 = vunpack.c.l.b16 %v1876
    %v2171 = vunpack.c.h.b16 %v1876
    %v2172 = vunpack.c.l.b16 %v1877
    %v2173 = vunpack.c.h.b16 %v1877
    %v2174 = vunpack.c.l.b16 %v1878
    %v2175 = vunpack.c.h.b16 %v1878
    %v2176 = vunpack.c.l.b16 %v1879
    %v2177 = vunpack.c.h.b16 %v1879
    %v2178 = vunpack.c.l.b16 %v1880
    %v2179 = vunpack.c.h.b16 %v1880
    %v2180 = vunpack.c.l.b16 %v1881
    %v2181 = vunpack.c.h.b16 %v1881
    %v2182 = vunpack.c.l.b16 %v1882
    %v2183 = vunpack.c.h.b16 %v1882
    %v2184 = vunpack.c.l.b16 %v1883
    %v2185 = vunpack.c.h.b16 %v1883
    %v2186 = vunpack.c.l.b16 %v1884
    %v2187 = vunpack.c.h.b16 %v1884
    %v2188 = vunpack.c.l.b16 %v1885
    %v2189 = vunpack.c.h.b16 %v1885
    %v2190 = vunpack.c.l.b16 %v1886
    %v2191 = vunpack.c.h.b16 %v1886
    %v2192 = vunpack.c.l.b16 %v1887
    %v2193 = vunpack.c.h.b16 %v1887
    %v2194 = vunpack.c.l.b16 %v1888
    %v2195 = vunpack.c.h.b16 %v1888
    %v2196 = vunpack.c.l.b16 %v1889
    %v2197 = vunpack.c.h.b16 %v1889
    %v2198 = vunpack.c.l.b16 %v1890
    %v2199 = vunpack.c.h.b16 %v1890
    %v2200 = vunpack.c.l.b16 %v1891
    %v2201 = vunpack.c.h.b16 %v1891
    %v2202 = vunpack.c.l.b16 %v1892
    %v2203 = vunpack.c.h.b16 %v1892
    %v2204 = vunpack.c.l.b16 %v1893
    %v2205 = vunpack.c.h.b16 %v1893
    %v2206 = vunpack.c.l.b16 %v1894
    %v2207 = vunpack.c.h.b16 %v1894
    %v2208 = vunpack.c.l.b16 %v1895
    %v2209 = vunpack.c.h.b16 %v1895
    %v2210 = vunpack.c.l.b16 %v1896
    %v2211 = vunpack.c.h.b16 %v1896
    %v2212 = vunpack.c.l.b16 %v1897
    %v2213 = vunpack.c.h.b16 %v1897
    %v2214 = vunpack.c.l.b16 %v1898
    %v2215 = vunpack.c.h.b16 %v1898
    %v2216 = vunpack.c.l.b16 %v1899
    %v2217 = vunpack.c.h.b16 %v1899
    %v2218 = vunpack.c.l.b16 %v1900
    %v2219 = vunpack.c.h.b16 %v1900
    %v2220 = vunpack.c.l.b16 %v1901
    %v2221 = vunpack.c.h.b16 %v1901
    %v2222 = vunpack.c.l.b16 %v1902
    %v2223 = vunpack.c.h.b16 %v1902
    %v2224 = vunpack.c.l.b16 %v1903
    %v2225 = vunpack.c.h.b16 %v1903
    %v2226 = vunpack.c.l.b16 %v1904
    %v2227 = vunpack.c.h.b16 %v1904
    %v2228 = vunpack.c.l.b16 %v1905
    %v2229 = vunpack.c.h.b16 %v1905
    %v2230 = vunpack.c.l.b16 %v1906
    %v2231 = vunpack.c.h.b16 %v1906
    %v2232 = vunpack.c.l.b16 %v1907
    %v2233 = vunpack.c.h.b16 %v1907
    %v2234 = vunpack.c.l.b16 %v1908
    %v2235 = vunpack.c.h.b16 %v1908
    %v2236 = vunpack.c.l.b16 %v1909
    %v2237 = vunpack.c.h.b16 %v1909
    %v2238 = vunpack.c.l.b16 %v1910
    %v2239 = vunpack.c.h.b16 %v1910
    %v2240 = vunpack.c.l.b16 %v1911
    %v2241 = vunpack.c.h.b16 %v1911
    %v2242 = vunpack.c.l.b16 %v1912
    %v2243 = vunpack.c.h.b16 %v1912
    %v2244 = vunpack.c.l.b16 %v1913
    %v2245 = vunpack.c.h.b16 %v1913
    %v2246 = vunpack.c.l.b16 %v1914
    %v2247 = vunpack.c.h.b16 %v1914
    %v2248 = vunpack.c.l.b16 %v1915
    %v2249 = vunpack.c.h.b16 %v1915
    %v2250 = vunpack.c.l.b16 %v1916
    %v2251 = vunpack.c.h.b16 %v1916
    %v2252 = vunpack.c.l.b16 %v1917
    %v2253 = vunpack.c.h.b16 %v1917
    %v2254 = vunpack.c.l.b16 %v1918
    %v2255 = vunpack.c.h.b16 %v1918
    %v2256 = vunpack.c.l.b16 %v1919
    %v2257 = vunpack.c.h.b16 %v1919
    %v2258 = vunpack.c.l.b16 %v1920
    %v2259 = vunpack.c.h.b16 %v1920
    %v2260 = vunpack.c.l.b16 %v1921
    %v2261 = vunpack.c.h.b16 %v1921
    %v2262 = vunpack.c.l.b16 %v1922
    %v2263 = vunpack.c.h.b16 %v1922
    %v2264 = vunpack.c.l.b16 %v1923
    %v2265 = vunpack.c.h.b16 %v1923
    %v2266 = vunpack.c.l.b16 %v1924
    %v2267 = vunpack.c.h.b16 %v1924
    %v2268 = vunpack.c.l.b16 %v1925
    %v2269 = vunpack.c.h.b16 %v1925
    %v2270 = vunpack.c.l.b16 %v1926
    %v2271 = vunpack.c.h.b16 %v1926
    %v2272 = vunpack.c.l.b16 %v1927
    %v2273 = vunpack.c.h.b16 %v1927
    %v2274 = vunpack.c.l.b16 %v1928
    %v2275 = vunpack.c.h.b16 %v1928
    %v2276 = vunpack.c.l.b16 %v1929
    %v2277 = vunpack.c.h.b16 %v1929
    %v2278 = vunpack.c.l.b16 %v1930
    %v2279 = vunpack.c.h.b16 %v1930
    %v2280 = vunpack.c.l.b16 %v1931
    %v2281 = vunpack.c.h.b16 %v1931
    %v2282 = vunpack.c.l.b16 %v1932
    %v2283 = vunpack.c.h.b16 %v1932
    %v2284 = vunpack.c.l.b16 %v1933
    %v2285 = vunpack.c.h.b16 %v1933
    %v2286 = vunpack.c.l.b16 %v1934
    %v2287 = vunpack.c.h.b16 %v1934
    %v2288 = vunpack.c.l.b16 %v1935
    %v2289 = vunpack.c.h.b16 %v1935
    %v2290 = vunpack.c.l.b16 %v1936
    %v2291 = vunpack.c.h.b16 %v1936
    %v2292 = vunpack.c.l.b16 %v1937
    %v2293 = vunpack.c.h.b16 %v1937
    %v2294 = vunpack.c.l.b16 %v1938
    %v2295 = vunpack.c.h.b16 %v1938
    %v2296 = vunpack.c.l.b16 %v1939
    %v2297 = vunpack.c.h.b16 %v1939
    %v2298 = vunpack.c.l.b16 %v1940
    %v2299 = vunpack.c.h.b16 %v1940
    %v2300 = vunpack.c.l.b16 %v1941
    %v2301 = vunpack.c.h.b16 %v1941
    %v2302 = vunpack.c.l.b16 %v1942
    %v2303 = vunpack.c.h.b16 %v1942
    %v2304 = vunpack.c.l.b16 %v1943
    %v2305 = vunpack.c.h.b16 %v1943
    %v2306 = vunpack.c.l.b16 %v1944
    %v2307 = vunpack.c.h.b16 %v1944
    %v2308 = vunpack.c.l.b16 %v1945
    %v2309 = vunpack.c.h.b16 %v1945
    %v2310 = vunpack.c.l.b16 %v1946
    %v2311 = vunpack.c.h.b16 %v1946
    %v2312 = vunpack.c.l.b16 %v1947
    %v2313 = vunpack.c.h.b16 %v1947
    %v2314 = vunpack.c.l.b16 %v1948
    %v2315 = vunpack.c.h.b16 %v1948
    %v2316 = vunpack.c.l.b16 %v1949
    %v2317 = vunpack.c.h.b16 %v1949
    %v2318 = vunpack.c.l.b16 %v1950
    %v2319 = vunpack.c.h.b16 %v1950
    %v2320 = vunpack.c.l.b16 %v1951
    %v2321 = vunpack.c.h.b16 %v1951
    %v2322 = vunpack.c.l.b16 %v1952
    %v2323 = vunpack.c.h.b16 %v1952
    %v2324 = vunpack.c.l.b16 %v1953
    %v2325 = vunpack.c.h.b16 %v1953
    %v2326 = vunpack.c.l.b16 %v1954
    %v2327 = vunpack.c.h.b16 %v1954
    %v2328 = vunpack.c.l.b16 %v1955
    %v2329 = vunpack.c.h.b16 %v1955
    %v2330 = vunpack.c.l.b16 %v1956
    %v2331 = vunpack.c.h.b16 %v1956
    %v2332 = vunpack.c.l.b16 %v1957
    %v2333 = vunpack.c.h.b16 %v1957
    %v2334 = vunpack.c.l.b16 %v1958
    %v2335 = vunpack.c.h.b16 %v1958
    %v2336 = vunpack.c.l.b16 %v1959
    %v2337 = vunpack.c.h.b16 %v1959
    %v2338 = vunpack.c.l.b16 %v1960
    %v2339 = vunpack.c.h.b16 %v1960
    %v2340 = vunpack.c.l.b16 %v1961
    %v2341 = vunpack.c.h.b16 %v1961
    %v2342 = vunpack.c.l.b16 %v1962
    %v2343 = vunpack.c.h.b16 %v1962
    %v2344 = vunpack.c.l.b16 %v1963
    %v2345 = vunpack.c.h.b16 %v1963
    %v2346 = vunpack.c.l.b16 %v1964
    %v2347 = vunpack.c.h.b16 %v1964
    %v2348 = vunpack.c.l.b16 %v1965
    %v2349 = vunpack.c.h.b16 %v1965
    %v2350 = vunpack.c.l.b16 %v1966
    %v2351 = vunpack.c.h.b16 %v1966
    %v2352 = vunpack.c.l.b16 %v1967
    %v2353 = vunpack.c.h.b16 %v1967
    %v2354 = vunpack.c.l.b16 %v1968
    %v2355 = vunpack.c.h.b16 %v1968
    %v2356 = vunpack.c.l.b16 %v1969
    %v2357 = vunpack.c.h.b16 %v1969
    %v2358 = vunpack.c.l.b16 %v1970
    %v2359 = vunpack.c.h.b16 %v1970
    %v2360 = vunpack.c.l.b16 %v1971
    %v2361 = vunpack.c.h.b16 %v1971
    %v2362 = vunpack.c.l.b16 %v1972
    %v2363 = vunpack.c.h.b16 %v1972
    %v2364 = vunpack.c.l.b16 %v1973
    %v2365 = vunpack.c.h.b16 %v1973
    %v2366 = vunpack.c.l.b16 %v1974
    %v2367 = vunpack.c.h.b16 %v1974
    %v2368 = vunpack.c.l.b16 %v1975
    %v2369 = vunpack.c.h.b16 %v1975
    %v2370 = vunpack.c.l.b16 %v1976
    %v2371 = vunpack.c.h.b16 %v1976
    %v2372 = vunpack.c.l.b16 %v1977
    %v2373 = vunpack.c.h.b16 %v1977
    %v2374 = vunpack.c.l.b16 %v1978
    %v2375 = vunpack.c.h.b16 %v1978
    %v2376 = vunpack.c.l.b16 %v1979
    %v2377 = vunpack.c.h.b16 %v1979
    %v2378 = vunpack.c.l.b16 %v1980
    %v2379 = vunpack.c.h.b16 %v1980
    %v2380 = vunpack.c.l.b16 %v1981
    %v2381 = vunpack.c.h.b16 %v1981
    %v2382 = vunpack.c.l.b16 %v1982
    %v2383 = vunpack.c.h.b16 %v1982
    %v2384 = vunpack.c.l.b16 %v1983
    %v2385 = vunpack.c.h.b16 %v1983
    %v2386 = vunpack.c.l.b16 %v1984
    %v2387 = vunpack.c.h.b16 %v1984
    %v2388 = vunpack.c.l.b16 %v1985
    %v2389 = vunpack.c.h.b16 %v1985
    %v2390 = vunpack.c.l.b16 %v1986
    %v2391 = vunpack.c.h.b16 %v1986
    %v2392 = vunpack.c.l.b16 %v1987
    %v2393 = vunpack.c.h.b16 %v1987
    %v2394 = vpack.c.b16 %v2142, %v2138
    %v2395 = vpack.c.b16 %v2143, %v2139
    %v2396 = vpack.c.b16 %v2144, %v2140
    %v2397 = vpack.c.b16 %v2145, %v2141
    %v2398 = vpack.c.b16 %v2150, %v2146
    %v2399 = vpack.c.b16 %v2151, %v2147
    %v2400 = vpack.c.b16 %v2152, %v2148
    %v2401 = vpack.c.b16 %v2153, %v2149
    %v2402 = vpack.c.b16 %v2158, %v2154
    %v2403 = vpack.c.b16 %v2159, %v2155
    %v2404 = vpack.c.b16 %v2160, %v2156
    %v2405 = vpack.c.b16 %v2161, %v2157
    %v2406 = vpack.c.b16 %v2166, %v2162
    %v2407 = vpack.c.b16 %v2167, %v2163
    %v2408 = vpack.c.b16 %v2168, %v2164
    %v2409 = vpack.c.b16 %v2169, %v2165
    %v2410 = vpack.c.b16 %v2174, %v2170
    %v2411 = vpack.c.b16 %v2175, %v2171
    %v2412 = vpack.c.b16 %v2176, %v2172
    %v2413 = vpack.c.b16 %v2177, %v2173
    %v2414 = vpack.c.b16 %v2182, %v2178
    %v2415 = vpack.c.b16 %v2183, %v2179
    %v2416 = vpack.c.b16 %v2184, %v2180
    %v2417 = vpack.c.b16 %v2185, %v2181
    %v2418 = vpack.c.b16 %v2190, %v2186
    %v2419 = vpack.c.b16 %v2191, %v2187
    %v2420 = vpack.c.b16 %v2192, %v2188
    %v2421 = vpack.c.b16 %v2193, %v2189
    %v2422 = vpack.c.b16 %v2198, %v2194
    %v2423 = vpack.c.b16 %v2199, %v2195
    %v2424 = vpack.c.b16 %v2200, %v2196
    %v2425 = vpack.c.b16 %v2201, %v2197
    %v2426 = vpack.c.b16 %v2206, %v2202
    %v2427 = vpack.c.b16 %v2207, %v2203
    %v2428 = vpack.c.b16 %v2208, %v2204
    %v2429 = vpack.c.b16 %v2209, %v2205
    %v2430 = vpack.c.b16 %v2214, %v2210
    %v2431 = vpack.c.b16 %v2215, %v2211
    %v2432 = vpack.c.b16 %v2216, %v2212
    %v2433 = vpack.c.b16 %v2217, %v2213
    %v2434 = vpack.c.b16 %v2222, %v2218
    %v2435 = vpack.c.b16 %v2223, %v2219
    %v2436 = vpack.c.b16 %v2224, %v2220
    %v2437 = vpack.c.b16 %v2225, %v2221
    %v2438 = vpack.c.b16 %v2230, %v2226
    %v2439 = vpack.c.b16 %v2231, %v2227
    %v2440 = vpack.c.b16 %v2232, %v2228
    %v2441 = vpack.c.b16 %v2233, %v2229
    %v2442 = vpack.c.b16 %v2238, %v2234
    %v2443 = vpack.c.b16 %v2239, %v2235
    %v2444 = vpack.c.b16 %v2240, %v2236
    %v2445 = vpack.c.b16 %v2241, %v2237
    %v2446 = vpack.c.b16 %v2246, %v2242
    %v2447 = vpack.c.b16 %v2247, %v2243
    %v2448 = vpack.c.b16 %v2248, %v2244
    %v2449 = vpack.c.b16 %v2249, %v2245
    %v2450 = vpack.c.b16 %v2254, %v2250
    %v2451 = vpack.c.b16 %v2255, %v2251
    %v2452 = vpack.c.b16 %v2256, %v2252
    %v2453 = vpack.c.b16 %v2257, %v2253
    %v2454 = vpack.c.b16 %v2262, %v2258
    %v2455 = vpack.c.b16 %v2263, %v2259
    %v2456 = vpack.c.b16 %v2264, %v2260
    %v2457 = vpack.c.b16 %v2265, %v2261
    %v2458 = vpack.c.b16 %v2270, %v2266
    %v2459 = vpack.c.b16 %v2271, %v2267
    %v2460 = vpack.c.b16 %v2272, %v2268
    %v2461 = vpack.c.b16 %v2273, %v2269
    %v2462 = vpack.c.b16 %v2278, %v2274
    %v2463 = vpack.c.b16 %v2279, %v2275
    %v2464 = vpack.c.b16 %v2280, %v2276
    %v2465 = vpack.c.b16 %v2281, %v2277
    %v2466 = vpack.c.b16 %v2286, %v2282
    %v2467 = vpack.c.b16 %v2287, %v2283
    %v2468 = vpack.c.b16 %v2288, %v2284
    %v2469 = vpack.c.b16 %v2289, %v2285
    %v2470 = vpack.c.b16 %v2294, %v2290
    %v2471 = vpack.c.b16 %v2295, %v2291
    %v2472 = vpack.c.b16 %v2296, %v2292
    %v2473 = vpack.c.b16 %v2297, %v2293
    %v2474 = vpack.c.b16 %v2302, %v2298
    %v2475 = vpack.c.b16 %v2303, %v2299
    %v2476 = vpack.c.b16 %v2304, %v2300
    %v2477 = vpack.c.b16 %v2305, %v2301
    %v2478 = vpack.c.b16 %v2310, %v2306
    %v2479 = vpack.c.b16 %v2311, %v2307
    %v2480 = vpack.c.b16 %v2312, %v2308
    %v2481 = vpack.c.b16 %v2313, %v2309
    %v2482 = vpack.c.b16 %v2318, %v2314
    %v2483 = vpack.c.b16 %v2319, %v2315
    %v2484 = vpack.c.b16 %v2320, %v2316
    %v2485 = vpack.c.b16 %v2321, %v2317
    %v2486 = vpack.c.b16 %v2326, %v2322
    %v2487 = vpack.c.b16 %v2327, %v2323
    %v2488 = vpack.c.b16 %v2328, %v2324
    %v2489 = vpack.c.b16 %v2329, %v2325
    %v2490 = vpack.c.b16 %v2334, %v2330
    %v2491 = vpack.c.b16 %v2335, %v2331
    %v2492 = vpack.c.b16 %v2336, %v2332
    %v2493 = vpack.c.b16 %v2337, %v2333
    %v2494 = vpack.c.b16 %v2342, %v2338
    %v2495 = vpack.c.b16 %v2343, %v2339
    %v2496 = vpack.c.b16 %v2344, %v2340
    %v2497 = vpack.c.b16 %v2345, %v2341
    %v2498 = vpack.c.b16 %v2350, %v2346
    %v2499 = vpack.c.b16 %v2351, %v2347
    %v2500 = vpack.c.b16 %v2352, %v2348
    %v2501 = vpack.c.b16 %v2353, %v2349
    %v2502 = vpack.c.b16 %v2358, %v2354
    %v2503 = vpack.c.b16 %v2359, %v2355
    %v2504 = vpack.c.b16 %v2360, %v2356
    %v2505 = vpack.c.b16 %v2361, %v2357
    %v2506 = vpack.c.b16 %v2366, %v2362
    %v2507 = vpack.c.b16 %v2367, %v2363
    %v2508 = vpack.c.b16 %v2368, %v2364
    %v2509 = vpack.c.b16 %v2369, %v2365
    %v2510 = vpack.c.b16 %v2374, %v2370
    %v2511 = vpack.c.b16 %v2375, %v2371
    %v2512 = vpack.c.b16 %v2376, %v2372
    %v2513 = vpack.c.b16 %v2377, %v2373
    %v2514 = vpack.c.b16 %v2382, %v2378
    %v2515 = vpack.c.b16 %v2383, %v2379
    %v2516 = vpack.c.b16 %v2384, %v2380
    %v2517 = vpack.c.b16 %v2385, %v2381
    %v2518 = vpack.c.b16 %v2390, %v2386
    %v2519 = vpack.c.b16 %v2391, %v2387
    %v2520 = vpack.c.b16 %v2392, %v2388
    %v2521 = vpack.c.b16 %v2393, %v2389
    %2650 = vmatprep.subr.bf16.mxu0 %v2423
    %2651 = vmatpush1.bf16.msra.mxu0 %v2422
    %2652 = vmatprep.subr.bf16.mxu0 %v2419
    %2653 = vmatpush1.bf16.msra.mxu0 %v2418
    %2654 = vmatprep.subr.bf16.mxu0 %v2415
    %2655 = vmatpush1.bf16.msra.mxu0 %v2414
    %2656 = vmatprep.subr.bf16.mxu0 %v2411
    %2657 = vmatpush1.bf16.msra.mxu0 %v2410
    %2658 = vmatprep.subr.bf16.mxu0 %v2407
    %2659 = vmatpush1.bf16.msra.mxu0 %v2406
    %2660 = vmatprep.subr.bf16.mxu0 %v2403
    %2661 = vmatpush1.bf16.msra.mxu0 %v2402
    %2662 = vmatprep.subr.bf16.mxu0 %v2399
    %2663 = vmatpush1.bf16.msra.mxu0 %v2398
    %2664 = vmatprep.subr.bf16.mxu0 %v2395
    %2665 = vmatpush1.bf16.msra.mxu0 %v2394
    %2666 = vmatprep.subr.bf16.mxu0 %v2455
    %2667 = vmatpush2.bf16.msra.mxu0 %v2454
    %2668 = vmatprep.subr.bf16.mxu0 %v2451
    %2669 = vmatpush2.bf16.msra.mxu0 %v2450
    %2670 = vmatprep.subr.bf16.mxu0 %v2447
    %2671 = vmatpush2.bf16.msra.mxu0 %v2446
    %2672 = vmatprep.subr.bf16.mxu0 %v2443
    %2673 = vmatpush2.bf16.msra.mxu0 %v2442
    %2674 = vmatprep.subr.bf16.mxu0 %v2439
    %2675 = vmatpush2.bf16.msra.mxu0 %v2438
    %2676 = vmatprep.subr.bf16.mxu0 %v2435
    %2677 = vmatpush2.bf16.msra.mxu0 %v2434
    %2678 = vmatprep.subr.bf16.mxu0 %v2431
    %2679 = vmatpush2.bf16.msra.mxu0 %v2430
    %2680 = vmatprep.subr.bf16.mxu0 %v2427
    %2681 = vmatpush2.bf16.msra.mxu0 %v2426
    %2682 = vmatprep.mubr.bf16.mxu0 %v1857
    %2683 = vmatmul.mubr.bf16.gmra.mxu0 %v1856
    %v2684 = vpop.f32.mrf.mxu0
    %v2685 = vadd.f32 %v1993, %v2684
    %v2686 = vpop.f32.mrf.mxu0
    %v2687 = vadd.f32 %v1997, %v2686
    %v2688 = vpop.f32.mrf.mxu0
    %v2689 = vadd.f32 %v1993, %v2688
    %v2690 = vpop.f32.mrf.mxu0
    %v2691 = vadd.f32 %v1997, %v2690
    %2692 = vdwg.mxu0
    %2693 = vmatprep.subr.bf16.mxu0 %v2487
    %2694 = vmatpush1.bf16.msra.mxu0 %v2486
    %2695 = vmatprep.subr.bf16.mxu0 %v2483
    %2696 = vmatpush1.bf16.msra.mxu0 %v2482
    %2697 = vmatprep.subr.bf16.mxu0 %v2479
    %2698 = vmatpush1.bf16.msra.mxu0 %v2478
    %2699 = vmatprep.subr.bf16.mxu0 %v2475
    %2700 = vmatpush1.bf16.msra.mxu0 %v2474
    %2701 = vmatprep.subr.bf16.mxu0 %v2471
    %2702 = vmatpush1.bf16.msra.mxu0 %v2470
    %2703 = vmatprep.subr.bf16.mxu0 %v2467
    %2704 = vmatpush1.bf16.msra.mxu0 %v2466
    %2705 = vmatprep.subr.bf16.mxu0 %v2463
    %2706 = vmatpush1.bf16.msra.mxu0 %v2462
    %2707 = vmatprep.subr.bf16.mxu0 %v2459
    %2708 = vmatpush1.bf16.msra.mxu0 %v2458
    %2709 = vmatprep.subr.bf16.mxu0 %v2519
    %2710 = vmatpush2.bf16.msra.mxu0 %v2518
    %2711 = vmatprep.subr.bf16.mxu0 %v2515
    %2712 = vmatpush2.bf16.msra.mxu0 %v2514
    %2713 = vmatprep.subr.bf16.mxu0 %v2511
    %2714 = vmatpush2.bf16.msra.mxu0 %v2510
    %2715 = vmatprep.subr.bf16.mxu0 %v2507
    %2716 = vmatpush2.bf16.msra.mxu0 %v2506
    %2717 = vmatprep.subr.bf16.mxu0 %v2503
    %2718 = vmatpush2.bf16.msra.mxu0 %v2502
    %2719 = vmatprep.subr.bf16.mxu0 %v2499
    %2720 = vmatpush2.bf16.msra.mxu0 %v2498
    %2721 = vmatprep.subr.bf16.mxu0 %v2495
    %2722 = vmatpush2.bf16.msra.mxu0 %v2494
    %2723 = vmatprep.subr.bf16.mxu0 %v2491
    %2724 = vmatpush2.bf16.msra.mxu0 %v2490
    %2725 = vmatprep.mubr.bf16.mxu0 %v1859
    %2726 = vmatmul.mubr.bf16.gmra.mxu0 %v1858
    %v2727 = vpop.f32.mrf.mxu0
    %v2728 = vadd.f32 %v2685, %v2727
    %v2729 = vpop.f32.mrf.mxu0
    %v2730 = vadd.f32 %v2687, %v2729
    %v2731 = vpop.f32.mrf.mxu0
    %v2732 = vadd.f32 %v2689, %v2731
    %v2733 = vpop.f32.mrf.mxu0
    %v2734 = vadd.f32 %v2691, %v2733
    %2735 = vdwg.mxu0
    %2736 = vmatprep.subr.bf16.mxu0 %v2425
    %2737 = vmatpush1.bf16.msra.mxu0 %v2424
    %2738 = vmatprep.subr.bf16.mxu0 %v2421
    %2739 = vmatpush1.bf16.msra.mxu0 %v2420
    %2740 = vmatprep.subr.bf16.mxu0 %v2417
    %2741 = vmatpush1.bf16.msra.mxu0 %v2416
    %2742 = vmatprep.subr.bf16.mxu0 %v2413
    %2743 = vmatpush1.bf16.msra.mxu0 %v2412
    %2744 = vmatprep.subr.bf16.mxu0 %v2409
    %2745 = vmatpush1.bf16.msra.mxu0 %v2408
    %2746 = vmatprep.subr.bf16.mxu0 %v2405
    %2747 = vmatpush1.bf16.msra.mxu0 %v2404
    %2748 = vmatprep.subr.bf16.mxu0 %v2401
    %2749 = vmatpush1.bf16.msra.mxu0 %v2400
    %2750 = vmatprep.subr.bf16.mxu0 %v2397
    %2751 = vmatpush1.bf16.msra.mxu0 %v2396
    %2752 = vmatprep.subr.bf16.mxu0 %v2457
    %2753 = vmatpush2.bf16.msra.mxu0 %v2456
    %2754 = vmatprep.subr.bf16.mxu0 %v2453
    %2755 = vmatpush2.bf16.msra.mxu0 %v2452
    %2756 = vmatprep.subr.bf16.mxu0 %v2449
    %2757 = vmatpush2.bf16.msra.mxu0 %v2448
    %2758 = vmatprep.subr.bf16.mxu0 %v2445
    %2759 = vmatpush2.bf16.msra.mxu0 %v2444
    %2760 = vmatprep.subr.bf16.mxu0 %v2441
    %2761 = vmatpush2.bf16.msra.mxu0 %v2440
    %2762 = vmatprep.subr.bf16.mxu0 %v2437
    %2763 = vmatpush2.bf16.msra.mxu0 %v2436
    %2764 = vmatprep.subr.bf16.mxu0 %v2433
    %2765 = vmatpush2.bf16.msra.mxu0 %v2432
    %2766 = vmatprep.subr.bf16.mxu0 %v2429
    %2767 = vmatpush2.bf16.msra.mxu0 %v2428
    %2768 = vmatprep.mubr.bf16.mxu0 %v1857
    %2769 = vmatmul.mubr.bf16.gmra.mxu0 %v1856
    %v2770 = vpop.f32.mrf.mxu0
    %v2771 = vadd.f32 %v2001, %v2770
    %v2772 = vpop.f32.mrf.mxu0
    %v2773 = vadd.f32 %v2005, %v2772
    %v2774 = vpop.f32.mrf.mxu0
    %v2775 = vadd.f32 %v2001, %v2774
    %v2776 = vpop.f32.mrf.mxu0
    %v2777 = vadd.f32 %v2005, %v2776
    %2778 = vdwg.mxu0
    %2779 = vmatprep.subr.bf16.mxu0 %v2489
    %2780 = vmatpush1.bf16.msra.mxu0 %v2488
    %2781 = vmatprep.subr.bf16.mxu0 %v2485
    %2782 = vmatpush1.bf16.msra.mxu0 %v2484
    %2783 = vmatprep.subr.bf16.mxu0 %v2481
    %2784 = vmatpush1.bf16.msra.mxu0 %v2480
    %2785 = vmatprep.subr.bf16.mxu0 %v2477
    %2786 = vmatpush1.bf16.msra.mxu0 %v2476
    %2787 = vmatprep.subr.bf16.mxu0 %v2473
    %2788 = vmatpush1.bf16.msra.mxu0 %v2472
    %2789 = vmatprep.subr.bf16.mxu0 %v2469
    %2790 = vmatpush1.bf16.msra.mxu0 %v2468
    %2791 = vmatprep.subr.bf16.mxu0 %v2465
    %2792 = vmatpush1.bf16.msra.mxu0 %v2464
    %2793 = vmatprep.subr.bf16.mxu0 %v2461
    %2794 = vmatpush1.bf16.msra.mxu0 %v2460
    %2795 = vmatprep.subr.bf16.mxu0 %v2521
    %2796 = vmatpush2.bf16.msra.mxu0 %v2520
    %2797 = vmatprep.subr.bf16.mxu0 %v2517
    %2798 = vmatpush2.bf16.msra.mxu0 %v2516
    %2799 = vmatprep.subr.bf16.mxu0 %v2513
    %2800 = vmatpush2.bf16.msra.mxu0 %v2512
    %2801 = vmatprep.subr.bf16.mxu0 %v2509
    %2802 = vmatpush2.bf16.msra.mxu0 %v2508
    %2803 = vmatprep.subr.bf16.mxu0 %v2505
    %2804 = vmatpush2.bf16.msra.mxu0 %v2504
    %2805 = vmatprep.subr.bf16.mxu0 %v2501
    %2806 = vmatpush2.bf16.msra.mxu0 %v2500
    %2807 = vmatprep.subr.bf16.mxu0 %v2497
    %2808 = vmatpush2.bf16.msra.mxu0 %v2496
    %2809 = vmatprep.subr.bf16.mxu0 %v2493
    %2810 = vmatpush2.bf16.msra.mxu0 %v2492
    %2811 = vmatprep.mubr.bf16.mxu0 %v1859
    %2812 = vmatmul.mubr.bf16.gmra.mxu0 %v1858
    %v2813 = vpop.f32.mrf.mxu0
    %v2814 = vadd.f32 %v2771, %v2813
    %v2815 = vpop.f32.mrf.mxu0
    %v2816 = vadd.f32 %v2773, %v2815
    %v2817 = vpop.f32.mrf.mxu0
    %v2818 = vadd.f32 %v2775, %v2817
    %v2819 = vpop.f32.mrf.mxu0
    %v2820 = vadd.f32 %v2777, %v2819
    %2821 = vdwg.mxu0
    %v2822 = vmax.f32 %v2728, 0.0
    %v2823 = vmax.f32 %v2730, 0.0
    %v2824 = vmax.f32 %v2814, 0.0
    %v2825 = vmax.f32 %v2816, 0.0
    %v2826 = vmax.f32 %v2732, 0.0
    %v2827 = vmax.f32 %v2734, 0.0
    %v2828 = vmax.f32 %v2818, 0.0
    %v2829 = vmax.f32 %v2820, 0.0
    %v2830 = vpack.c.bf16 %v2826, %v2822
    %v2831 = vpack.c.bf16 %v2827, %v2823
    %v2832 = vpack.c.bf16 %v2828, %v2824
    %v2833 = vpack.c.bf16 %v2829, %v2825
    %v2834 = vld [vmem:[#allocation10] sm:$0xf]
    %v2835 = vld [vmem:[#allocation10 + $0x4] sm:$0xf]
    %v2836 = vld [vmem:[#allocation10 + $0x8] sm:$0xf]
    %v2837 = vld [vmem:[#allocation10 + $0xc] sm:$0xf]
    %v2838 = vld [vmem:[#allocation10 + $0x10] sm:$0xf]
    %v2839 = vld [vmem:[#allocation10 + $0x14] sm:$0xf]
    %v2840 = vld [vmem:[#allocation10 + $0x18] sm:$0xf]
    %v2841 = vld [vmem:[#allocation10 + $0x1c] sm:$0xf]
    %v2842 = vld [vmem:[#allocation10 + $0x20] sm:$0xf]
    %v2843 = vld [vmem:[#allocation10 + $0x24] sm:$0xf]
    %v2844 = vld [vmem:[#allocation10 + $0x28] sm:$0xf]
    %v2845 = vld [vmem:[#allocation10 + $0x2c] sm:$0xf]
    %v2846 = vld [vmem:[#allocation10 + $0x30] sm:$0xf]
    %v2847 = vld [vmem:[#allocation10 + $0x34] sm:$0xf]
    %v2848 = vld [vmem:[#allocation10 + $0x38] sm:$0xf]
    %v2849 = vld [vmem:[#allocation10 + $0x3c] sm:$0xf]
    %v2850 = vld [vmem:[#allocation10 + $0x40] sm:$0xf]
    %v2851 = vld [vmem:[#allocation10 + $0x44] sm:$0xf]
    %v2852 = vld [vmem:[#allocation10 + $0x48] sm:$0xf]
    %v2853 = vld [vmem:[#allocation10 + $0x4c] sm:$0xf]
    %v2854 = vld [vmem:[#allocation10 + $0x50] sm:$0xf]
    %v2855 = vld [vmem:[#allocation10 + $0x54] sm:$0xf]
    %v2856 = vld [vmem:[#allocation10 + $0x58] sm:$0xf]
    %v2857 = vld [vmem:[#allocation10 + $0x5c] sm:$0xf]
    %v2858 = vld [vmem:[#allocation10 + $0x60] sm:$0xf]
    %v2859 = vld [vmem:[#allocation10 + $0x64] sm:$0xf]
    %v2860 = vld [vmem:[#allocation10 + $0x68] sm:$0xf]
    %v2861 = vld [vmem:[#allocation10 + $0x6c] sm:$0xf]
    %v2862 = vld [vmem:[#allocation10 + $0x70] sm:$0xf]
    %v2863 = vld [vmem:[#allocation10 + $0x74] sm:$0xf]
    %v2864 = vld [vmem:[#allocation10 + $0x78] sm:$0xf]
    %v2865 = vld [vmem:[#allocation10 + $0x7c] sm:$0xf]
    %v2866 = vld [vmem:[#allocation10 + $0x80] sm:$0xf]
    %v2867 = vld [vmem:[#allocation10 + $0x84] sm:$0xf]
    %v2868 = vld [vmem:[#allocation10 + $0x88] sm:$0xf]
    %v2869 = vld [vmem:[#allocation10 + $0x8c] sm:$0xf]
    %v2870 = vld [vmem:[#allocation10 + $0x90] sm:$0xf]
    %v2871 = vld [vmem:[#allocation10 + $0x94] sm:$0xf]
    %v2872 = vld [vmem:[#allocation10 + $0x98] sm:$0xf]
    %v2873 = vld [vmem:[#allocation10 + $0x9c] sm:$0xf]
    %v2874 = vld [vmem:[#allocation10 + $0xa0] sm:$0xf]
    %v2875 = vld [vmem:[#allocation10 + $0xa4] sm:$0xf]
    %v2876 = vld [vmem:[#allocation10 + $0xa8] sm:$0xf]
    %v2877 = vld [vmem:[#allocation10 + $0xac] sm:$0xf]
    %v2878 = vld [vmem:[#allocation10 + $0xb0] sm:$0xf]
    %v2879 = vld [vmem:[#allocation10 + $0xb4] sm:$0xf]
    %v2880 = vld [vmem:[#allocation10 + $0xb8] sm:$0xf]
    %v2881 = vld [vmem:[#allocation10 + $0xbc] sm:$0xf]
    %v2882 = vld [vmem:[#allocation10 + $0xc0] sm:$0xf]
    %v2883 = vld [vmem:[#allocation10 + $0xc4] sm:$0xf]
    %v2884 = vld [vmem:[#allocation10 + $0xc8] sm:$0xf]
    %v2885 = vld [vmem:[#allocation10 + $0xcc] sm:$0xf]
    %v2886 = vld [vmem:[#allocation10 + $0xd0] sm:$0xf]
    %v2887 = vld [vmem:[#allocation10 + $0xd4] sm:$0xf]
    %v2888 = vld [vmem:[#allocation10 + $0xd8] sm:$0xf]
    %v2889 = vld [vmem:[#allocation10 + $0xdc] sm:$0xf]
    %v2890 = vld [vmem:[#allocation10 + $0xe0] sm:$0xf]
    %v2891 = vld [vmem:[#allocation10 + $0xe4] sm:$0xf]
    %v2892 = vld [vmem:[#allocation10 + $0xe8] sm:$0xf]
    %v2893 = vld [vmem:[#allocation10 + $0xec] sm:$0xf]
    %v2894 = vld [vmem:[#allocation10 + $0xf0] sm:$0xf]
    %v2895 = vld [vmem:[#allocation10 + $0xf4] sm:$0xf]
    %v2896 = vld [vmem:[#allocation10 + $0xf8] sm:$0xf]
    %v2897 = vld [vmem:[#allocation10 + $0xfc] sm:$0xf]
    %v2898 = vld [vmem:[%s6] sm:$0x1]
    %v2900 = vlaneseq
    %v2901 = vshrl.u32 %v2900, 7
    %v2902 = vsub.s32 0, %v2901
    %v2903 = vrot.slane %v2898, %v2902
    %v2969 = vunpack.c.l.b16 %v2834
    %v2970 = vunpack.c.l.b16 %v2835
    %v2971 = vunpack.c.l.b16 %v2836
    %v2972 = vunpack.c.l.b16 %v2837
    %v2973 = vunpack.c.l.b16 %v2838
    %v2974 = vunpack.c.l.b16 %v2839
    %v2975 = vunpack.c.l.b16 %v2840
    %v2976 = vunpack.c.l.b16 %v2841
    %v2977 = vunpack.c.l.b16 %v2842
    %v2978 = vunpack.c.l.b16 %v2843
    %v2979 = vunpack.c.l.b16 %v2844
    %v2980 = vunpack.c.l.b16 %v2845
    %v2981 = vunpack.c.l.b16 %v2846
    %v2982 = vunpack.c.l.b16 %v2847
    %v2983 = vunpack.c.l.b16 %v2848
    %v2984 = vunpack.c.l.b16 %v2849
    %v2985 = vunpack.c.l.b16 %v2850
    %v2986 = vunpack.c.l.b16 %v2851
    %v2987 = vunpack.c.l.b16 %v2852
    %v2988 = vunpack.c.l.b16 %v2853
    %v2989 = vunpack.c.l.b16 %v2854
    %v2990 = vunpack.c.l.b16 %v2855
    %v2991 = vunpack.c.l.b16 %v2856
    %v2992 = vunpack.c.l.b16 %v2857
    %v2993 = vunpack.c.l.b16 %v2858
    %v2994 = vunpack.c.l.b16 %v2859
    %v2995 = vunpack.c.l.b16 %v2860
    %v2996 = vunpack.c.l.b16 %v2861
    %v2997 = vunpack.c.l.b16 %v2862
    %v2998 = vunpack.c.l.b16 %v2863
    %v2999 = vunpack.c.l.b16 %v2864
    %v3000 = vunpack.c.l.b16 %v2865
    %v3001 = vunpack.c.l.b16 %v2866
    %v3002 = vunpack.c.l.b16 %v2867
    %v3003 = vunpack.c.l.b16 %v2868
    %v3004 = vunpack.c.l.b16 %v2869
    %v3005 = vunpack.c.l.b16 %v2870
    %v3006 = vunpack.c.l.b16 %v2871
    %v3007 = vunpack.c.l.b16 %v2872
    %v3008 = vunpack.c.l.b16 %v2873
    %v3009 = vunpack.c.l.b16 %v2874
    %v3010 = vunpack.c.l.b16 %v2875
    %v3011 = vunpack.c.l.b16 %v2876
    %v3012 = vunpack.c.l.b16 %v2877
    %v3013 = vunpack.c.l.b16 %v2878
    %v3014 = vunpack.c.l.b16 %v2879
    %v3015 = vunpack.c.l.b16 %v2880
    %v3016 = vunpack.c.l.b16 %v2881
    %v3017 = vunpack.c.l.b16 %v2882
    %v3018 = vunpack.c.l.b16 %v2883
    %v3019 = vunpack.c.l.b16 %v2884
    %v3020 = vunpack.c.l.b16 %v2885
    %v3021 = vunpack.c.l.b16 %v2886
    %v3022 = vunpack.c.l.b16 %v2887
    %v3023 = vunpack.c.l.b16 %v2888
    %v3024 = vunpack.c.l.b16 %v2889
    %v3025 = vunpack.c.l.b16 %v2890
    %v3026 = vunpack.c.l.b16 %v2891
    %v3027 = vunpack.c.l.b16 %v2892
    %v3028 = vunpack.c.l.b16 %v2893
    %v3029 = vunpack.c.l.b16 %v2894
    %v3030 = vunpack.c.l.b16 %v2895
    %v3031 = vunpack.c.l.b16 %v2896
    %v3032 = vunpack.c.l.b16 %v2897
    %v3033 = vpack.c.b16 %v2970, %v2969
    %v3034 = vpack.c.b16 %v2972, %v2971
    %v3035 = vpack.c.b16 %v2974, %v2973
    %v3036 = vpack.c.b16 %v2976, %v2975
    %v3037 = vpack.c.b16 %v2978, %v2977
    %v3038 = vpack.c.b16 %v2980, %v2979
    %v3039 = vpack.c.b16 %v2982, %v2981
    %v3040 = vpack.c.b16 %v2984, %v2983
    %v3041 = vpack.c.b16 %v2986, %v2985
    %v3042 = vpack.c.b16 %v2988, %v2987
    %v3043 = vpack.c.b16 %v2990, %v2989
    %v3044 = vpack.c.b16 %v2992, %v2991
    %v3045 = vpack.c.b16 %v2994, %v2993
    %v3046 = vpack.c.b16 %v2996, %v2995
    %v3047 = vpack.c.b16 %v2998, %v2997
    %v3048 = vpack.c.b16 %v3000, %v2999
    %v3049 = vpack.c.b16 %v3002, %v3001
    %v3050 = vpack.c.b16 %v3004, %v3003
    %v3051 = vpack.c.b16 %v3006, %v3005
    %v3052 = vpack.c.b16 %v3008, %v3007
    %v3053 = vpack.c.b16 %v3010, %v3009
    %v3054 = vpack.c.b16 %v3012, %v3011
    %v3055 = vpack.c.b16 %v3014, %v3013
    %v3056 = vpack.c.b16 %v3016, %v3015
    %v3057 = vpack.c.b16 %v3018, %v3017
    %v3058 = vpack.c.b16 %v3020, %v3019
    %v3059 = vpack.c.b16 %v3022, %v3021
    %v3060 = vpack.c.b16 %v3024, %v3023
    %v3061 = vpack.c.b16 %v3026, %v3025
    %v3062 = vpack.c.b16 %v3028, %v3027
    %v3063 = vpack.c.b16 %v3030, %v3029
    %v3064 = vpack.c.b16 %v3032, %v3031
    %3097 = vmatprep.subr.bf16.mxu0 0
    %3098 = vmatpush1.bf16.msra.mxu0 %v3040
    %3099 = vmatprep.subr.bf16.mxu0 0
    %3100 = vmatpush1.bf16.msra.mxu0 %v3039
    %3101 = vmatprep.subr.bf16.mxu0 0
    %3102 = vmatpush1.bf16.msra.mxu0 %v3038
    %3103 = vmatprep.subr.bf16.mxu0 0
    %3104 = vmatpush1.bf16.msra.mxu0 %v3037
    %3105 = vmatprep.subr.bf16.mxu0 0
    %3106 = vmatpush1.bf16.msra.mxu0 %v3036
    %3107 = vmatprep.subr.bf16.mxu0 0
    %3108 = vmatpush1.bf16.msra.mxu0 %v3035
    %3109 = vmatprep.subr.bf16.mxu0 0
    %3110 = vmatpush1.bf16.msra.mxu0 %v3034
    %3111 = vmatprep.subr.bf16.mxu0 0
    %3112 = vmatpush1.bf16.msra.mxu0 %v3033
    %3113 = vmatprep.subr.bf16.mxu0 0
    %3114 = vmatpush2.bf16.msra.mxu0 %v3048
    %3115 = vmatprep.subr.bf16.mxu0 0
    %3116 = vmatpush2.bf16.msra.mxu0 %v3047
    %3117 = vmatprep.subr.bf16.mxu0 0
    %3118 = vmatpush2.bf16.msra.mxu0 %v3046
    %3119 = vmatprep.subr.bf16.mxu0 0
    %3120 = vmatpush2.bf16.msra.mxu0 %v3045
    %3121 = vmatprep.subr.bf16.mxu0 0
    %3122 = vmatpush2.bf16.msra.mxu0 %v3044
    %3123 = vmatprep.subr.bf16.mxu0 0
    %3124 = vmatpush2.bf16.msra.mxu0 %v3043
    %3125 = vmatprep.subr.bf16.mxu0 0
    %3126 = vmatpush2.bf16.msra.mxu0 %v3042
    %3127 = vmatprep.subr.bf16.mxu0 0
    %3128 = vmatpush2.bf16.msra.mxu0 %v3041
    %3129 = vmatprep.mubr.bf16.mxu0 %v2831
    %3130 = vmatmul.mubr.bf16.gmra.mxu0 %v2830
    %v3131 = vpop.f32.mrf.mxu0
    %v3132 = vadd.f32 %v2903, %v3131
    %v3133 = vpop.f32.mrf.mxu0
    %v3134 = vpop.f32.mrf.mxu0
    %v3135 = vadd.f32 %v2903, %v3134
    %v3136 = vpop.f32.mrf.mxu0
    %3137 = vdwg.mxu0
    %3138 = vmatprep.subr.bf16.mxu0 0
    %3139 = vmatpush1.bf16.msra.mxu0 %v3056
    %3140 = vmatprep.subr.bf16.mxu0 0
    %3141 = vmatpush1.bf16.msra.mxu0 %v3055
    %3142 = vmatprep.subr.bf16.mxu0 0
    %3143 = vmatpush1.bf16.msra.mxu0 %v3054
    %3144 = vmatprep.subr.bf16.mxu0 0
    %3145 = vmatpush1.bf16.msra.mxu0 %v3053
    %3146 = vmatprep.subr.bf16.mxu0 0
    %3147 = vmatpush1.bf16.msra.mxu0 %v3052
    %3148 = vmatprep.subr.bf16.mxu0 0
    %3149 = vmatpush1.bf16.msra.mxu0 %v3051
    %3150 = vmatprep.subr.bf16.mxu0 0
    %3151 = vmatpush1.bf16.msra.mxu0 %v3050
    %3152 = vmatprep.subr.bf16.mxu0 0
    %3153 = vmatpush1.bf16.msra.mxu0 %v3049
    %3154 = vmatprep.subr.bf16.mxu0 0
    %3155 = vmatpush2.bf16.msra.mxu0 %v3064
    %3156 = vmatprep.subr.bf16.mxu0 0
    %3157 = vmatpush2.bf16.msra.mxu0 %v3063
    %3158 = vmatprep.subr.bf16.mxu0 0
    %3159 = vmatpush2.bf16.msra.mxu0 %v3062
    %3160 = vmatprep.subr.bf16.mxu0 0
    %3161 = vmatpush2.bf16.msra.mxu0 %v3061
    %3162 = vmatprep.subr.bf16.mxu0 0
    %3163 = vmatpush2.bf16.msra.mxu0 %v3060
    %3164 = vmatprep.subr.bf16.mxu0 0
    %3165 = vmatpush2.bf16.msra.mxu0 %v3059
    %3166 = vmatprep.subr.bf16.mxu0 0
    %3167 = vmatpush2.bf16.msra.mxu0 %v3058
    %3168 = vmatprep.subr.bf16.mxu0 0
    %3169 = vmatpush2.bf16.msra.mxu0 %v3057
    %3170 = vmatprep.mubr.bf16.mxu0 %v2833
    %3171 = vmatmul.mubr.bf16.gmra.mxu0 %v2832
    %v3172 = vpop.f32.mrf.mxu0
    %v3173 = vadd.f32 %v3132, %v3172
    %v3174 = vpop.f32.mrf.mxu0
    %v3175 = vpop.f32.mrf.mxu0
    %v3176 = vadd.f32 %v3135, %v3175
    %v3177 = vpop.f32.mrf.mxu0
    %3178 = vdwg.mxu0
    %v3179 = vmax.f32 %v3173, 0.0
    %v3180 = vmax.f32 %v3176, 0.0
    %v3181 = vlaneseq
    %v3182 = vand.u32 %v3181, 127
    %vm3183 = vcmp.lt.s32.totalorder %v3182, 10
    %v3184 = vsel %vm3183, %v3179, -1e+30
    %v3185 = vsel %vm3183, %v3180, -1e+30
    %3186 = vmax.xlane.f32.xlu0 %v3184
    %v3187 = vpop.xlane.xlu0 %3186
    %3188 = vmax.xlane.f32.xlu0 %v3185
    %v3189 = vpop.xlane.xlu0 %3188
    %v3190 = vsub.f32 %v3184, %v3187
    %v3191 = vsub.f32 %v3185, %v3189
    %v3192 = vmul.f32 %v3190, 1.442695
    %v3193 = vpow.pop %v3192
    %v3194 = vmul.f32 %v3191, 1.442695
    %v3195 = vpow.pop %v3194
    %3196 = vadd.xlane.f32.xlu0 %v3193
    %v3197 = vpop.xlane.xlu0 %3196
    %3198 = vadd.xlane.f32.xlu0 %v3195
    %v3199 = vpop.xlane.xlu0 %3198
    %v3200 = vlog2.pop %v3197
    %v3201 = vmul.f32 %v3200, 0.6931472
    %v3202 = vlog2.pop %v3199
    %v3203 = vmul.f32 %v3202, 0.6931472
    %v3204 = vsub.f32 %v3190, %v3201
    %v3205 = vsub.f32 %v3191, %v3203
    %3206 = vst [vmem:[#allocation11] sm:$0xff] %v3204
    %3207 = vst [vmem:[#allocation11 + $0x8] sm:$0xff] %v3205
    // Predicated region
    $region50: #{tpu_custom_call.1} parent=1 // pred_check
      _
    $region51: #{tpu_custom_call.1} parent=1 // pred_check_branch
      %3209 = sbr.rel (0) target = $region53
    $region52: #{tpu_custom_call.1} parent=1 // pred_region
      %s3211 = ssub.s32 256, 256
      %3212 = vsyncadd [#allocation4], %s3211
      %s3213 = sshll.u32 [#allocation11], 4
      %s3214 = int_to_ptr.vmem [resolvable:$true] %s3213
      %3219 = dma.vmem_to_hbm [thread:$0]  %s3214, 256, %s7, [#allocation4], 128, 128, 8
    $region53: #{tpu_custom_call.1} parent=1 // pred_fallthru
      _
    // Predicated region
    $region54: #{tpu_custom_call.1} parent=1 // pred_check
      _
    $region55: #{tpu_custom_call.1} parent=1 // pred_check_branch
      %3221 = sbr.rel (0) target = $region57
    $region56: #{tpu_custom_call.1} parent=1 // pred_region
      %3222 = dma.done [#allocation4], 256
    $region57: #{tpu_custom_call.1} parent=1 // pred_fallthru
      _
    %3223 = vsyncpa [#allocation3], 1
    %3224 = vsyncpa [#allocation6], 1
    %3225 = vsyncpa [#allocation9], 1
    %3226 = vsyncpa [#allocation4], 1

</llo_original>
